<compile_context>
chip_gen: v6e
topology: v6e:2x2x1
jax: 0.10.0
libtpu: 0.0.40
codegen_flags: <defaults>
</compile_context>

<pallas_src>
import functools

import jax
import jax.numpy as jnp
from jax.experimental import pallas as pl
from jax.experimental.pallas import tpu as pltpu


def _round_up(x, m):
    return ((x + m - 1) // m) * m


# ----------------------------- Pallas kernel ------------------------------ #
def _fused_conv_kernel(x_ref, w_ref, b_ref, o_ref, *, oh, ow, stride,
                       apply_relu):
    """One (batch image, OC tile) step of conv + bias + ReLU.

    x_ref: (1, HP, WP, C)    spatially padded NHWC image (compute dtype)
    w_ref: (KH, KW, C, TOC)  weight tile (compute dtype)
    b_ref: (1, TOC)          bias tile (f32)
    o_ref: (1, OH*OW, TOC)   output tile
    """
    kh, kw, c, toc = w_ref.shape
    ihe = (oh - 1) * stride + 1   # input rows touched per tap
    iwe = (ow - 1) * stride + 1   # input cols touched per tap

    acc = jnp.zeros((oh * ow, toc), jnp.float32)
    # Static KH*KW tap loop: fused im2col.  Each tap is a shifted window of
    # the resident image matmul'd against the matching (C, TOC) weight slice,
    # accumulated in f32 on the MXU.
    for i in range(kh):
        for j in range(kw):
            win = x_ref[0, pl.ds(i, ihe), pl.ds(j, iwe), :]   # (ihe, iwe, C)
            if stride > 1:
                win = win[::stride, ::stride, :]              # (OH, OW, C)
            tap = win.reshape(oh * ow, c)
            acc = acc + jnp.dot(tap, w_ref[i, j],
                                preferred_element_type=jnp.float32)

    acc = acc + b_ref[...]            # (1, TOC) broadcast over rows (f32)
    if apply_relu:
        acc = jnp.maximum(acc, 0.0)
    o_ref[0] = acc.astype(o_ref.dtype)


# ------------------------------ JAX wrapper -------------------------------- #
def conv2d_forward(x_nchw, weight, bias, *, stride=1, same_padding=False,
                   nl="relu", compute_dtype=jnp.bfloat16):
    """Matches PyTorch Conv2d module forward (bn=False).

    x_nchw: (N, C, H, W)   weight: (OC, C, KH, KW)   bias: (OC,)
    returns (N, OC, OH, OW)
    """
    OC, C, KH, KW = weight.shape
    N, _, H, W = x_nchw.shape
    pad = (KH - 1) // 2 if same_padding else 0
    OH = (H + 2 * pad - KH) // stride + 1
    OW = (W + 2 * pad - KW) // stride + 1
    HP, WP = H + 2 * pad, W + 2 * pad

    # NCHW -> NHWC, spatial pad, cast matmul operands to the compute dtype.
    x_nhwc = jnp.transpose(x_nchw, (0, 2, 3, 1))
    x_p = jnp.pad(x_nhwc, ((0, 0), (pad, pad), (pad, pad), (0, 0)))
    x_p = x_p.astype(compute_dtype)

    # (OC, C, KH, KW) -> (KH, KW, C, OC); pad OC to a lane-dense multiple of
    # 128 (zeros), slice the extra output columns off after the kernel.
    OC_pad = _round_up(max(OC, 128), 128)
    w_hwco = jnp.transpose(weight, (2, 3, 1, 0))
    w_hwco = jnp.pad(w_hwco, ((0, 0), (0, 0), (0, 0), (0, OC_pad - OC)))
    w_hwco = w_hwco.astype(compute_dtype)
    b_row = jnp.pad(bias, (0, OC_pad - OC)).astype(jnp.float32)
    b_row = b_row.reshape(1, OC_pad)

    TOC = 256 if OC_pad % 256 == 0 else 128
    grid = (N, OC_pad // TOC)

    kernel = functools.partial(
        _fused_conv_kernel, oh=OH, ow=OW, stride=stride,
        apply_relu=(nl == "relu"))

    out_dtype = x_nchw.dtype
    itemsize = jnp.dtype(compute_dtype).itemsize
    cost = pl.CostEstimate(
        flops=int(2 * N * OH * OW * KH * KW * C * OC_pad),
        transcendentals=0,
        bytes_accessed=int(x_p.size * itemsize
                           + w_hwco.size * itemsize
                           + b_row.size * 4
                           + N * OH * OW * OC_pad * jnp.dtype(out_dtype).itemsize),
    )

    out_flat = pl.pallas_call(
        kernel,
        out_shape=jax.ShapeDtypeStruct((N, OH * OW, OC_pad), out_dtype),
        grid_spec=pltpu.PrefetchScalarGridSpec(
            num_scalar_prefetch=0,
            grid=grid,
            in_specs=[
                pl.BlockSpec((1, HP, WP, C), lambda n, j: (n, 0, 0, 0)),
                pl.BlockSpec((KH, KW, C, TOC), lambda n, j: (0, 0, 0, j)),
                pl.BlockSpec((1, TOC), lambda n, j: (0, j)),
            ],
            out_specs=pl.BlockSpec((1, OH * OW, TOC), lambda n, j: (n, 0, j)),
        ),
        compiler_params=pltpu.CompilerParams(
            dimension_semantics=("parallel", "parallel"),
            vmem_limit_bytes=32 * 1024 * 1024,
        ),
        cost_estimate=cost,
    )(x_p, w_hwco, b_row)

    out = out_flat[:, :, :OC].reshape(N, OH, OW, OC)
    return jnp.transpose(out, (0, 3, 1, 2))   # back to NCHW


# --------------------------------- main ------------------------------------ #
if __name__ == "__main__":
    key = jax.random.PRNGKey(0)
    k_x, k_w, k_b = jax.random.split(key, 3)

    # Small shapes consistent with the module: Conv2d(4, 8, 3, same_padding=True)
    N, C, H, W = 2, 4, 16, 16
    OC, KH, KW = 8, 3, 3

    x = jax.random.normal(k_x, (N, C, H, W), dtype=jnp.float32)
    fan_in = C * KH * KW
    bound = 1.0 / (fan_in ** 0.5)
    weight = jax.random.uniform(k_w, (OC, C, KH, KW), jnp.float32,
                                minval=-bound, maxval=bound)
    bias = jax.random.uniform(k_b, (OC,), jnp.float32,
                              minval=-bound, maxval=bound)

    y = conv2d_forward(x, weight, bias, stride=1, same_padding=True, nl="relu")
    y = jax.block_until_ready(y)
    assert y.shape == (N, OC, H, W), y.shape

    # Reference check (loose tolerance: bf16 matmul operands, f32 accumulate).
    y_ref = jax.lax.conv_general_dilated(
        x, weight, window_strides=(1, 1), padding=((1, 1), (1, 1)),
        dimension_numbers=("NCHW", "OIHW", "NCHW"))
    y_ref = jnp.maximum(y_ref + bias.reshape(1, OC, 1, 1), 0.0)
    max_err = float(jnp.max(jnp.abs(y - y_ref)))
    assert jnp.allclose(y, y_ref, atol=5e-2, rtol=5e-2), max_err

    print("KERNEL_OK")
</pallas_src>

<mosaic_0001>
module attributes {stable_mosaic.version = 11 : i64} {
  func.func @_fused_conv_kernel(%arg0: i32, %arg1: i32, %arg2: memref<1x18x18x4xbf16, #tpu.memory_space<vmem>>, %arg3: memref<3x3x4x128xbf16, #tpu.memory_space<vmem>>, %arg4: memref<1x128xf32, #tpu.memory_space<vmem>>, %arg5: memref<1x256x128xf32, #tpu.memory_space<vmem>>) attributes {dimension_semantics = [#tpu.dimension_semantics<parallel>, #tpu.dimension_semantics<parallel>], iteration_bounds = array<i64: 2, 1>, scalar_prefetch = 0 : i64, scratch_operands = 0 : i64, tpu.core_type = #tpu.core_type<tc>, window_params = [{transform_indices = @transform_0, window_bounds = array<i64: 1, 18, 18, 4>}, {transform_indices = @transform_1, window_bounds = array<i64: 3, 3, 4, 128>}, {transform_indices = @transform_2, window_bounds = array<i64: 1, 128>}, {transform_indices = @transform_3, window_bounds = array<i64: 1, 256, 128>}]} {
    %cst = arith.constant 0.000000e+00 : f32
    %0 = vector.broadcast %cst : f32 to vector<256x128xf32>
    %c0 = arith.constant 0 : index
    %c0_0 = arith.constant 0 : index
    %c0_1 = arith.constant 0 : index
    %c0_2 = arith.constant 0 : index
    %1 = vector.load %arg2[%c0, %c0_0, %c0_1, %c0_2] : memref<1x18x18x4xbf16, #tpu.memory_space<vmem>>, vector<1x16x16x4xbf16>
    %2 = vector.shape_cast %1 : vector<1x16x16x4xbf16> to vector<16x16x4xbf16>
    %3 = vector.shape_cast %2 : vector<16x16x4xbf16> to vector<256x4xbf16>
    %c0_3 = arith.constant 0 : index
    %c0_4 = arith.constant 0 : index
    %c0_5 = arith.constant 0 : index
    %c0_6 = arith.constant 0 : index
    %4 = vector.load %arg3[%c0_3, %c0_4, %c0_5, %c0_6] : memref<3x3x4x128xbf16, #tpu.memory_space<vmem>>, vector<1x1x4x128xbf16>
    %5 = vector.shape_cast %4 : vector<1x1x4x128xbf16> to vector<4x128xbf16>
    %cst_7 = arith.constant dense<0.000000e+00> : vector<256x128xf32>
    %6 = tpu.matmul %3, %5, %cst_7 {dimension_numbers = #tpu.dot_dimension_numbers<[1], [0], [0], [1], [0, 0, 1, 1], [], []>} : vector<256x4xbf16>, vector<4x128xbf16>, vector<256x128xf32> -> vector<256x128xf32>
    %7 = arith.addf %0, %6 : vector<256x128xf32>
    %c0_8 = arith.constant 0 : index
    %c0_9 = arith.constant 0 : index
    %c1 = arith.constant 1 : index
    %c0_10 = arith.constant 0 : index
    %8 = vector.load %arg2[%c0_8, %c0_9, %c1, %c0_10] : memref<1x18x18x4xbf16, #tpu.memory_space<vmem>>, vector<1x16x16x4xbf16>
    %9 = vector.shape_cast %8 : vector<1x16x16x4xbf16> to vector<16x16x4xbf16>
    %10 = vector.shape_cast %9 : vector<16x16x4xbf16> to vector<256x4xbf16>
    %c0_11 = arith.constant 0 : index
    %c1_12 = arith.constant 1 : index
    %c0_13 = arith.constant 0 : index
    %c0_14 = arith.constant 0 : index
    %11 = vector.load %arg3[%c0_11, %c1_12, %c0_13, %c0_14] : memref<3x3x4x128xbf16, #tpu.memory_space<vmem>>, vector<1x1x4x128xbf16>
    %12 = vector.shape_cast %11 : vector<1x1x4x128xbf16> to vector<4x128xbf16>
    %cst_15 = arith.constant dense<0.000000e+00> : vector<256x128xf32>
    %13 = tpu.matmul %10, %12, %cst_15 {dimension_numbers = #tpu.dot_dimension_numbers<[1], [0], [0], [1], [0, 0, 1, 1], [], []>} : vector<256x4xbf16>, vector<4x128xbf16>, vector<256x128xf32> -> vector<256x128xf32>
    %14 = arith.addf %7, %13 : vector<256x128xf32>
    %c0_16 = arith.constant 0 : index
    %c0_17 = arith.constant 0 : index
    %c2 = arith.constant 2 : index
    %c0_18 = arith.constant 0 : index
    %15 = vector.load %arg2[%c0_16, %c0_17, %c2, %c0_18] : memref<1x18x18x4xbf16, #tpu.memory_space<vmem>>, vector<1x16x16x4xbf16>
    %16 = vector.shape_cast %15 : vector<1x16x16x4xbf16> to vector<16x16x4xbf16>
    %17 = vector.shape_cast %16 : vector<16x16x4xbf16> to vector<256x4xbf16>
    %c0_19 = arith.constant 0 : index
    %c2_20 = arith.constant 2 : index
    %c0_21 = arith.constant 0 : index
    %c0_22 = arith.constant 0 : index
    %18 = vector.load %arg3[%c0_19, %c2_20, %c0_21, %c0_22] : memref<3x3x4x128xbf16, #tpu.memory_space<vmem>>, vector<1x1x4x128xbf16>
    %19 = vector.shape_cast %18 : vector<1x1x4x128xbf16> to vector<4x128xbf16>
    %cst_23 = arith.constant dense<0.000000e+00> : vector<256x128xf32>
    %20 = tpu.matmul %17, %19, %cst_23 {dimension_numbers = #tpu.dot_dimension_numbers<[1], [0], [0], [1], [0, 0, 1, 1], [], []>} : vector<256x4xbf16>, vector<4x128xbf16>, vector<256x128xf32> -> vector<256x128xf32>
    %21 = arith.addf %14, %20 : vector<256x128xf32>
    %c0_24 = arith.constant 0 : index
    %c1_25 = arith.constant 1 : index
    %c0_26 = arith.constant 0 : index
    %c0_27 = arith.constant 0 : index
    %22 = vector.load %arg2[%c0_24, %c1_25, %c0_26, %c0_27] : memref<1x18x18x4xbf16, #tpu.memory_space<vmem>>, vector<1x16x16x4xbf16>
    %23 = vector.shape_cast %22 : vector<1x16x16x4xbf16> to vector<16x16x4xbf16>
    %24 = vector.shape_cast %23 : vector<16x16x4xbf16> to vector<256x4xbf16>
    %c1_28 = arith.constant 1 : index
    %c0_29 = arith.constant 0 : index
    %c0_30 = arith.constant 0 : index
    %c0_31 = arith.constant 0 : index
    %25 = vector.load %arg3[%c1_28, %c0_29, %c0_30, %c0_31] : memref<3x3x4x128xbf16, #tpu.memory_space<vmem>>, vector<1x1x4x128xbf16>
    %26 = vector.shape_cast %25 : vector<1x1x4x128xbf16> to vector<4x128xbf16>
    %cst_32 = arith.constant dense<0.000000e+00> : vector<256x128xf32>
    %27 = tpu.matmul %24, %26, %cst_32 {dimension_numbers = #tpu.dot_dimension_numbers<[1], [0], [0], [1], [0, 0, 1, 1], [], []>} : vector<256x4xbf16>, vector<4x128xbf16>, vector<256x128xf32> -> vector<256x128xf32>
    %28 = arith.addf %21, %27 : vector<256x128xf32>
    %c0_33 = arith.constant 0 : index
    %c1_34 = arith.constant 1 : index
    %c1_35 = arith.constant 1 : index
    %c0_36 = arith.constant 0 : index
    %29 = vector.load %arg2[%c0_33, %c1_34, %c1_35, %c0_36] : memref<1x18x18x4xbf16, #tpu.memory_space<vmem>>, vector<1x16x16x4xbf16>
    %30 = vector.shape_cast %29 : vector<1x16x16x4xbf16> to vector<16x16x4xbf16>
    %31 = vector.shape_cast %30 : vector<16x16x4xbf16> to vector<256x4xbf16>
    %c1_37 = arith.constant 1 : index
    %c1_38 = arith.constant 1 : index
    %c0_39 = arith.constant 0 : index
    %c0_40 = arith.constant 0 : index
    %32 = vector.load %arg3[%c1_37, %c1_38, %c0_39, %c0_40] : memref<3x3x4x128xbf16, #tpu.memory_space<vmem>>, vector<1x1x4x128xbf16>
    %33 = vector.shape_cast %32 : vector<1x1x4x128xbf16> to vector<4x128xbf16>
    %cst_41 = arith.constant dense<0.000000e+00> : vector<256x128xf32>
    %34 = tpu.matmul %31, %33, %cst_41 {dimension_numbers = #tpu.dot_dimension_numbers<[1], [0], [0], [1], [0, 0, 1, 1], [], []>} : vector<256x4xbf16>, vector<4x128xbf16>, vector<256x128xf32> -> vector<256x128xf32>
    %35 = arith.addf %28, %34 : vector<256x128xf32>
    %c0_42 = arith.constant 0 : index
    %c1_43 = arith.constant 1 : index
    %c2_44 = arith.constant 2 : index
    %c0_45 = arith.constant 0 : index
    %36 = vector.load %arg2[%c0_42, %c1_43, %c2_44, %c0_45] : memref<1x18x18x4xbf16, #tpu.memory_space<vmem>>, vector<1x16x16x4xbf16>
    %37 = vector.shape_cast %36 : vector<1x16x16x4xbf16> to vector<16x16x4xbf16>
    %38 = vector.shape_cast %37 : vector<16x16x4xbf16> to vector<256x4xbf16>
    %c1_46 = arith.constant 1 : index
    %c2_47 = arith.constant 2 : index
    %c0_48 = arith.constant 0 : index
    %c0_49 = arith.constant 0 : index
    %39 = vector.load %arg3[%c1_46, %c2_47, %c0_48, %c0_49] : memref<3x3x4x128xbf16, #tpu.memory_space<vmem>>, vector<1x1x4x128xbf16>
    %40 = vector.shape_cast %39 : vector<1x1x4x128xbf16> to vector<4x128xbf16>
    %cst_50 = arith.constant dense<0.000000e+00> : vector<256x128xf32>
    %41 = tpu.matmul %38, %40, %cst_50 {dimension_numbers = #tpu.dot_dimension_numbers<[1], [0], [0], [1], [0, 0, 1, 1], [], []>} : vector<256x4xbf16>, vector<4x128xbf16>, vector<256x128xf32> -> vector<256x128xf32>
    %42 = arith.addf %35, %41 : vector<256x128xf32>
    %c0_51 = arith.constant 0 : index
    %c2_52 = arith.constant 2 : index
    %c0_53 = arith.constant 0 : index
    %c0_54 = arith.constant 0 : index
    %43 = vector.load %arg2[%c0_51, %c2_52, %c0_53, %c0_54] : memref<1x18x18x4xbf16, #tpu.memory_space<vmem>>, vector<1x16x16x4xbf16>
    %44 = vector.shape_cast %43 : vector<1x16x16x4xbf16> to vector<16x16x4xbf16>
    %45 = vector.shape_cast %44 : vector<16x16x4xbf16> to vector<256x4xbf16>
    %c2_55 = arith.constant 2 : index
    %c0_56 = arith.constant 0 : index
    %c0_57 = arith.constant 0 : index
    %c0_58 = arith.constant 0 : index
    %46 = vector.load %arg3[%c2_55, %c0_56, %c0_57, %c0_58] : memref<3x3x4x128xbf16, #tpu.memory_space<vmem>>, vector<1x1x4x128xbf16>
    %47 = vector.shape_cast %46 : vector<1x1x4x128xbf16> to vector<4x128xbf16>
    %cst_59 = arith.constant dense<0.000000e+00> : vector<256x128xf32>
    %48 = tpu.matmul %45, %47, %cst_59 {dimension_numbers = #tpu.dot_dimension_numbers<[1], [0], [0], [1], [0, 0, 1, 1], [], []>} : vector<256x4xbf16>, vector<4x128xbf16>, vector<256x128xf32> -> vector<256x128xf32>
    %49 = arith.addf %42, %48 : vector<256x128xf32>
    %c0_60 = arith.constant 0 : index
    %c2_61 = arith.constant 2 : index
    %c1_62 = arith.constant 1 : index
    %c0_63 = arith.constant 0 : index
    %50 = vector.load %arg2[%c0_60, %c2_61, %c1_62, %c0_63] : memref<1x18x18x4xbf16, #tpu.memory_space<vmem>>, vector<1x16x16x4xbf16>
    %51 = vector.shape_cast %50 : vector<1x16x16x4xbf16> to vector<16x16x4xbf16>
    %52 = vector.shape_cast %51 : vector<16x16x4xbf16> to vector<256x4xbf16>
    %c2_64 = arith.constant 2 : index
    %c1_65 = arith.constant 1 : index
    %c0_66 = arith.constant 0 : index
    %c0_67 = arith.constant 0 : index
    %53 = vector.load %arg3[%c2_64, %c1_65, %c0_66, %c0_67] : memref<3x3x4x128xbf16, #tpu.memory_space<vmem>>, vector<1x1x4x128xbf16>
    %54 = vector.shape_cast %53 : vector<1x1x4x128xbf16> to vector<4x128xbf16>
    %cst_68 = arith.constant dense<0.000000e+00> : vector<256x128xf32>
    %55 = tpu.matmul %52, %54, %cst_68 {dimension_numbers = #tpu.dot_dimension_numbers<[1], [0], [0], [1], [0, 0, 1, 1], [], []>} : vector<256x4xbf16>, vector<4x128xbf16>, vector<256x128xf32> -> vector<256x128xf32>
    %56 = arith.addf %49, %55 : vector<256x128xf32>
    %c0_69 = arith.constant 0 : index
    %c2_70 = arith.constant 2 : index
    %c2_71 = arith.constant 2 : index
    %c0_72 = arith.constant 0 : index
    %57 = vector.load %arg2[%c0_69, %c2_70, %c2_71, %c0_72] : memref<1x18x18x4xbf16, #tpu.memory_space<vmem>>, vector<1x16x16x4xbf16>
    %58 = vector.shape_cast %57 : vector<1x16x16x4xbf16> to vector<16x16x4xbf16>
    %59 = vector.shape_cast %58 : vector<16x16x4xbf16> to vector<256x4xbf16>
    %c2_73 = arith.constant 2 : index
    %c2_74 = arith.constant 2 : index
    %c0_75 = arith.constant 0 : index
    %c0_76 = arith.constant 0 : index
    %60 = vector.load %arg3[%c2_73, %c2_74, %c0_75, %c0_76] : memref<3x3x4x128xbf16, #tpu.memory_space<vmem>>, vector<1x1x4x128xbf16>
    %61 = vector.shape_cast %60 : vector<1x1x4x128xbf16> to vector<4x128xbf16>
    %cst_77 = arith.constant dense<0.000000e+00> : vector<256x128xf32>
    %62 = tpu.matmul %59, %61, %cst_77 {dimension_numbers = #tpu.dot_dimension_numbers<[1], [0], [0], [1], [0, 0, 1, 1], [], []>} : vector<256x4xbf16>, vector<4x128xbf16>, vector<256x128xf32> -> vector<256x128xf32>
    %63 = arith.addf %56, %62 : vector<256x128xf32>
    %c0_78 = arith.constant 0 : index
    %c0_79 = arith.constant 0 : index
    %64 = vector.load %arg4[%c0_78, %c0_79] : memref<1x128xf32, #tpu.memory_space<vmem>>, vector<1x128xf32>
    %65 = vector.broadcast %64 : vector<1x128xf32> to vector<256x128xf32>
    %66 = arith.addf %63, %65 : vector<256x128xf32>
    %cst_80 = arith.constant 0.000000e+00 : f32
    %67 = vector.broadcast %cst_80 : f32 to vector<256x128xf32>
    %68 = arith.maximumf %66, %67 : vector<256x128xf32>
    %c0_81 = arith.constant 0 : index
    %c0_82 = arith.constant 0 : index
    %c0_83 = arith.constant 0 : index
    %69 = vector.load %arg5[%c0_81, %c0_82, %c0_83] : memref<1x256x128xf32, #tpu.memory_space<vmem>>, vector<1x256x128xf32>
    %70 = vector.shape_cast %69 : vector<1x256x128xf32> to vector<256x128xf32>
    %71 = vector.shape_cast %68 : vector<256x128xf32> to vector<1x256x128xf32>
    tpu.vector_store %arg5[%c0_81, %c0_82, %c0_83], %71 {strides = array<i32>} : memref<1x256x128xf32, #tpu.memory_space<vmem>>, vector<1x256x128xf32>,
    return
  }
  func.func @transform_0(%arg0: i32, %arg1: i32) -> (i32, i32, i32, i32) {
    %c0_i32 = arith.constant 0 : i32
    %c0_i32_0 = arith.constant 0 : i32
    %c0_i32_1 = arith.constant 0 : i32
    %c0_i32_2 = arith.constant 0 : i32
    return %arg0, %c0_i32, %c0_i32_0, %c0_i32_1 : i32, i32, i32, i32
  }
  func.func @transform_1(%arg0: i32, %arg1: i32) -> (i32, i32, i32, i32) {
    %c0_i32 = arith.constant 0 : i32
    %c0_i32_0 = arith.constant 0 : i32
    %c0_i32_1 = arith.constant 0 : i32
    %c0_i32_2 = arith.constant 0 : i32
    return %c0_i32, %c0_i32_0, %c0_i32_1, %arg1 : i32, i32, i32, i32
  }
  func.func @transform_2(%arg0: i32, %arg1: i32) -> (i32, i32) {
    %c0_i32 = arith.constant 0 : i32
    %c0_i32_0 = arith.constant 0 : i32
    return %c0_i32, %arg1 : i32, i32
  }
  func.func @transform_3(%arg0: i32, %arg1: i32) -> (i32, i32, i32) {
    %c0_i32 = arith.constant 0 : i32
    %c0_i32_0 = arith.constant 0 : i32
    return %arg0, %c0_i32, %arg1 : i32, i32, i32
  }
}

</mosaic_0001>

<llo_original>
// kernel: tpu_custom_call.1
$region0: #{tpu_custom_call.1}
  #allocation0 [shape = 'u32[]', space=smem, size = 0x4, offset = 0x4, fixed_abs, tag = 'smem constant byte address 0x4 - core index']
  #allocation1 [shape = 'u32[144,128]{1,0:T(1,128)}', space=vmem, size = 0x12000, scoped, tag = 'internal scratch']
  %s0 = inlined_call_operand.vmem [shape: bf16[2,18,18,4], index: 0, kind: input, shape index: {}]
  %s1 = inlined_call_operand.vmem [shape: bf16[3,3,4,128], index: 1, kind: input, shape index: {}]
  %s2 = inlined_call_operand.vmem [shape: f32[1,128], index: 2, kind: input, shape index: {}]
  %s3 = inlined_call_operand.hbm [shape: f32[2,256,128], index: 3, kind: output, shape index: {}]
  %s4 = sld [smem:[#allocation0]]
  $region45: #{tpu_custom_call.1} parent=0
    _
  %s6 = ssub.s32 1, %s4
  %s7 = scalar_select 0, %s6, %s4
  $region1: #{tpu_custom_call.1} parent=0
    #allocation2 [shape = 'u8[262144]{0}', space=vmem, size = 0x40000, scoped, tag = 'output window, operand 0']
    #allocation3 [shape = 's32[2]{0}', space=sflag, size = 0x8, scoped, tag = 'scoped memory for tpu_custom_call.1']
    %8 = vsyncpa [#allocation3], 0
    %s9 = scalar_lea.sflag [#allocation3], 1
    %10 = vsyncpa %s9, 0
    loop: start=0, step=1, limit=4
    $region2: #{tpu_custom_call.1} parent=1 // loop_pre_header
      _
    $region3: #{tpu_custom_call.1} parent=1 // loop_header
      %s12 = sphi 0, %s16
      %p13 = scmp.ge.s32.totalorder %s12, 4
      %s19 = sphi 0, %s31
      %s20 = sphi 0, %s27
      %s21 = sphi 0, %s19
      %s22 = sphi 0, %s20
      %s23 = sphi 0, %s21
      %s24 = sphi 0, %s22
      %s34 = sphi 0, %s36
      %s37 = sphi 0, %s34
      %s38 = sphi 0, %s37
      %s54 = sphi 0, %s38
      %s60 = sphi 0, %s62
      %s63 = sphi 0, %s60
      %s64 = sphi 0, %s63
      %s80 = sphi 0, %s64
      %s86 = sphi 0, %s88
      %s89 = sphi 0, %s86
      %s90 = sphi 0, %s89
      %s106 = sphi 0, %s90
      %s114 = sphi 0, %s116
      %s117 = sphi 0, %s114
      %s118 = sphi 0, %s117
      %s134 = sphi 0, %s118
    $region4: #{tpu_custom_call.1} parent=1 // loop_header_branch
      %15 = sbr.rel (%p13) target = $region8
    $region5: #{tpu_custom_call.1} parent=1 // loop_body
      %s17 = ssub.s32 %s12, 1
      %s18 = ssub.s32 %s12, 2
      %s25 = sadd.s32 1, %s20
      %p26 = scmp.ge.s32.totalorder %s25, 1
      %s27 = scalar_select %p26, 0, %s25
      %s28 = sadd.s32 1, %s19
      %s29 = scalar_select %p26, %s28, %s19
      %p30 = scmp.ge.s32.totalorder %s29, 2
      %s31 = scalar_select %p30, 0, %s29
      %s32 = ssub.s32 %s19, %s31
      %p33 = scmp.eq.s32.totalorder %s32, 0
      %s35 = sadd.s32 %s34, 1
      %s36 = scalar_select %p33, %s34, %s35
      %p39 = pneg %p33
      %p40 = scmp.eq.s32.totalorder %s12, 1
      %p41 = por %p39, %p40
      %p42 = scmp.ne.s32.totalorder %s34, %s37
      %p43 = scmp.eq.s32.totalorder %s12, 0
      %p44 = por %p42, %p43
      %p45 = scmp.ne.s32.totalorder %s34, %s37
      %p46 = scmp.eq.s32.totalorder %s17, 1
      %p47 = por %p45, %p46
      %p48 = scmp.ne.s32.totalorder %s37, %s38
      %p49 = scmp.eq.s32.totalorder %s17, 0
      %p50 = por %p48, %p49
      %p51 = scmp.ne.s32.totalorder %s37, %s38
      %p52 = scmp.eq.s32.totalorder %s18, 1
      %p53 = por %p51, %p52
      %p55 = scmp.ne.s32.totalorder %s38, %s54
      %p56 = scmp.eq.s32.totalorder %s18, 0
      %p57 = por %p55, %p56
      %s58 = ssub.s32 %s20, %s27
      %p59 = scmp.eq.s32.totalorder %s58, 0
      %s61 = sadd.s32 %s60, 1
      %s62 = scalar_select %p59, %s60, %s61
      %p65 = pneg %p59
      %p66 = scmp.eq.s32.totalorder %s12, 1
      %p67 = por %p65, %p66
      %p68 = scmp.ne.s32.totalorder %s60, %s63
      %p69 = scmp.eq.s32.totalorder %s12, 0
      %p70 = por %p68, %p69
      %p71 = scmp.ne.s32.totalorder %s60, %s63
      %p72 = scmp.eq.s32.totalorder %s17, 1
      %p73 = por %p71, %p72
      %p74 = scmp.ne.s32.totalorder %s63, %s64
      %p75 = scmp.eq.s32.totalorder %s17, 0
      %p76 = por %p74, %p75
      %p77 = scmp.ne.s32.totalorder %s63, %s64
      %p78 = scmp.eq.s32.totalorder %s18, 1
      %p79 = por %p77, %p78
      %p81 = scmp.ne.s32.totalorder %s64, %s80
      %p82 = scmp.eq.s32.totalorder %s18, 0
      %p83 = por %p81, %p82
      %s84 = ssub.s32 %s20, %s27
      %p85 = scmp.eq.s32.totalorder %s84, 0
      %s87 = sadd.s32 %s86, 1
      %s88 = scalar_select %p85, %s86, %s87
      %p91 = pneg %p85
      %p92 = scmp.eq.s32.totalorder %s12, 1
      %p93 = por %p91, %p92
      %p94 = scmp.ne.s32.totalorder %s86, %s89
      %p95 = scmp.eq.s32.totalorder %s12, 0
      %p96 = por %p94, %p95
      %p97 = scmp.ne.s32.totalorder %s86, %s89
      %p98 = scmp.eq.s32.totalorder %s17, 1
      %p99 = por %p97, %p98
      %p100 = scmp.ne.s32.totalorder %s89, %s90
      %p101 = scmp.eq.s32.totalorder %s17, 0
      %p102 = por %p100, %p101
      %p103 = scmp.ne.s32.totalorder %s89, %s90
      %p104 = scmp.eq.s32.totalorder %s18, 1
      %p105 = por %p103, %p104
      %p107 = scmp.ne.s32.totalorder %s90, %s106
      %p108 = scmp.eq.s32.totalorder %s18, 0
      %p109 = por %p107, %p108
      %s110 = ssub.s32 %s19, %s31
      %s111 = ssub.s32 %s20, %s27
      %s112 = sor.u32 %s110, %s111
      %p113 = scmp.eq.s32.totalorder %s112, 0
      %s115 = sadd.s32 %s114, 1
      %s116 = scalar_select %p113, %s114, %s115
      %p119 = pneg %p113
      %p120 = scmp.eq.s32.totalorder %s12, 1
      %p121 = por %p119, %p120
      %p122 = scmp.ne.s32.totalorder %s114, %s117
      %p123 = scmp.eq.s32.totalorder %s12, 0
      %p124 = por %p122, %p123
      %p125 = scmp.ne.s32.totalorder %s114, %s117
      %p126 = scmp.eq.s32.totalorder %s17, 1
      %p127 = por %p125, %p126
      %p128 = scmp.ne.s32.totalorder %s117, %s118
      %p129 = scmp.eq.s32.totalorder %s17, 0
      %p130 = por %p128, %p129
      %p131 = scmp.ne.s32.totalorder %s117, %s118
      %p132 = scmp.eq.s32.totalorder %s18, 1
      %p133 = por %p131, %p132
      %p135 = scmp.ne.s32.totalorder %s118, %s134
      %p136 = scmp.eq.s32.totalorder %s18, 0
      %p137 = por %p135, %p136
      %p138 = scmp.le.s32.totalorder 1, %s12
      %p139 = scmp.lt.s32.totalorder %s12, 3
      %p140 = pnand %p138, %p139
      %p141 = pneg %p140
      // Predicated region
      $region9: #{tpu_custom_call.1} parent=5 // pred_check
        _
      $region10: #{tpu_custom_call.1} parent=5 // pred_check_branch
        %143 = sbr.rel (%p140) target = $region12
      $region11: #{tpu_custom_call.1} parent=5 // pred_region
        %s144 = ssub.s32 %s12, 1
        // Predicated region
        $region13: #{tpu_custom_call.1} parent=11 // pred_check
          %p145 = pneg %p76
        $region14: #{tpu_custom_call.1} parent=11 // pred_check_branch
          %147 = sbr.rel (%p145) target = $region16
        $region15: #{tpu_custom_call.1} parent=11 // pred_region
          %p148 = scmp.lt.s32.totalorder %s22, 0
          %s149 = scalar_select %p148, %s22, 0
          %s150 = smul.addr %s149, 2
          %s151 = scalar_lea.vmem %s1, %s150
        $region16: #{tpu_custom_call.1} parent=11 // pred_fallthru
          _
        // Predicated region
        $region17: #{tpu_custom_call.1} parent=11 // pred_check
          %p152 = pneg %p102
        $region18: #{tpu_custom_call.1} parent=11 // pred_check_branch
          %154 = sbr.rel (%p152) target = $region20
        $region19: #{tpu_custom_call.1} parent=11 // pred_region
          %p155 = scmp.lt.s32.totalorder %s22, 0
          %s156 = scalar_select %p155, %s22, 0
          %s157 = scalar_lea.vmem %s2, %s156
        $region20: #{tpu_custom_call.1} parent=11 // pred_fallthru
          _
      $region12: #{tpu_custom_call.1} parent=5 // pred_fallthru
        _
      %p158 = scmp.lt.s32.totalorder %s12, 2
      // Predicated region
      $region21: #{tpu_custom_call.1} parent=5 // pred_check
        %p159 = pneg %p158
      $region22: #{tpu_custom_call.1} parent=5 // pred_check_branch
        %161 = sbr.rel (%p159) target = $region24
      $region23: #{tpu_custom_call.1} parent=5 // pred_region
        // Predicated region
        $region25: #{tpu_custom_call.1} parent=23 // pred_check
          %p162 = pneg %p44
        $region26: #{tpu_custom_call.1} parent=23 // pred_check_branch
          %164 = sbr.rel (%p162) target = $region28
        $region27: #{tpu_custom_call.1} parent=23 // pred_region
          %p165 = scmp.lt.s32.totalorder %s19, 1
          %s166 = scalar_select %p165, %s19, 1
          %s167 = smul.addr %s166, 54
          %s168 = smul.addr %s167, 4
          %s169 = scalar_lea.vmem %s0, %s168
        $region28: #{tpu_custom_call.1} parent=23 // pred_fallthru
          _
      $region24: #{tpu_custom_call.1} parent=5 // pred_fallthru
        _
      %p170 = scmp.le.s32.totalorder 1, %s12
      %p171 = scmp.lt.s32.totalorder %s12, 3
      %p172 = pnand %p170, %p171
      %p173 = pneg %p172
      // Predicated region
      $region29: #{tpu_custom_call.1} parent=5 // pred_check
        _
      $region30: #{tpu_custom_call.1} parent=5 // pred_check_branch
        %175 = sbr.rel (%p172) target = $region32
      $region31: #{tpu_custom_call.1} parent=5 // pred_region
        %s176 = ssub.s32 %s12, 1
        %p177 = scmp.lt.s32.totalorder %s21, 1
        %s178 = scalar_select %p177, %s21, 1
        %s179 = smul.addr %s178, 54
        %s180 = smul.addr %s179, 4
        %s181 = scalar_lea.vmem %s0, %s180
        %p182 = pneg %p50
        %p183 = pneg %p47
        %p184 = scmp.lt.s32.totalorder %s22, 0
        %s185 = scalar_select %p184, %s22, 0
        %s186 = smul.addr %s185, 2
        %s187 = scalar_lea.vmem %s1, %s186
        %p188 = pneg %p76
        %p189 = pneg %p73
        %p190 = scmp.lt.s32.totalorder %s22, 0
        %s191 = scalar_select %p190, %s22, 0
        %s192 = scalar_lea.vmem %s2, %s191
        %p193 = pneg %p102
        %p194 = pneg %p99
        %p195 = pneg %p130
        %p196 = pneg %p127
        %s197 = sand.u32 %s117, 1
        %s198 = scalar_lea.sflag [#allocation3], %s197
        %s199 = sand.u32 %s117, 1
        %s200 = smul.addr %s199, 256
        %s201 = scalar_lea.vmem [#allocation2], %s200
        %p202 = scmp.lt.s32.totalorder %s21, 1
        %s203 = scalar_select %p202, %s21, 1
        %s204 = smul.addr %s203, 54
        %s205 = smul.addr %s204, 4
        %s206 = scalar_lea.vmem %s0, %s205
        %p207 = scmp.lt.s32.totalorder %s22, 0
        %s208 = scalar_select %p207, %s22, 0
        %s209 = smul.addr %s208, 2
        %s210 = scalar_lea.vmem %s1, %s209
        %p211 = scmp.lt.s32.totalorder %s22, 0
        %s212 = scalar_select %p211, %s22, 0
        %s213 = scalar_lea.vmem %s2, %s212
        %v215 = vld [vmem:[%s206] sm:$0xf]
        %v216 = vld [vmem:[%s206 + $0x4] sm:$0xf]
        %v217 = vld [vmem:[%s206 + $0xc] sm:$0xf]
        %v218 = vld [vmem:[%s206 + $0x10] sm:$0xf]
        %v219 = vld [vmem:[%s206 + $0x18] sm:$0xf]
        %v220 = vld [vmem:[%s206 + $0x1c] sm:$0xf]
        %v221 = vld [vmem:[%s206 + $0x24] sm:$0xf]
        %v222 = vld [vmem:[%s206 + $0x28] sm:$0xf]
        %v223 = vld [vmem:[%s206 + $0x30] sm:$0xf]
        %v224 = vld [vmem:[%s206 + $0x34] sm:$0xf]
        %v225 = vld [vmem:[%s206 + $0x3c] sm:$0xf]
        %v226 = vld [vmem:[%s206 + $0x40] sm:$0xf]
        %v227 = vld [vmem:[%s206 + $0x48] sm:$0xf]
        %v228 = vld [vmem:[%s206 + $0x4c] sm:$0xf]
        %v229 = vld [vmem:[%s206 + $0x54] sm:$0xf]
        %v230 = vld [vmem:[%s206 + $0x58] sm:$0xf]
        %v231 = vld [vmem:[%s206 + $0x60] sm:$0xf]
        %v232 = vld [vmem:[%s206 + $0x64] sm:$0xf]
        %v233 = vld [vmem:[%s206 + $0x6c] sm:$0xf]
        %v234 = vld [vmem:[%s206 + $0x70] sm:$0xf]
        %v235 = vld [vmem:[%s206 + $0x78] sm:$0xf]
        %v236 = vld [vmem:[%s206 + $0x7c] sm:$0xf]
        %v237 = vld [vmem:[%s206 + $0x84] sm:$0xf]
        %v238 = vld [vmem:[%s206 + $0x88] sm:$0xf]
        %v239 = vld [vmem:[%s206 + $0x90] sm:$0xf]
        %v240 = vld [vmem:[%s206 + $0x94] sm:$0xf]
        %v241 = vld [vmem:[%s206 + $0x9c] sm:$0xf]
        %v242 = vld [vmem:[%s206 + $0xa0] sm:$0xf]
        %v243 = vld [vmem:[%s206 + $0xa8] sm:$0xf]
        %v244 = vld [vmem:[%s206 + $0xac] sm:$0xf]
        %v245 = vld [vmem:[%s206 + $0xb4] sm:$0xf]
        %v246 = vld [vmem:[%s206 + $0xb8] sm:$0xf]
        %v247 = vld [vmem:[%s210] sm:$0x3]
        %v248 = vld [vmem:[%s206 + $0x8] sm:$0x1]
        %v249 = vld [vmem:[%s206 + $0x14] sm:$0x1]
        %v250 = vld [vmem:[%s206 + $0x20] sm:$0x1]
        %v251 = vld [vmem:[%s206 + $0x2c] sm:$0x1]
        %v252 = vld [vmem:[%s206 + $0x38] sm:$0x1]
        %v253 = vld [vmem:[%s206 + $0x44] sm:$0x1]
        %v254 = vld [vmem:[%s206 + $0x50] sm:$0x1]
        %v255 = vld [vmem:[%s206 + $0x5c] sm:$0x1]
        %v256 = vld [vmem:[%s206 + $0x68] sm:$0x1]
        %v257 = vld [vmem:[%s206 + $0x74] sm:$0x1]
        %v258 = vld [vmem:[%s206 + $0x80] sm:$0x1]
        %v259 = vld [vmem:[%s206 + $0x8c] sm:$0x1]
        %v260 = vld [vmem:[%s206 + $0x98] sm:$0x1]
        %v261 = vld [vmem:[%s206 + $0xa4] sm:$0x1]
        %v262 = vld [vmem:[%s206 + $0xb0] sm:$0x1]
        %v263 = vld [vmem:[%s206 + $0xbc] sm:$0x1]
        %vm264 = vsmask.f32 3328
        %vm265 = vsmask.f32 7440
        %vm266 = vmor %vm264, %vm265
        %v268 = vshrl.u32 %v215, 16
        %v270 = vrot.slane %v268, 4
        %v271 = vshll.u32 %v215, 16
        %v273 = vrot.slane %v271, 5
        %v274 = vor.u32 %v270, %v273
        %v275 = vrot.slane %v274, 4
        %v277 = vshll.u32 %v216, 16
        %v279 = vrot.slane %v277, 5
        %v280 = vsel %vm266, %v275, %v279
        %v281 = vshrl.u32 %v216, 16
        %v283 = vrot.slane %v281, 4
        %v284 = vor.u32 %v283, %v279
        %v285 = vrot.slane %v284, 4
        %v287 = vshll.u32 %v248, 16
        %v289 = vrot.slane %v287, 5
        %v290 = vsel %vm266, %v285, %v289
        %v292 = vshrl.u32 %v217, 16
        %v294 = vrot.slane %v292, 4
        %v295 = vshll.u32 %v217, 16
        %v297 = vrot.slane %v295, 5
        %v298 = vor.u32 %v294, %v297
        %v299 = vrot.slane %v298, 4
        %v301 = vshll.u32 %v218, 16
        %v303 = vrot.slane %v301, 5
        %v304 = vsel %vm266, %v299, %v303
        %v305 = vshrl.u32 %v218, 16
        %v307 = vrot.slane %v305, 4
        %v308 = vor.u32 %v307, %v303
        %v309 = vrot.slane %v308, 4
        %v311 = vshll.u32 %v249, 16
        %v313 = vrot.slane %v311, 5
        %v314 = vsel %vm266, %v309, %v313
        %v316 = vshrl.u32 %v219, 16
        %v318 = vrot.slane %v316, 4
        %v319 = vshll.u32 %v219, 16
        %v321 = vrot.slane %v319, 5
        %v322 = vor.u32 %v318, %v321
        %v323 = vrot.slane %v322, 4
        %v325 = vshll.u32 %v220, 16
        %v327 = vrot.slane %v325, 5
        %v328 = vsel %vm266, %v323, %v327
        %v329 = vshrl.u32 %v220, 16
        %v331 = vrot.slane %v329, 4
        %v332 = vor.u32 %v331, %v327
        %v333 = vrot.slane %v332, 4
        %v335 = vshll.u32 %v250, 16
        %v337 = vrot.slane %v335, 5
        %v338 = vsel %vm266, %v333, %v337
        %v340 = vshrl.u32 %v221, 16
        %v342 = vrot.slane %v340, 4
        %v343 = vshll.u32 %v221, 16
        %v345 = vrot.slane %v343, 5
        %v346 = vor.u32 %v342, %v345
        %v347 = vrot.slane %v346, 4
        %v349 = vshll.u32 %v222, 16
        %v351 = vrot.slane %v349, 5
        %v352 = vsel %vm266, %v347, %v351
        %v353 = vshrl.u32 %v222, 16
        %v355 = vrot.slane %v353, 4
        %v356 = vor.u32 %v355, %v351
        %v357 = vrot.slane %v356, 4
        %v359 = vshll.u32 %v251, 16
        %v361 = vrot.slane %v359, 5
        %v362 = vsel %vm266, %v357, %v361
        %v364 = vshrl.u32 %v223, 16
        %v366 = vrot.slane %v364, 4
        %v367 = vshll.u32 %v223, 16
        %v369 = vrot.slane %v367, 5
        %v370 = vor.u32 %v366, %v369
        %v371 = vrot.slane %v370, 4
        %v373 = vshll.u32 %v224, 16
        %v375 = vrot.slane %v373, 5
        %v376 = vsel %vm266, %v371, %v375
        %v377 = vshrl.u32 %v224, 16
        %v379 = vrot.slane %v377, 4
        %v380 = vor.u32 %v379, %v375
        %v381 = vrot.slane %v380, 4
        %v383 = vshll.u32 %v252, 16
        %v385 = vrot.slane %v383, 5
        %v386 = vsel %vm266, %v381, %v385
        %v388 = vshrl.u32 %v225, 16
        %v390 = vrot.slane %v388, 4
        %v391 = vshll.u32 %v225, 16
        %v393 = vrot.slane %v391, 5
        %v394 = vor.u32 %v390, %v393
        %v395 = vrot.slane %v394, 4
        %v397 = vshll.u32 %v226, 16
        %v399 = vrot.slane %v397, 5
        %v400 = vsel %vm266, %v395, %v399
        %v401 = vshrl.u32 %v226, 16
        %v403 = vrot.slane %v401, 4
        %v404 = vor.u32 %v403, %v399
        %v405 = vrot.slane %v404, 4
        %v407 = vshll.u32 %v253, 16
        %v409 = vrot.slane %v407, 5
        %v410 = vsel %vm266, %v405, %v409
        %v412 = vshrl.u32 %v227, 16
        %v414 = vrot.slane %v412, 4
        %v415 = vshll.u32 %v227, 16
        %v417 = vrot.slane %v415, 5
        %v418 = vor.u32 %v414, %v417
        %v419 = vrot.slane %v418, 4
        %v421 = vshll.u32 %v228, 16
        %v423 = vrot.slane %v421, 5
        %v424 = vsel %vm266, %v419, %v423
        %v425 = vshrl.u32 %v228, 16
        %v427 = vrot.slane %v425, 4
        %v428 = vor.u32 %v427, %v423
        %v429 = vrot.slane %v428, 4
        %v431 = vshll.u32 %v254, 16
        %v433 = vrot.slane %v431, 5
        %v434 = vsel %vm266, %v429, %v433
        %v436 = vshrl.u32 %v229, 16
        %v438 = vrot.slane %v436, 4
        %v439 = vshll.u32 %v229, 16
        %v441 = vrot.slane %v439, 5
        %v442 = vor.u32 %v438, %v441
        %v443 = vrot.slane %v442, 4
        %v445 = vshll.u32 %v230, 16
        %v447 = vrot.slane %v445, 5
        %v448 = vsel %vm266, %v443, %v447
        %v449 = vshrl.u32 %v230, 16
        %v451 = vrot.slane %v449, 4
        %v452 = vor.u32 %v451, %v447
        %v453 = vrot.slane %v452, 4
        %v455 = vshll.u32 %v255, 16
        %v457 = vrot.slane %v455, 5
        %v458 = vsel %vm266, %v453, %v457
        %v460 = vshrl.u32 %v231, 16
        %v462 = vrot.slane %v460, 4
        %v463 = vshll.u32 %v231, 16
        %v465 = vrot.slane %v463, 5
        %v466 = vor.u32 %v462, %v465
        %v467 = vrot.slane %v466, 4
        %v469 = vshll.u32 %v232, 16
        %v471 = vrot.slane %v469, 5
        %v472 = vsel %vm266, %v467, %v471
        %v473 = vshrl.u32 %v232, 16
        %v475 = vrot.slane %v473, 4
        %v476 = vor.u32 %v475, %v471
        %v477 = vrot.slane %v476, 4
        %v479 = vshll.u32 %v256, 16
        %v481 = vrot.slane %v479, 5
        %v482 = vsel %vm266, %v477, %v481
        %v484 = vshrl.u32 %v233, 16
        %v486 = vrot.slane %v484, 4
        %v487 = vshll.u32 %v233, 16
        %v489 = vrot.slane %v487, 5
        %v490 = vor.u32 %v486, %v489
        %v491 = vrot.slane %v490, 4
        %v493 = vshll.u32 %v234, 16
        %v495 = vrot.slane %v493, 5
        %v496 = vsel %vm266, %v491, %v495
        %v497 = vshrl.u32 %v234, 16
        %v499 = vrot.slane %v497, 4
        %v500 = vor.u32 %v499, %v495
        %v501 = vrot.slane %v500, 4
        %v503 = vshll.u32 %v257, 16
        %v505 = vrot.slane %v503, 5
        %v506 = vsel %vm266, %v501, %v505
        %v508 = vshrl.u32 %v235, 16
        %v510 = vrot.slane %v508, 4
        %v511 = vshll.u32 %v235, 16
        %v513 = vrot.slane %v511, 5
        %v514 = vor.u32 %v510, %v513
        %v515 = vrot.slane %v514, 4
        %v517 = vshll.u32 %v236, 16
        %v519 = vrot.slane %v517, 5
        %v520 = vsel %vm266, %v515, %v519
        %v521 = vshrl.u32 %v236, 16
        %v523 = vrot.slane %v521, 4
        %v524 = vor.u32 %v523, %v519
        %v525 = vrot.slane %v524, 4
        %v527 = vshll.u32 %v258, 16
        %v529 = vrot.slane %v527, 5
        %v530 = vsel %vm266, %v525, %v529
        %v532 = vshrl.u32 %v237, 16
        %v534 = vrot.slane %v532, 4
        %v535 = vshll.u32 %v237, 16
        %v537 = vrot.slane %v535, 5
        %v538 = vor.u32 %v534, %v537
        %v539 = vrot.slane %v538, 4
        %v541 = vshll.u32 %v238, 16
        %v543 = vrot.slane %v541, 5
        %v544 = vsel %vm266, %v539, %v543
        %v545 = vshrl.u32 %v238, 16
        %v547 = vrot.slane %v545, 4
        %v548 = vor.u32 %v547, %v543
        %v549 = vrot.slane %v548, 4
        %v551 = vshll.u32 %v259, 16
        %v553 = vrot.slane %v551, 5
        %v554 = vsel %vm266, %v549, %v553
        %v556 = vshrl.u32 %v239, 16
        %v558 = vrot.slane %v556, 4
        %v559 = vshll.u32 %v239, 16
        %v561 = vrot.slane %v559, 5
        %v562 = vor.u32 %v558, %v561
        %v563 = vrot.slane %v562, 4
        %v565 = vshll.u32 %v240, 16
        %v567 = vrot.slane %v565, 5
        %v568 = vsel %vm266, %v563, %v567
        %v569 = vshrl.u32 %v240, 16
        %v571 = vrot.slane %v569, 4
        %v572 = vor.u32 %v571, %v567
        %v573 = vrot.slane %v572, 4
        %v575 = vshll.u32 %v260, 16
        %v577 = vrot.slane %v575, 5
        %v578 = vsel %vm266, %v573, %v577
        %v580 = vshrl.u32 %v241, 16
        %v582 = vrot.slane %v580, 4
        %v583 = vshll.u32 %v241, 16
        %v585 = vrot.slane %v583, 5
        %v586 = vor.u32 %v582, %v585
        %v587 = vrot.slane %v586, 4
        %v589 = vshll.u32 %v242, 16
        %v591 = vrot.slane %v589, 5
        %v592 = vsel %vm266, %v587, %v591
        %v593 = vshrl.u32 %v242, 16
        %v595 = vrot.slane %v593, 4
        %v596 = vor.u32 %v595, %v591
        %v597 = vrot.slane %v596, 4
        %v599 = vshll.u32 %v261, 16
        %v601 = vrot.slane %v599, 5
        %v602 = vsel %vm266, %v597, %v601
        %v604 = vshrl.u32 %v243, 16
        %v606 = vrot.slane %v604, 4
        %v607 = vshll.u32 %v243, 16
        %v609 = vrot.slane %v607, 5
        %v610 = vor.u32 %v606, %v609
        %v611 = vrot.slane %v610, 4
        %v613 = vshll.u32 %v244, 16
        %v615 = vrot.slane %v613, 5
        %v616 = vsel %vm266, %v611, %v615
        %v617 = vshrl.u32 %v244, 16
        %v619 = vrot.slane %v617, 4
        %v620 = vor.u32 %v619, %v615
        %v621 = vrot.slane %v620, 4
        %v623 = vshll.u32 %v262, 16
        %v625 = vrot.slane %v623, 5
        %v626 = vsel %vm266, %v621, %v625
        %v628 = vshrl.u32 %v245, 16
        %v630 = vrot.slane %v628, 4
        %v631 = vshll.u32 %v245, 16
        %v633 = vrot.slane %v631, 5
        %v634 = vor.u32 %v630, %v633
        %v635 = vrot.slane %v634, 4
        %v637 = vshll.u32 %v246, 16
        %v639 = vrot.slane %v637, 5
        %v640 = vsel %vm266, %v635, %v639
        %v641 = vshrl.u32 %v246, 16
        %v643 = vrot.slane %v641, 4
        %v644 = vor.u32 %v643, %v639
        %v645 = vrot.slane %v644, 4
        %v647 = vshll.u32 %v263, 16
        %v649 = vrot.slane %v647, 5
        %v650 = vsel %vm266, %v645, %v649
        %s651 = scalar_lea.vmem %s210, 2
        %v652 = vld [vmem:[%s651] sm:$0x3]
        %v653 = vunpack.c.l.b16 %v280
        %v654 = vunpack.c.l.b16 %v290
        %v655 = vunpack.c.l.b16 %v304
        %v656 = vunpack.c.l.b16 %v314
        %v657 = vunpack.c.l.b16 %v328
        %v658 = vunpack.c.l.b16 %v338
        %v659 = vunpack.c.l.b16 %v352
        %v660 = vunpack.c.l.b16 %v362
        %v661 = vunpack.c.l.b16 %v376
        %v662 = vunpack.c.l.b16 %v386
        %v663 = vunpack.c.l.b16 %v400
        %v664 = vunpack.c.l.b16 %v410
        %v665 = vunpack.c.l.b16 %v424
        %v666 = vunpack.c.l.b16 %v434
        %v667 = vunpack.c.l.b16 %v448
        %v668 = vunpack.c.l.b16 %v458
        %v669 = vunpack.c.l.b16 %v472
        %v670 = vunpack.c.l.b16 %v482
        %v671 = vunpack.c.l.b16 %v496
        %v672 = vunpack.c.l.b16 %v506
        %v673 = vunpack.c.l.b16 %v520
        %v674 = vunpack.c.l.b16 %v530
        %v675 = vunpack.c.l.b16 %v544
        %v676 = vunpack.c.l.b16 %v554
        %v677 = vunpack.c.l.b16 %v568
        %v678 = vunpack.c.l.b16 %v578
        %v679 = vunpack.c.l.b16 %v592
        %v680 = vunpack.c.l.b16 %v602
        %v681 = vunpack.c.l.b16 %v616
        %v682 = vunpack.c.l.b16 %v626
        %v683 = vunpack.c.l.b16 %v640
        %v684 = vunpack.c.l.b16 %v650
        %v685 = vpack.c.b16 %v654, %v653
        %v686 = vpack.c.b16 %v656, %v655
        %v687 = vpack.c.b16 %v658, %v657
        %v688 = vpack.c.b16 %v660, %v659
        %v689 = vpack.c.b16 %v662, %v661
        %v690 = vpack.c.b16 %v664, %v663
        %v691 = vpack.c.b16 %v666, %v665
        %v692 = vpack.c.b16 %v668, %v667
        %v693 = vpack.c.b16 %v670, %v669
        %v694 = vpack.c.b16 %v672, %v671
        %v695 = vpack.c.b16 %v674, %v673
        %v696 = vpack.c.b16 %v676, %v675
        %v697 = vpack.c.b16 %v678, %v677
        %v698 = vpack.c.b16 %v680, %v679
        %v699 = vpack.c.b16 %v682, %v681
        %v700 = vpack.c.b16 %v684, %v683
        %vm701 = vcmask 31744
        %v703 = vsel %vm701, %v685, 0
        %v706 = vsel %vm701, %v686, 0
        %v709 = vsel %vm701, %v687, 0
        %v712 = vsel %vm701, %v688, 0
        %v715 = vsel %vm701, %v689, 0
        %v718 = vsel %vm701, %v690, 0
        %v721 = vsel %vm701, %v691, 0
        %v724 = vsel %vm701, %v692, 0
        %v727 = vsel %vm701, %v693, 0
        %v730 = vsel %vm701, %v694, 0
        %v733 = vsel %vm701, %v695, 0
        %v736 = vsel %vm701, %v696, 0
        %v739 = vsel %vm701, %v697, 0
        %v742 = vsel %vm701, %v698, 0
        %v745 = vsel %vm701, %v699, 0
        %v748 = vsel %vm701, %v700, 0
        %vm750 = vcmask 1041408
        %v752 = vsel %vm750, %v652, 0
        %754 = vmatprep.subr.bf16.mxu0 0
        %755 = vmatpush1.bf16.msra.mxu0 0
        %756 = vmatprep.subr.bf16.mxu0 0
        %757 = vmatpush1.bf16.msra.mxu0 0
        %758 = vmatprep.subr.bf16.mxu0 0
        %759 = vmatpush1.bf16.msra.mxu0 0
        %760 = vmatprep.subr.bf16.mxu0 0
        %761 = vmatpush1.bf16.msra.mxu0 0
        %762 = vmatprep.subr.bf16.mxu0 0
        %763 = vmatpush1.bf16.msra.mxu0 0
        %764 = vmatprep.subr.bf16.mxu0 0
        %765 = vmatpush1.bf16.msra.mxu0 0
        %766 = vmatprep.subr.bf16.mxu0 0
        %767 = vmatpush1.bf16.msra.mxu0 0
        %768 = vmatprep.subr.bf16.mxu0 0
        %769 = vmatpush1.bf16.msra.mxu0 %v752
        %770 = vmatprep.subr.bf16.mxu0 0
        %771 = vmatpush2.bf16.msra.mxu0 0
        %772 = vmatprep.subr.bf16.mxu0 0
        %773 = vmatpush2.bf16.msra.mxu0 0
        %774 = vmatprep.subr.bf16.mxu0 0
        %775 = vmatpush2.bf16.msra.mxu0 0
        %776 = vmatprep.subr.bf16.mxu0 0
        %777 = vmatpush2.bf16.msra.mxu0 0
        %778 = vmatprep.subr.bf16.mxu0 0
        %779 = vmatpush2.bf16.msra.mxu0 0
        %780 = vmatprep.subr.bf16.mxu0 0
        %781 = vmatpush2.bf16.msra.mxu0 0
        %782 = vmatprep.subr.bf16.mxu0 0
        %783 = vmatpush2.bf16.msra.mxu0 0
        %784 = vmatprep.subr.bf16.mxu0 0
        %785 = vmatpush2.bf16.msra.mxu0 0
        %786 = vmatprep.mubr.bf16.mxu0 0
        %787 = vmatmul.mubr.bf16.gmra.mxu0 %v703
        %v788 = vpop.f32.mrf.mxu0
        %v789 = vadd.f32 0.0, %v788
        %v790 = vpop.f32.mrf.mxu0
        %v791 = vpop.f32.mrf.mxu0
        %v792 = vadd.f32 0.0, %v791
        %v793 = vpop.f32.mrf.mxu0
        %794 = vmatprep.mubr.bf16.mxu0 0
        %795 = vmatmul.mubr.bf16.gmra.mxu0 %v706
        %v796 = vpop.f32.mrf.mxu0
        %v797 = vadd.f32 0.0, %v796
        %v798 = vpop.f32.mrf.mxu0
        %v799 = vpop.f32.mrf.mxu0
        %v800 = vadd.f32 0.0, %v799
        %v801 = vpop.f32.mrf.mxu0
        %802 = vmatprep.mubr.bf16.mxu0 0
        %803 = vmatmul.mubr.bf16.gmra.mxu0 %v709
        %v804 = vpop.f32.mrf.mxu0
        %v805 = vadd.f32 0.0, %v804
        %v806 = vpop.f32.mrf.mxu0
        %v807 = vpop.f32.mrf.mxu0
        %v808 = vadd.f32 0.0, %v807
        %v809 = vpop.f32.mrf.mxu0
        %810 = vmatprep.mubr.bf16.mxu0 0
        %811 = vmatmul.mubr.bf16.gmra.mxu0 %v712
        %v812 = vpop.f32.mrf.mxu0
        %v813 = vadd.f32 0.0, %v812
        %v814 = vpop.f32.mrf.mxu0
        %v815 = vpop.f32.mrf.mxu0
        %v816 = vadd.f32 0.0, %v815
        %v817 = vpop.f32.mrf.mxu0
        %818 = vmatprep.mubr.bf16.mxu0 0
        %819 = vmatmul.mubr.bf16.gmra.mxu0 %v715
        %v820 = vpop.f32.mrf.mxu0
        %v821 = vadd.f32 0.0, %v820
        %v822 = vpop.f32.mrf.mxu0
        %v823 = vpop.f32.mrf.mxu0
        %v824 = vadd.f32 0.0, %v823
        %v825 = vpop.f32.mrf.mxu0
        %826 = vmatprep.mubr.bf16.mxu0 0
        %827 = vmatmul.mubr.bf16.gmra.mxu0 %v718
        %v828 = vpop.f32.mrf.mxu0
        %v829 = vadd.f32 0.0, %v828
        %v830 = vpop.f32.mrf.mxu0
        %v831 = vpop.f32.mrf.mxu0
        %v832 = vadd.f32 0.0, %v831
        %v833 = vpop.f32.mrf.mxu0
        %834 = vmatprep.mubr.bf16.mxu0 0
        %835 = vmatmul.mubr.bf16.gmra.mxu0 %v721
        %v836 = vpop.f32.mrf.mxu0
        %v837 = vadd.f32 0.0, %v836
        %v838 = vpop.f32.mrf.mxu0
        %v839 = vpop.f32.mrf.mxu0
        %v840 = vadd.f32 0.0, %v839
        %v841 = vpop.f32.mrf.mxu0
        %842 = vmatprep.mubr.bf16.mxu0 0
        %843 = vmatmul.mubr.bf16.gmra.mxu0 %v724
        %v844 = vpop.f32.mrf.mxu0
        %v845 = vadd.f32 0.0, %v844
        %v846 = vpop.f32.mrf.mxu0
        %v847 = vpop.f32.mrf.mxu0
        %v848 = vadd.f32 0.0, %v847
        %v849 = vpop.f32.mrf.mxu0
        %850 = vmatprep.mubr.bf16.mxu0 0
        %851 = vmatmul.mubr.bf16.gmra.mxu0 %v727
        %v852 = vpop.f32.mrf.mxu0
        %v853 = vadd.f32 0.0, %v852
        %v854 = vpop.f32.mrf.mxu0
        %v855 = vpop.f32.mrf.mxu0
        %v856 = vadd.f32 0.0, %v855
        %v857 = vpop.f32.mrf.mxu0
        %858 = vmatprep.mubr.bf16.mxu0 0
        %859 = vmatmul.mubr.bf16.gmra.mxu0 %v730
        %v860 = vpop.f32.mrf.mxu0
        %v861 = vadd.f32 0.0, %v860
        %v862 = vpop.f32.mrf.mxu0
        %v863 = vpop.f32.mrf.mxu0
        %v864 = vadd.f32 0.0, %v863
        %v865 = vpop.f32.mrf.mxu0
        %866 = vmatprep.mubr.bf16.mxu0 0
        %867 = vmatmul.mubr.bf16.gmra.mxu0 %v733
        %v868 = vpop.f32.mrf.mxu0
        %v869 = vadd.f32 0.0, %v868
        %v870 = vpop.f32.mrf.mxu0
        %v871 = vpop.f32.mrf.mxu0
        %v872 = vadd.f32 0.0, %v871
        %v873 = vpop.f32.mrf.mxu0
        %874 = vmatprep.mubr.bf16.mxu0 0
        %875 = vmatmul.mubr.bf16.gmra.mxu0 %v736
        %v876 = vpop.f32.mrf.mxu0
        %v877 = vadd.f32 0.0, %v876
        %v878 = vpop.f32.mrf.mxu0
        %v879 = vpop.f32.mrf.mxu0
        %v880 = vadd.f32 0.0, %v879
        %v881 = vpop.f32.mrf.mxu0
        %882 = vmatprep.mubr.bf16.mxu0 0
        %883 = vmatmul.mubr.bf16.gmra.mxu0 %v739
        %v884 = vpop.f32.mrf.mxu0
        %v885 = vadd.f32 0.0, %v884
        %v886 = vpop.f32.mrf.mxu0
        %v887 = vpop.f32.mrf.mxu0
        %v888 = vadd.f32 0.0, %v887
        %v889 = vpop.f32.mrf.mxu0
        %890 = vmatprep.mubr.bf16.mxu0 0
        %891 = vmatmul.mubr.bf16.gmra.mxu0 %v742
        %v892 = vpop.f32.mrf.mxu0
        %v893 = vadd.f32 0.0, %v892
        %v894 = vpop.f32.mrf.mxu0
        %v895 = vpop.f32.mrf.mxu0
        %v896 = vadd.f32 0.0, %v895
        %v897 = vpop.f32.mrf.mxu0
        %898 = vmatprep.mubr.bf16.mxu0 0
        %899 = vmatmul.mubr.bf16.gmra.mxu0 %v745
        %v900 = vpop.f32.mrf.mxu0
        %v901 = vadd.f32 0.0, %v900
        %v902 = vpop.f32.mrf.mxu0
        %v903 = vpop.f32.mrf.mxu0
        %v904 = vadd.f32 0.0, %v903
        %v905 = vpop.f32.mrf.mxu0
        %906 = vmatprep.mubr.bf16.mxu0 0
        %907 = vmatmul.mubr.bf16.gmra.mxu0 %v748
        %v908 = vpop.f32.mrf.mxu0
        %v909 = vadd.f32 0.0, %v908
        %v910 = vpop.f32.mrf.mxu0
        %v911 = vpop.f32.mrf.mxu0
        %v912 = vadd.f32 0.0, %v911
        %v913 = vpop.f32.mrf.mxu0
        %914 = vdwg.mxu0
        %v947 = vunpack.c.l.b16 %v215
        %v948 = vunpack.c.l.b16 %v216
        %v949 = vunpack.c.l.b16 %v217
        %v950 = vunpack.c.l.b16 %v218
        %v951 = vunpack.c.l.b16 %v219
        %v952 = vunpack.c.l.b16 %v220
        %v953 = vunpack.c.l.b16 %v221
        %v954 = vunpack.c.l.b16 %v222
        %v955 = vunpack.c.l.b16 %v223
        %v956 = vunpack.c.l.b16 %v224
        %v957 = vunpack.c.l.b16 %v225
        %v958 = vunpack.c.l.b16 %v226
        %v959 = vunpack.c.l.b16 %v227
        %v960 = vunpack.c.l.b16 %v228
        %v961 = vunpack.c.l.b16 %v229
        %v962 = vunpack.c.l.b16 %v230
        %v963 = vunpack.c.l.b16 %v231
        %v964 = vunpack.c.l.b16 %v232
        %v965 = vunpack.c.l.b16 %v233
        %v966 = vunpack.c.l.b16 %v234
        %v967 = vunpack.c.l.b16 %v235
        %v968 = vunpack.c.l.b16 %v236
        %v969 = vunpack.c.l.b16 %v237
        %v970 = vunpack.c.l.b16 %v238
        %v971 = vunpack.c.l.b16 %v239
        %v972 = vunpack.c.l.b16 %v240
        %v973 = vunpack.c.l.b16 %v241
        %v974 = vunpack.c.l.b16 %v242
        %v975 = vunpack.c.l.b16 %v243
        %v976 = vunpack.c.l.b16 %v244
        %v977 = vunpack.c.l.b16 %v245
        %v978 = vunpack.c.l.b16 %v246
        %v979 = vpack.c.b16 %v948, %v947
        %v980 = vpack.c.b16 %v950, %v949
        %v981 = vpack.c.b16 %v952, %v951
        %v982 = vpack.c.b16 %v954, %v953
        %v983 = vpack.c.b16 %v956, %v955
        %v984 = vpack.c.b16 %v958, %v957
        %v985 = vpack.c.b16 %v960, %v959
        %v986 = vpack.c.b16 %v962, %v961
        %v987 = vpack.c.b16 %v964, %v963
        %v988 = vpack.c.b16 %v966, %v965
        %v989 = vpack.c.b16 %v968, %v967
        %v990 = vpack.c.b16 %v970, %v969
        %v991 = vpack.c.b16 %v972, %v971
        %v992 = vpack.c.b16 %v974, %v973
        %v993 = vpack.c.b16 %v976, %v975
        %v994 = vpack.c.b16 %v978, %v977
        %v996 = vsel %vm701, %v979, 0
        %v999 = vsel %vm701, %v980, 0
        %v1002 = vsel %vm701, %v981, 0
        %v1005 = vsel %vm701, %v982, 0
        %v1008 = vsel %vm701, %v983, 0
        %v1011 = vsel %vm701, %v984, 0
        %v1014 = vsel %vm701, %v985, 0
        %v1017 = vsel %vm701, %v986, 0
        %v1020 = vsel %vm701, %v987, 0
        %v1023 = vsel %vm701, %v988, 0
        %v1026 = vsel %vm701, %v989, 0
        %v1029 = vsel %vm701, %v990, 0
        %v1032 = vsel %vm701, %v991, 0
        %v1035 = vsel %vm701, %v992, 0
        %v1038 = vsel %vm701, %v993, 0
        %v1041 = vsel %vm701, %v994, 0
        %v1044 = vsel %vm750, %v247, 0
        %1046 = vmatprep.subr.bf16.mxu0 0
        %1047 = vmatpush1.bf16.msra.mxu0 0
        %1048 = vmatprep.subr.bf16.mxu0 0
        %1049 = vmatpush1.bf16.msra.mxu0 0
        %1050 = vmatprep.subr.bf16.mxu0 0
        %1051 = vmatpush1.bf16.msra.mxu0 0
        %1052 = vmatprep.subr.bf16.mxu0 0
        %1053 = vmatpush1.bf16.msra.mxu0 0
        %1054 = vmatprep.subr.bf16.mxu0 0
        %1055 = vmatpush1.bf16.msra.mxu0 0
        %1056 = vmatprep.subr.bf16.mxu0 0
        %1057 = vmatpush1.bf16.msra.mxu0 0
        %1058 = vmatprep.subr.bf16.mxu0 0
        %1059 = vmatpush1.bf16.msra.mxu0 0
        %1060 = vmatprep.subr.bf16.mxu0 0
        %1061 = vmatpush1.bf16.msra.mxu0 %v1044
        %1062 = vmatprep.subr.bf16.mxu0 0
        %1063 = vmatpush2.bf16.msra.mxu0 0
        %1064 = vmatprep.subr.bf16.mxu0 0
        %1065 = vmatpush2.bf16.msra.mxu0 0
        %1066 = vmatprep.subr.bf16.mxu0 0
        %1067 = vmatpush2.bf16.msra.mxu0 0
        %1068 = vmatprep.subr.bf16.mxu0 0
        %1069 = vmatpush2.bf16.msra.mxu0 0
        %1070 = vmatprep.subr.bf16.mxu0 0
        %1071 = vmatpush2.bf16.msra.mxu0 0
        %1072 = vmatprep.subr.bf16.mxu0 0
        %1073 = vmatpush2.bf16.msra.mxu0 0
        %1074 = vmatprep.subr.bf16.mxu0 0
        %1075 = vmatpush2.bf16.msra.mxu0 0
        %1076 = vmatprep.subr.bf16.mxu0 0
        %1077 = vmatpush2.bf16.msra.mxu0 0
        %1078 = vmatprep.mubr.bf16.mxu0 0
        %1079 = vmatmul.mubr.bf16.gmra.mxu0 %v996
        %v1080 = vpop.f32.mrf.mxu0
        %v1081 = vadd.f32 %v789, %v1080
        %v1082 = vpop.f32.mrf.mxu0
        %v1083 = vpop.f32.mrf.mxu0
        %v1084 = vadd.f32 %v792, %v1083
        %v1085 = vpop.f32.mrf.mxu0
        %1086 = vmatprep.mubr.bf16.mxu0 0
        %1087 = vmatmul.mubr.bf16.gmra.mxu0 %v999
        %v1088 = vpop.f32.mrf.mxu0
        %v1089 = vadd.f32 %v797, %v1088
        %v1090 = vpop.f32.mrf.mxu0
        %v1091 = vpop.f32.mrf.mxu0
        %v1092 = vadd.f32 %v800, %v1091
        %v1093 = vpop.f32.mrf.mxu0
        %1094 = vmatprep.mubr.bf16.mxu0 0
        %1095 = vmatmul.mubr.bf16.gmra.mxu0 %v1002
        %v1096 = vpop.f32.mrf.mxu0
        %v1097 = vadd.f32 %v805, %v1096
        %v1098 = vpop.f32.mrf.mxu0
        %v1099 = vpop.f32.mrf.mxu0
        %v1100 = vadd.f32 %v808, %v1099
        %v1101 = vpop.f32.mrf.mxu0
        %1102 = vmatprep.mubr.bf16.mxu0 0
        %1103 = vmatmul.mubr.bf16.gmra.mxu0 %v1005
        %v1104 = vpop.f32.mrf.mxu0
        %v1105 = vadd.f32 %v813, %v1104
        %v1106 = vpop.f32.mrf.mxu0
        %v1107 = vpop.f32.mrf.mxu0
        %v1108 = vadd.f32 %v816, %v1107
        %v1109 = vpop.f32.mrf.mxu0
        %1110 = vmatprep.mubr.bf16.mxu0 0
        %1111 = vmatmul.mubr.bf16.gmra.mxu0 %v1008
        %v1112 = vpop.f32.mrf.mxu0
        %v1113 = vadd.f32 %v821, %v1112
        %v1114 = vpop.f32.mrf.mxu0
        %v1115 = vpop.f32.mrf.mxu0
        %v1116 = vadd.f32 %v824, %v1115
        %v1117 = vpop.f32.mrf.mxu0
        %1118 = vmatprep.mubr.bf16.mxu0 0
        %1119 = vmatmul.mubr.bf16.gmra.mxu0 %v1011
        %v1120 = vpop.f32.mrf.mxu0
        %v1121 = vadd.f32 %v829, %v1120
        %v1122 = vpop.f32.mrf.mxu0
        %v1123 = vpop.f32.mrf.mxu0
        %v1124 = vadd.f32 %v832, %v1123
        %v1125 = vpop.f32.mrf.mxu0
        %1126 = vmatprep.mubr.bf16.mxu0 0
        %1127 = vmatmul.mubr.bf16.gmra.mxu0 %v1014
        %v1128 = vpop.f32.mrf.mxu0
        %v1129 = vadd.f32 %v837, %v1128
        %v1130 = vpop.f32.mrf.mxu0
        %v1131 = vpop.f32.mrf.mxu0
        %v1132 = vadd.f32 %v840, %v1131
        %v1133 = vpop.f32.mrf.mxu0
        %1134 = vmatprep.mubr.bf16.mxu0 0
        %1135 = vmatmul.mubr.bf16.gmra.mxu0 %v1017
        %v1136 = vpop.f32.mrf.mxu0
        %v1137 = vadd.f32 %v845, %v1136
        %v1138 = vpop.f32.mrf.mxu0
        %v1139 = vpop.f32.mrf.mxu0
        %v1140 = vadd.f32 %v848, %v1139
        %v1141 = vpop.f32.mrf.mxu0
        %1142 = vmatprep.mubr.bf16.mxu0 0
        %1143 = vmatmul.mubr.bf16.gmra.mxu0 %v1020
        %v1144 = vpop.f32.mrf.mxu0
        %v1145 = vadd.f32 %v853, %v1144
        %v1146 = vpop.f32.mrf.mxu0
        %v1147 = vpop.f32.mrf.mxu0
        %v1148 = vadd.f32 %v856, %v1147
        %v1149 = vpop.f32.mrf.mxu0
        %1150 = vmatprep.mubr.bf16.mxu0 0
        %1151 = vmatmul.mubr.bf16.gmra.mxu0 %v1023
        %v1152 = vpop.f32.mrf.mxu0
        %v1153 = vadd.f32 %v861, %v1152
        %v1154 = vpop.f32.mrf.mxu0
        %v1155 = vpop.f32.mrf.mxu0
        %v1156 = vadd.f32 %v864, %v1155
        %v1157 = vpop.f32.mrf.mxu0
        %1158 = vmatprep.mubr.bf16.mxu0 0
        %1159 = vmatmul.mubr.bf16.gmra.mxu0 %v1026
        %v1160 = vpop.f32.mrf.mxu0
        %v1161 = vadd.f32 %v869, %v1160
        %v1162 = vpop.f32.mrf.mxu0
        %v1163 = vpop.f32.mrf.mxu0
        %v1164 = vadd.f32 %v872, %v1163
        %v1165 = vpop.f32.mrf.mxu0
        %1166 = vmatprep.mubr.bf16.mxu0 0
        %1167 = vmatmul.mubr.bf16.gmra.mxu0 %v1029
        %v1168 = vpop.f32.mrf.mxu0
        %v1169 = vadd.f32 %v877, %v1168
        %v1170 = vpop.f32.mrf.mxu0
        %v1171 = vpop.f32.mrf.mxu0
        %v1172 = vadd.f32 %v880, %v1171
        %v1173 = vpop.f32.mrf.mxu0
        %1174 = vmatprep.mubr.bf16.mxu0 0
        %1175 = vmatmul.mubr.bf16.gmra.mxu0 %v1032
        %v1176 = vpop.f32.mrf.mxu0
        %v1177 = vadd.f32 %v885, %v1176
        %v1178 = vpop.f32.mrf.mxu0
        %v1179 = vpop.f32.mrf.mxu0
        %v1180 = vadd.f32 %v888, %v1179
        %v1181 = vpop.f32.mrf.mxu0
        %1182 = vmatprep.mubr.bf16.mxu0 0
        %1183 = vmatmul.mubr.bf16.gmra.mxu0 %v1035
        %v1184 = vpop.f32.mrf.mxu0
        %v1185 = vadd.f32 %v893, %v1184
        %v1186 = vpop.f32.mrf.mxu0
        %v1187 = vpop.f32.mrf.mxu0
        %v1188 = vadd.f32 %v896, %v1187
        %v1189 = vpop.f32.mrf.mxu0
        %1190 = vmatprep.mubr.bf16.mxu0 0
        %1191 = vmatmul.mubr.bf16.gmra.mxu0 %v1038
        %v1192 = vpop.f32.mrf.mxu0
        %v1193 = vadd.f32 %v901, %v1192
        %v1194 = vpop.f32.mrf.mxu0
        %v1195 = vpop.f32.mrf.mxu0
        %v1196 = vadd.f32 %v904, %v1195
        %v1197 = vpop.f32.mrf.mxu0
        %1198 = vmatprep.mubr.bf16.mxu0 0
        %1199 = vmatmul.mubr.bf16.gmra.mxu0 %v1041
        %v1200 = vpop.f32.mrf.mxu0
        %v1201 = vadd.f32 %v909, %v1200
        %v1202 = vpop.f32.mrf.mxu0
        %v1203 = vpop.f32.mrf.mxu0
        %v1204 = vadd.f32 %v912, %v1203
        %v1205 = vpop.f32.mrf.mxu0
        %1206 = vdwg.mxu0
        %v1207 = vld [vmem:[%s206] sm:$0xe]
        %v1208 = vld [vmem:[%s206 + $0xc] sm:$0xe]
        %v1209 = vld [vmem:[%s206 + $0x18] sm:$0xe]
        %v1210 = vld [vmem:[%s206 + $0x24] sm:$0xe]
        %v1211 = vld [vmem:[%s206 + $0x30] sm:$0xe]
        %v1212 = vld [vmem:[%s206 + $0x3c] sm:$0xe]
        %v1213 = vld [vmem:[%s206 + $0x48] sm:$0xe]
        %v1214 = vld [vmem:[%s206 + $0x54] sm:$0xe]
        %v1215 = vld [vmem:[%s206 + $0x60] sm:$0xe]
        %v1216 = vld [vmem:[%s206 + $0x6c] sm:$0xe]
        %v1217 = vld [vmem:[%s206 + $0x78] sm:$0xe]
        %v1218 = vld [vmem:[%s206 + $0x84] sm:$0xe]
        %v1219 = vld [vmem:[%s206 + $0x90] sm:$0xe]
        %v1220 = vld [vmem:[%s206 + $0x9c] sm:$0xe]
        %v1221 = vld [vmem:[%s206 + $0xa8] sm:$0xe]
        %v1222 = vld [vmem:[%s206 + $0xb4] sm:$0xe]
        %vm1255 = vcmask 1042432
        %vm1256 = vcmask 1046532
        %vm1257 = vmor %vm1255, %vm1256
        %v1258 = vrot.slane %v1207, 5
        %v1259 = vrot.slane %v1258, 4
        %v1260 = vrot.slane %v216, 5
        %v1261 = vsel %vm1257, %v1259, %v1260
        %v1262 = vrot.slane %v1260, 4
        %v1263 = vrot.slane %v248, 5
        %v1264 = vsel %vm1257, %v1262, %v1263
        %v1265 = vrot.slane %v1208, 5
        %v1266 = vrot.slane %v1265, 4
        %v1267 = vrot.slane %v218, 5
        %v1268 = vsel %vm1257, %v1266, %v1267
        %v1269 = vrot.slane %v1267, 4
        %v1270 = vrot.slane %v249, 5
        %v1271 = vsel %vm1257, %v1269, %v1270
        %v1272 = vrot.slane %v1209, 5
        %v1273 = vrot.slane %v1272, 4
        %v1274 = vrot.slane %v220, 5
        %v1275 = vsel %vm1257, %v1273, %v1274
        %v1276 = vrot.slane %v1274, 4
        %v1277 = vrot.slane %v250, 5
        %v1278 = vsel %vm1257, %v1276, %v1277
        %v1279 = vrot.slane %v1210, 5
        %v1280 = vrot.slane %v1279, 4
        %v1281 = vrot.slane %v222, 5
        %v1282 = vsel %vm1257, %v1280, %v1281
        %v1283 = vrot.slane %v1281, 4
        %v1284 = vrot.slane %v251, 5
        %v1285 = vsel %vm1257, %v1283, %v1284
        %v1286 = vrot.slane %v1211, 5
        %v1287 = vrot.slane %v1286, 4
        %v1288 = vrot.slane %v224, 5
        %v1289 = vsel %vm1257, %v1287, %v1288
        %v1290 = vrot.slane %v1288, 4
        %v1291 = vrot.slane %v252, 5
        %v1292 = vsel %vm1257, %v1290, %v1291
        %v1293 = vrot.slane %v1212, 5
        %v1294 = vrot.slane %v1293, 4
        %v1295 = vrot.slane %v226, 5
        %v1296 = vsel %vm1257, %v1294, %v1295
        %v1297 = vrot.slane %v1295, 4
        %v1298 = vrot.slane %v253, 5
        %v1299 = vsel %vm1257, %v1297, %v1298
        %v1300 = vrot.slane %v1213, 5
        %v1301 = vrot.slane %v1300, 4
        %v1302 = vrot.slane %v228, 5
        %v1303 = vsel %vm1257, %v1301, %v1302
        %v1304 = vrot.slane %v1302, 4
        %v1305 = vrot.slane %v254, 5
        %v1306 = vsel %vm1257, %v1304, %v1305
        %v1307 = vrot.slane %v1214, 5
        %v1308 = vrot.slane %v1307, 4
        %v1309 = vrot.slane %v230, 5
        %v1310 = vsel %vm1257, %v1308, %v1309
        %v1311 = vrot.slane %v1309, 4
        %v1312 = vrot.slane %v255, 5
        %v1313 = vsel %vm1257, %v1311, %v1312
        %v1314 = vrot.slane %v1215, 5
        %v1315 = vrot.slane %v1314, 4
        %v1316 = vrot.slane %v232, 5
        %v1317 = vsel %vm1257, %v1315, %v1316
        %v1318 = vrot.slane %v1316, 4
        %v1319 = vrot.slane %v256, 5
        %v1320 = vsel %vm1257, %v1318, %v1319
        %v1321 = vrot.slane %v1216, 5
        %v1322 = vrot.slane %v1321, 4
        %v1323 = vrot.slane %v234, 5
        %v1324 = vsel %vm1257, %v1322, %v1323
        %v1325 = vrot.slane %v1323, 4
        %v1326 = vrot.slane %v257, 5
        %v1327 = vsel %vm1257, %v1325, %v1326
        %v1328 = vrot.slane %v1217, 5
        %v1329 = vrot.slane %v1328, 4
        %v1330 = vrot.slane %v236, 5
        %v1331 = vsel %vm1257, %v1329, %v1330
        %v1332 = vrot.slane %v1330, 4
        %v1333 = vrot.slane %v258, 5
        %v1334 = vsel %vm1257, %v1332, %v1333
        %v1335 = vrot.slane %v1218, 5
        %v1336 = vrot.slane %v1335, 4
        %v1337 = vrot.slane %v238, 5
        %v1338 = vsel %vm1257, %v1336, %v1337
        %v1339 = vrot.slane %v1337, 4
        %v1340 = vrot.slane %v259, 5
        %v1341 = vsel %vm1257, %v1339, %v1340
        %v1342 = vrot.slane %v1219, 5
        %v1343 = vrot.slane %v1342, 4
        %v1344 = vrot.slane %v240, 5
        %v1345 = vsel %vm1257, %v1343, %v1344
        %v1346 = vrot.slane %v1344, 4
        %v1347 = vrot.slane %v260, 5
        %v1348 = vsel %vm1257, %v1346, %v1347
        %v1349 = vrot.slane %v1220, 5
        %v1350 = vrot.slane %v1349, 4
        %v1351 = vrot.slane %v242, 5
        %v1352 = vsel %vm1257, %v1350, %v1351
        %v1353 = vrot.slane %v1351, 4
        %v1354 = vrot.slane %v261, 5
        %v1355 = vsel %vm1257, %v1353, %v1354
        %v1356 = vrot.slane %v1221, 5
        %v1357 = vrot.slane %v1356, 4
        %v1358 = vrot.slane %v244, 5
        %v1359 = vsel %vm1257, %v1357, %v1358
        %v1360 = vrot.slane %v1358, 4
        %v1361 = vrot.slane %v262, 5
        %v1362 = vsel %vm1257, %v1360, %v1361
        %v1363 = vrot.slane %v1222, 5
        %v1364 = vrot.slane %v1363, 4
        %v1365 = vrot.slane %v246, 5
        %v1366 = vsel %vm1257, %v1364, %v1365
        %v1367 = vrot.slane %v1365, 4
        %v1368 = vrot.slane %v263, 5
        %v1369 = vsel %vm1257, %v1367, %v1368
        %s1370 = scalar_lea.vmem %s210, 4
        %v1371 = vld [vmem:[%s1370] sm:$0x3]
        %v1372 = vunpack.c.l.b16 %v1261
        %v1373 = vunpack.c.l.b16 %v1264
        %v1374 = vunpack.c.l.b16 %v1268
        %v1375 = vunpack.c.l.b16 %v1271
        %v1376 = vunpack.c.l.b16 %v1275
        %v1377 = vunpack.c.l.b16 %v1278
        %v1378 = vunpack.c.l.b16 %v1282
        %v1379 = vunpack.c.l.b16 %v1285
        %v1380 = vunpack.c.l.b16 %v1289
        %v1381 = vunpack.c.l.b16 %v1292
        %v1382 = vunpack.c.l.b16 %v1296
        %v1383 = vunpack.c.l.b16 %v1299
        %v1384 = vunpack.c.l.b16 %v1303
        %v1385 = vunpack.c.l.b16 %v1306
        %v1386 = vunpack.c.l.b16 %v1310
        %v1387 = vunpack.c.l.b16 %v1313
        %v1388 = vunpack.c.l.b16 %v1317
        %v1389 = vunpack.c.l.b16 %v1320
        %v1390 = vunpack.c.l.b16 %v1324
        %v1391 = vunpack.c.l.b16 %v1327
        %v1392 = vunpack.c.l.b16 %v1331
        %v1393 = vunpack.c.l.b16 %v1334
        %v1394 = vunpack.c.l.b16 %v1338
        %v1395 = vunpack.c.l.b16 %v1341
        %v1396 = vunpack.c.l.b16 %v1345
        %v1397 = vunpack.c.l.b16 %v1348
        %v1398 = vunpack.c.l.b16 %v1352
        %v1399 = vunpack.c.l.b16 %v1355
        %v1400 = vunpack.c.l.b16 %v1359
        %v1401 = vunpack.c.l.b16 %v1362
        %v1402 = vunpack.c.l.b16 %v1366
        %v1403 = vunpack.c.l.b16 %v1369
        %v1404 = vpack.c.b16 %v1373, %v1372
        %v1405 = vpack.c.b16 %v1375, %v1374
        %v1406 = vpack.c.b16 %v1377, %v1376
        %v1407 = vpack.c.b16 %v1379, %v1378
        %v1408 = vpack.c.b16 %v1381, %v1380
        %v1409 = vpack.c.b16 %v1383, %v1382
        %v1410 = vpack.c.b16 %v1385, %v1384
        %v1411 = vpack.c.b16 %v1387, %v1386
        %v1412 = vpack.c.b16 %v1389, %v1388
        %v1413 = vpack.c.b16 %v1391, %v1390
        %v1414 = vpack.c.b16 %v1393, %v1392
        %v1415 = vpack.c.b16 %v1395, %v1394
        %v1416 = vpack.c.b16 %v1397, %v1396
        %v1417 = vpack.c.b16 %v1399, %v1398
        %v1418 = vpack.c.b16 %v1401, %v1400
        %v1419 = vpack.c.b16 %v1403, %v1402
        %v1421 = vsel %vm701, %v1404, 0
        %v1424 = vsel %vm701, %v1405, 0
        %v1427 = vsel %vm701, %v1406, 0
        %v1430 = vsel %vm701, %v1407, 0
        %v1433 = vsel %vm701, %v1408, 0
        %v1436 = vsel %vm701, %v1409, 0
        %v1439 = vsel %vm701, %v1410, 0
        %v1442 = vsel %vm701, %v1411, 0
        %v1445 = vsel %vm701, %v1412, 0
        %v1448 = vsel %vm701, %v1413, 0
        %v1451 = vsel %vm701, %v1414, 0
        %v1454 = vsel %vm701, %v1415, 0
        %v1457 = vsel %vm701, %v1416, 0
        %v1460 = vsel %vm701, %v1417, 0
        %v1463 = vsel %vm701, %v1418, 0
        %v1466 = vsel %vm701, %v1419, 0
        %v1469 = vsel %vm750, %v1371, 0
        %1471 = vmatprep.subr.bf16.mxu0 0
        %1472 = vmatpush1.bf16.msra.mxu0 0
        %1473 = vmatprep.subr.bf16.mxu0 0
        %1474 = vmatpush1.bf16.msra.mxu0 0
        %1475 = vmatprep.subr.bf16.mxu0 0
        %1476 = vmatpush1.bf16.msra.mxu0 0
        %1477 = vmatprep.subr.bf16.mxu0 0
        %1478 = vmatpush1.bf16.msra.mxu0 0
        %1479 = vmatprep.subr.bf16.mxu0 0
        %1480 = vmatpush1.bf16.msra.mxu0 0
        %1481 = vmatprep.subr.bf16.mxu0 0
        %1482 = vmatpush1.bf16.msra.mxu0 0
        %1483 = vmatprep.subr.bf16.mxu0 0
        %1484 = vmatpush1.bf16.msra.mxu0 0
        %1485 = vmatprep.subr.bf16.mxu0 0
        %1486 = vmatpush1.bf16.msra.mxu0 %v1469
        %1487 = vmatprep.subr.bf16.mxu0 0
        %1488 = vmatpush2.bf16.msra.mxu0 0
        %1489 = vmatprep.subr.bf16.mxu0 0
        %1490 = vmatpush2.bf16.msra.mxu0 0
        %1491 = vmatprep.subr.bf16.mxu0 0
        %1492 = vmatpush2.bf16.msra.mxu0 0
        %1493 = vmatprep.subr.bf16.mxu0 0
        %1494 = vmatpush2.bf16.msra.mxu0 0
        %1495 = vmatprep.subr.bf16.mxu0 0
        %1496 = vmatpush2.bf16.msra.mxu0 0
        %1497 = vmatprep.subr.bf16.mxu0 0
        %1498 = vmatpush2.bf16.msra.mxu0 0
        %1499 = vmatprep.subr.bf16.mxu0 0
        %1500 = vmatpush2.bf16.msra.mxu0 0
        %1501 = vmatprep.subr.bf16.mxu0 0
        %1502 = vmatpush2.bf16.msra.mxu0 0
        %1503 = vmatprep.mubr.bf16.mxu0 0
        %1504 = vmatmul.mubr.bf16.gmra.mxu0 %v1421
        %v1505 = vpop.f32.mrf.mxu0
        %v1506 = vadd.f32 0.0, %v1505
        %v1507 = vpop.f32.mrf.mxu0
        %v1508 = vpop.f32.mrf.mxu0
        %v1509 = vadd.f32 0.0, %v1508
        %v1510 = vpop.f32.mrf.mxu0
        %1511 = vmatprep.mubr.bf16.mxu0 0
        %1512 = vmatmul.mubr.bf16.gmra.mxu0 %v1424
        %v1513 = vpop.f32.mrf.mxu0
        %v1514 = vadd.f32 0.0, %v1513
        %v1515 = vpop.f32.mrf.mxu0
        %v1516 = vpop.f32.mrf.mxu0
        %v1517 = vadd.f32 0.0, %v1516
        %v1518 = vpop.f32.mrf.mxu0
        %1519 = vmatprep.mubr.bf16.mxu0 0
        %1520 = vmatmul.mubr.bf16.gmra.mxu0 %v1427
        %v1521 = vpop.f32.mrf.mxu0
        %v1522 = vadd.f32 0.0, %v1521
        %v1523 = vpop.f32.mrf.mxu0
        %v1524 = vpop.f32.mrf.mxu0
        %v1525 = vadd.f32 0.0, %v1524
        %v1526 = vpop.f32.mrf.mxu0
        %1527 = vmatprep.mubr.bf16.mxu0 0
        %1528 = vmatmul.mubr.bf16.gmra.mxu0 %v1430
        %v1529 = vpop.f32.mrf.mxu0
        %v1530 = vadd.f32 0.0, %v1529
        %v1531 = vpop.f32.mrf.mxu0
        %v1532 = vpop.f32.mrf.mxu0
        %v1533 = vadd.f32 0.0, %v1532
        %v1534 = vpop.f32.mrf.mxu0
        %1535 = vmatprep.mubr.bf16.mxu0 0
        %1536 = vmatmul.mubr.bf16.gmra.mxu0 %v1433
        %v1537 = vpop.f32.mrf.mxu0
        %v1538 = vadd.f32 0.0, %v1537
        %v1539 = vpop.f32.mrf.mxu0
        %v1540 = vpop.f32.mrf.mxu0
        %v1541 = vadd.f32 0.0, %v1540
        %v1542 = vpop.f32.mrf.mxu0
        %1543 = vmatprep.mubr.bf16.mxu0 0
        %1544 = vmatmul.mubr.bf16.gmra.mxu0 %v1436
        %v1545 = vpop.f32.mrf.mxu0
        %v1546 = vadd.f32 0.0, %v1545
        %v1547 = vpop.f32.mrf.mxu0
        %v1548 = vpop.f32.mrf.mxu0
        %v1549 = vadd.f32 0.0, %v1548
        %v1550 = vpop.f32.mrf.mxu0
        %1551 = vmatprep.mubr.bf16.mxu0 0
        %1552 = vmatmul.mubr.bf16.gmra.mxu0 %v1439
        %v1553 = vpop.f32.mrf.mxu0
        %v1554 = vadd.f32 0.0, %v1553
        %v1555 = vpop.f32.mrf.mxu0
        %v1556 = vpop.f32.mrf.mxu0
        %v1557 = vadd.f32 0.0, %v1556
        %v1558 = vpop.f32.mrf.mxu0
        %1559 = vmatprep.mubr.bf16.mxu0 0
        %1560 = vmatmul.mubr.bf16.gmra.mxu0 %v1442
        %v1561 = vpop.f32.mrf.mxu0
        %v1562 = vadd.f32 0.0, %v1561
        %v1563 = vpop.f32.mrf.mxu0
        %v1564 = vpop.f32.mrf.mxu0
        %v1565 = vadd.f32 0.0, %v1564
        %v1566 = vpop.f32.mrf.mxu0
        %1567 = vmatprep.mubr.bf16.mxu0 0
        %1568 = vmatmul.mubr.bf16.gmra.mxu0 %v1445
        %v1569 = vpop.f32.mrf.mxu0
        %v1570 = vadd.f32 0.0, %v1569
        %v1571 = vpop.f32.mrf.mxu0
        %v1572 = vpop.f32.mrf.mxu0
        %v1573 = vadd.f32 0.0, %v1572
        %v1574 = vpop.f32.mrf.mxu0
        %1575 = vmatprep.mubr.bf16.mxu0 0
        %1576 = vmatmul.mubr.bf16.gmra.mxu0 %v1448
        %v1577 = vpop.f32.mrf.mxu0
        %v1578 = vadd.f32 0.0, %v1577
        %v1579 = vpop.f32.mrf.mxu0
        %v1580 = vpop.f32.mrf.mxu0
        %v1581 = vadd.f32 0.0, %v1580
        %v1582 = vpop.f32.mrf.mxu0
        %1583 = vmatprep.mubr.bf16.mxu0 0
        %1584 = vmatmul.mubr.bf16.gmra.mxu0 %v1451
        %v1585 = vpop.f32.mrf.mxu0
        %v1586 = vadd.f32 0.0, %v1585
        %v1587 = vpop.f32.mrf.mxu0
        %v1588 = vpop.f32.mrf.mxu0
        %v1589 = vadd.f32 0.0, %v1588
        %v1590 = vpop.f32.mrf.mxu0
        %1591 = vmatprep.mubr.bf16.mxu0 0
        %1592 = vmatmul.mubr.bf16.gmra.mxu0 %v1454
        %v1593 = vpop.f32.mrf.mxu0
        %v1594 = vadd.f32 0.0, %v1593
        %v1595 = vpop.f32.mrf.mxu0
        %v1596 = vpop.f32.mrf.mxu0
        %v1597 = vadd.f32 0.0, %v1596
        %v1598 = vpop.f32.mrf.mxu0
        %1599 = vmatprep.mubr.bf16.mxu0 0
        %1600 = vmatmul.mubr.bf16.gmra.mxu0 %v1457
        %v1601 = vpop.f32.mrf.mxu0
        %v1602 = vadd.f32 0.0, %v1601
        %v1603 = vpop.f32.mrf.mxu0
        %v1604 = vpop.f32.mrf.mxu0
        %v1605 = vadd.f32 0.0, %v1604
        %v1606 = vpop.f32.mrf.mxu0
        %1607 = vmatprep.mubr.bf16.mxu0 0
        %1608 = vmatmul.mubr.bf16.gmra.mxu0 %v1460
        %v1609 = vpop.f32.mrf.mxu0
        %v1610 = vadd.f32 0.0, %v1609
        %v1611 = vpop.f32.mrf.mxu0
        %v1612 = vpop.f32.mrf.mxu0
        %v1613 = vadd.f32 0.0, %v1612
        %v1614 = vpop.f32.mrf.mxu0
        %1615 = vmatprep.mubr.bf16.mxu0 0
        %1616 = vmatmul.mubr.bf16.gmra.mxu0 %v1463
        %v1617 = vpop.f32.mrf.mxu0
        %v1618 = vadd.f32 0.0, %v1617
        %v1619 = vpop.f32.mrf.mxu0
        %v1620 = vpop.f32.mrf.mxu0
        %v1621 = vadd.f32 0.0, %v1620
        %v1622 = vpop.f32.mrf.mxu0
        %1623 = vmatprep.mubr.bf16.mxu0 0
        %1624 = vmatmul.mubr.bf16.gmra.mxu0 %v1466
        %v1625 = vpop.f32.mrf.mxu0
        %v1626 = vadd.f32 0.0, %v1625
        %v1627 = vpop.f32.mrf.mxu0
        %v1628 = vpop.f32.mrf.mxu0
        %v1629 = vadd.f32 0.0, %v1628
        %v1630 = vpop.f32.mrf.mxu0
        %1631 = vdwg.mxu0
        %v1632 = vadd.f32 %v1081, %v1506
        %v1633 = vadd.f32 %v1084, %v1509
        %v1634 = vadd.f32 %v1089, %v1514
        %v1635 = vadd.f32 %v1092, %v1517
        %v1636 = vadd.f32 %v1097, %v1522
        %v1637 = vadd.f32 %v1100, %v1525
        %v1638 = vadd.f32 %v1105, %v1530
        %v1639 = vadd.f32 %v1108, %v1533
        %v1640 = vadd.f32 %v1113, %v1538
        %v1641 = vadd.f32 %v1116, %v1541
        %v1642 = vadd.f32 %v1121, %v1546
        %v1643 = vadd.f32 %v1124, %v1549
        %v1644 = vadd.f32 %v1129, %v1554
        %v1645 = vadd.f32 %v1132, %v1557
        %v1646 = vadd.f32 %v1137, %v1562
        %v1647 = vadd.f32 %v1140, %v1565
        %v1648 = vadd.f32 %v1145, %v1570
        %v1649 = vadd.f32 %v1148, %v1573
        %v1650 = vadd.f32 %v1153, %v1578
        %v1651 = vadd.f32 %v1156, %v1581
        %v1652 = vadd.f32 %v1161, %v1586
        %v1653 = vadd.f32 %v1164, %v1589
        %v1654 = vadd.f32 %v1169, %v1594
        %v1655 = vadd.f32 %v1172, %v1597
        %v1656 = vadd.f32 %v1177, %v1602
        %v1657 = vadd.f32 %v1180, %v1605
        %v1658 = vadd.f32 %v1185, %v1610
        %v1659 = vadd.f32 %v1188, %v1613
        %v1660 = vadd.f32 %v1193, %v1618
        %v1661 = vadd.f32 %v1196, %v1621
        %v1662 = vadd.f32 %v1201, %v1626
        %v1663 = vadd.f32 %v1204, %v1629
        %s1664 = scalar_lea.vmem %s206, 12
        %v1665 = vld [vmem:[%s1664] sm:$0xf]
        %v1666 = vld [vmem:[%s1664 + $0x4] sm:$0xf]
        %v1667 = vld [vmem:[%s1664 + $0xc] sm:$0xf]
        %v1668 = vld [vmem:[%s1664 + $0x10] sm:$0xf]
        %v1669 = vld [vmem:[%s1664 + $0x18] sm:$0xf]
        %v1670 = vld [vmem:[%s1664 + $0x1c] sm:$0xf]
        %v1671 = vld [vmem:[%s1664 + $0x24] sm:$0xf]
        %v1672 = vld [vmem:[%s1664 + $0x28] sm:$0xf]
        %v1673 = vld [vmem:[%s1664 + $0x30] sm:$0xf]
        %v1674 = vld [vmem:[%s1664 + $0x34] sm:$0xf]
        %v1675 = vld [vmem:[%s1664 + $0x3c] sm:$0xf]
        %v1676 = vld [vmem:[%s1664 + $0x40] sm:$0xf]
        %v1677 = vld [vmem:[%s1664 + $0x48] sm:$0xf]
        %v1678 = vld [vmem:[%s1664 + $0x4c] sm:$0xf]
        %v1679 = vld [vmem:[%s1664 + $0x54] sm:$0xf]
        %v1680 = vld [vmem:[%s1664 + $0x58] sm:$0xf]
        %v1681 = vld [vmem:[%s1664 + $0x60] sm:$0xf]
        %v1682 = vld [vmem:[%s1664 + $0x64] sm:$0xf]
        %v1683 = vld [vmem:[%s1664 + $0x6c] sm:$0xf]
        %v1684 = vld [vmem:[%s1664 + $0x70] sm:$0xf]
        %v1685 = vld [vmem:[%s1664 + $0x78] sm:$0xf]
        %v1686 = vld [vmem:[%s1664 + $0x7c] sm:$0xf]
        %v1687 = vld [vmem:[%s1664 + $0x84] sm:$0xf]
        %v1688 = vld [vmem:[%s1664 + $0x88] sm:$0xf]
        %v1689 = vld [vmem:[%s1664 + $0x90] sm:$0xf]
        %v1690 = vld [vmem:[%s1664 + $0x94] sm:$0xf]
        %v1691 = vld [vmem:[%s1664 + $0x9c] sm:$0xf]
        %v1692 = vld [vmem:[%s1664 + $0xa0] sm:$0xf]
        %v1693 = vld [vmem:[%s1664 + $0xa8] sm:$0xf]
        %v1694 = vld [vmem:[%s1664 + $0xac] sm:$0xf]
        %v1695 = vld [vmem:[%s1664 + $0xb4] sm:$0xf]
        %v1696 = vld [vmem:[%s1664 + $0xb8] sm:$0xf]
        %s1697 = scalar_lea.vmem %s210, 6
        %v1698 = vld [vmem:[%s1697] sm:$0x3]
        %v1731 = vunpack.c.l.b16 %v1665
        %v1732 = vunpack.c.l.b16 %v1666
        %v1733 = vunpack.c.l.b16 %v1667
        %v1734 = vunpack.c.l.b16 %v1668
        %v1735 = vunpack.c.l.b16 %v1669
        %v1736 = vunpack.c.l.b16 %v1670
        %v1737 = vunpack.c.l.b16 %v1671
        %v1738 = vunpack.c.l.b16 %v1672
        %v1739 = vunpack.c.l.b16 %v1673
        %v1740 = vunpack.c.l.b16 %v1674
        %v1741 = vunpack.c.l.b16 %v1675
        %v1742 = vunpack.c.l.b16 %v1676
        %v1743 = vunpack.c.l.b16 %v1677
        %v1744 = vunpack.c.l.b16 %v1678
        %v1745 = vunpack.c.l.b16 %v1679
        %v1746 = vunpack.c.l.b16 %v1680
        %v1747 = vunpack.c.l.b16 %v1681
        %v1748 = vunpack.c.l.b16 %v1682
        %v1749 = vunpack.c.l.b16 %v1683
        %v1750 = vunpack.c.l.b16 %v1684
        %v1751 = vunpack.c.l.b16 %v1685
        %v1752 = vunpack.c.l.b16 %v1686
        %v1753 = vunpack.c.l.b16 %v1687
        %v1754 = vunpack.c.l.b16 %v1688
        %v1755 = vunpack.c.l.b16 %v1689
        %v1756 = vunpack.c.l.b16 %v1690
        %v1757 = vunpack.c.l.b16 %v1691
        %v1758 = vunpack.c.l.b16 %v1692
        %v1759 = vunpack.c.l.b16 %v1693
        %v1760 = vunpack.c.l.b16 %v1694
        %v1761 = vunpack.c.l.b16 %v1695
        %v1762 = vunpack.c.l.b16 %v1696
        %v1763 = vpack.c.b16 %v1732, %v1731
        %v1764 = vpack.c.b16 %v1734, %v1733
        %v1765 = vpack.c.b16 %v1736, %v1735
        %v1766 = vpack.c.b16 %v1738, %v1737
        %v1767 = vpack.c.b16 %v1740, %v1739
        %v1768 = vpack.c.b16 %v1742, %v1741
        %v1769 = vpack.c.b16 %v1744, %v1743
        %v1770 = vpack.c.b16 %v1746, %v1745
        %v1771 = vpack.c.b16 %v1748, %v1747
        %v1772 = vpack.c.b16 %v1750, %v1749
        %v1773 = vpack.c.b16 %v1752, %v1751
        %v1774 = vpack.c.b16 %v1754, %v1753
        %v1775 = vpack.c.b16 %v1756, %v1755
        %v1776 = vpack.c.b16 %v1758, %v1757
        %v1777 = vpack.c.b16 %v1760, %v1759
        %v1778 = vpack.c.b16 %v1762, %v1761
        %v1780 = vsel %vm701, %v1763, 0
        %v1783 = vsel %vm701, %v1764, 0
        %v1786 = vsel %vm701, %v1765, 0
        %v1789 = vsel %vm701, %v1766, 0
        %v1792 = vsel %vm701, %v1767, 0
        %v1795 = vsel %vm701, %v1768, 0
        %v1798 = vsel %vm701, %v1769, 0
        %v1801 = vsel %vm701, %v1770, 0
        %v1804 = vsel %vm701, %v1771, 0
        %v1807 = vsel %vm701, %v1772, 0
        %v1810 = vsel %vm701, %v1773, 0
        %v1813 = vsel %vm701, %v1774, 0
        %v1816 = vsel %vm701, %v1775, 0
        %v1819 = vsel %vm701, %v1776, 0
        %v1822 = vsel %vm701, %v1777, 0
        %v1825 = vsel %vm701, %v1778, 0
        %v1828 = vsel %vm750, %v1698, 0
        %1830 = vmatprep.subr.bf16.mxu0 0
        %1831 = vmatpush1.bf16.msra.mxu0 0
        %1832 = vmatprep.subr.bf16.mxu0 0
        %1833 = vmatpush1.bf16.msra.mxu0 0
        %1834 = vmatprep.subr.bf16.mxu0 0
        %1835 = vmatpush1.bf16.msra.mxu0 0
        %1836 = vmatprep.subr.bf16.mxu0 0
        %1837 = vmatpush1.bf16.msra.mxu0 0
        %1838 = vmatprep.subr.bf16.mxu0 0
        %1839 = vmatpush1.bf16.msra.mxu0 0
        %1840 = vmatprep.subr.bf16.mxu0 0
        %1841 = vmatpush1.bf16.msra.mxu0 0
        %1842 = vmatprep.subr.bf16.mxu0 0
        %1843 = vmatpush1.bf16.msra.mxu0 0
        %1844 = vmatprep.subr.bf16.mxu0 0
        %1845 = vmatpush1.bf16.msra.mxu0 %v1828
        %1846 = vmatprep.subr.bf16.mxu0 0
        %1847 = vmatpush2.bf16.msra.mxu0 0
        %1848 = vmatprep.subr.bf16.mxu0 0
        %1849 = vmatpush2.bf16.msra.mxu0 0
        %1850 = vmatprep.subr.bf16.mxu0 0
        %1851 = vmatpush2.bf16.msra.mxu0 0
        %1852 = vmatprep.subr.bf16.mxu0 0
        %1853 = vmatpush2.bf16.msra.mxu0 0
        %1854 = vmatprep.subr.bf16.mxu0 0
        %1855 = vmatpush2.bf16.msra.mxu0 0
        %1856 = vmatprep.subr.bf16.mxu0 0
        %1857 = vmatpush2.bf16.msra.mxu0 0
        %1858 = vmatprep.subr.bf16.mxu0 0
        %1859 = vmatpush2.bf16.msra.mxu0 0
        %1860 = vmatprep.subr.bf16.mxu0 0
        %1861 = vmatpush2.bf16.msra.mxu0 0
        %1862 = vmatprep.mubr.bf16.mxu0 0
        %1863 = vmatmul.mubr.bf16.gmra.mxu0 %v1780
        %v1864 = vpop.f32.mrf.mxu0
        %v1865 = vadd.f32 0.0, %v1864
        %v1866 = vpop.f32.mrf.mxu0
        %v1867 = vpop.f32.mrf.mxu0
        %v1868 = vadd.f32 0.0, %v1867
        %v1869 = vpop.f32.mrf.mxu0
        %1870 = vmatprep.mubr.bf16.mxu0 0
        %1871 = vmatmul.mubr.bf16.gmra.mxu0 %v1783
        %v1872 = vpop.f32.mrf.mxu0
        %v1873 = vadd.f32 0.0, %v1872
        %v1874 = vpop.f32.mrf.mxu0
        %v1875 = vpop.f32.mrf.mxu0
        %v1876 = vadd.f32 0.0, %v1875
        %v1877 = vpop.f32.mrf.mxu0
        %1878 = vmatprep.mubr.bf16.mxu0 0
        %1879 = vmatmul.mubr.bf16.gmra.mxu0 %v1786
        %v1880 = vpop.f32.mrf.mxu0
        %v1881 = vadd.f32 0.0, %v1880
        %v1882 = vpop.f32.mrf.mxu0
        %v1883 = vpop.f32.mrf.mxu0
        %v1884 = vadd.f32 0.0, %v1883
        %v1885 = vpop.f32.mrf.mxu0
        %1886 = vmatprep.mubr.bf16.mxu0 0
        %1887 = vmatmul.mubr.bf16.gmra.mxu0 %v1789
        %v1888 = vpop.f32.mrf.mxu0
        %v1889 = vadd.f32 0.0, %v1888
        %v1890 = vpop.f32.mrf.mxu0
        %v1891 = vpop.f32.mrf.mxu0
        %v1892 = vadd.f32 0.0, %v1891
        %v1893 = vpop.f32.mrf.mxu0
        %1894 = vmatprep.mubr.bf16.mxu0 0
        %1895 = vmatmul.mubr.bf16.gmra.mxu0 %v1792
        %v1896 = vpop.f32.mrf.mxu0
        %v1897 = vadd.f32 0.0, %v1896
        %v1898 = vpop.f32.mrf.mxu0
        %v1899 = vpop.f32.mrf.mxu0
        %v1900 = vadd.f32 0.0, %v1899
        %v1901 = vpop.f32.mrf.mxu0
        %1902 = vmatprep.mubr.bf16.mxu0 0
        %1903 = vmatmul.mubr.bf16.gmra.mxu0 %v1795
        %v1904 = vpop.f32.mrf.mxu0
        %v1905 = vadd.f32 0.0, %v1904
        %v1906 = vpop.f32.mrf.mxu0
        %v1907 = vpop.f32.mrf.mxu0
        %v1908 = vadd.f32 0.0, %v1907
        %v1909 = vpop.f32.mrf.mxu0
        %1910 = vmatprep.mubr.bf16.mxu0 0
        %1911 = vmatmul.mubr.bf16.gmra.mxu0 %v1798
        %v1912 = vpop.f32.mrf.mxu0
        %v1913 = vadd.f32 0.0, %v1912
        %v1914 = vpop.f32.mrf.mxu0
        %v1915 = vpop.f32.mrf.mxu0
        %v1916 = vadd.f32 0.0, %v1915
        %v1917 = vpop.f32.mrf.mxu0
        %1918 = vmatprep.mubr.bf16.mxu0 0
        %1919 = vmatmul.mubr.bf16.gmra.mxu0 %v1801
        %v1920 = vpop.f32.mrf.mxu0
        %v1921 = vadd.f32 0.0, %v1920
        %v1922 = vpop.f32.mrf.mxu0
        %v1923 = vpop.f32.mrf.mxu0
        %v1924 = vadd.f32 0.0, %v1923
        %v1925 = vpop.f32.mrf.mxu0
        %1926 = vmatprep.mubr.bf16.mxu0 0
        %1927 = vmatmul.mubr.bf16.gmra.mxu0 %v1804
        %v1928 = vpop.f32.mrf.mxu0
        %v1929 = vadd.f32 0.0, %v1928
        %v1930 = vpop.f32.mrf.mxu0
        %v1931 = vpop.f32.mrf.mxu0
        %v1932 = vadd.f32 0.0, %v1931
        %v1933 = vpop.f32.mrf.mxu0
        %1934 = vmatprep.mubr.bf16.mxu0 0
        %1935 = vmatmul.mubr.bf16.gmra.mxu0 %v1807
        %v1936 = vpop.f32.mrf.mxu0
        %v1937 = vadd.f32 0.0, %v1936
        %v1938 = vpop.f32.mrf.mxu0
        %v1939 = vpop.f32.mrf.mxu0
        %v1940 = vadd.f32 0.0, %v1939
        %v1941 = vpop.f32.mrf.mxu0
        %1942 = vmatprep.mubr.bf16.mxu0 0
        %1943 = vmatmul.mubr.bf16.gmra.mxu0 %v1810
        %v1944 = vpop.f32.mrf.mxu0
        %v1945 = vadd.f32 0.0, %v1944
        %v1946 = vpop.f32.mrf.mxu0
        %v1947 = vpop.f32.mrf.mxu0
        %v1948 = vadd.f32 0.0, %v1947
        %v1949 = vpop.f32.mrf.mxu0
        %1950 = vmatprep.mubr.bf16.mxu0 0
        %1951 = vmatmul.mubr.bf16.gmra.mxu0 %v1813
        %v1952 = vpop.f32.mrf.mxu0
        %v1953 = vadd.f32 0.0, %v1952
        %v1954 = vpop.f32.mrf.mxu0
        %v1955 = vpop.f32.mrf.mxu0
        %v1956 = vadd.f32 0.0, %v1955
        %v1957 = vpop.f32.mrf.mxu0
        %1958 = vmatprep.mubr.bf16.mxu0 0
        %1959 = vmatmul.mubr.bf16.gmra.mxu0 %v1816
        %v1960 = vpop.f32.mrf.mxu0
        %v1961 = vadd.f32 0.0, %v1960
        %v1962 = vpop.f32.mrf.mxu0
        %v1963 = vpop.f32.mrf.mxu0
        %v1964 = vadd.f32 0.0, %v1963
        %v1965 = vpop.f32.mrf.mxu0
        %1966 = vmatprep.mubr.bf16.mxu0 0
        %1967 = vmatmul.mubr.bf16.gmra.mxu0 %v1819
        %v1968 = vpop.f32.mrf.mxu0
        %v1969 = vadd.f32 0.0, %v1968
        %v1970 = vpop.f32.mrf.mxu0
        %v1971 = vpop.f32.mrf.mxu0
        %v1972 = vadd.f32 0.0, %v1971
        %v1973 = vpop.f32.mrf.mxu0
        %1974 = vmatprep.mubr.bf16.mxu0 0
        %1975 = vmatmul.mubr.bf16.gmra.mxu0 %v1822
        %v1976 = vpop.f32.mrf.mxu0
        %v1977 = vadd.f32 0.0, %v1976
        %v1978 = vpop.f32.mrf.mxu0
        %v1979 = vpop.f32.mrf.mxu0
        %v1980 = vadd.f32 0.0, %v1979
        %v1981 = vpop.f32.mrf.mxu0
        %1982 = vmatprep.mubr.bf16.mxu0 0
        %1983 = vmatmul.mubr.bf16.gmra.mxu0 %v1825
        %v1984 = vpop.f32.mrf.mxu0
        %v1985 = vadd.f32 0.0, %v1984
        %v1986 = vpop.f32.mrf.mxu0
        %v1987 = vpop.f32.mrf.mxu0
        %v1988 = vadd.f32 0.0, %v1987
        %v1989 = vpop.f32.mrf.mxu0
        %1990 = vdwg.mxu0
        %v1991 = vadd.f32 %v1632, %v1865
        %v1992 = vadd.f32 %v1633, %v1868
        %v1993 = vadd.f32 %v1634, %v1873
        %v1994 = vadd.f32 %v1635, %v1876
        %v1995 = vadd.f32 %v1636, %v1881
        %v1996 = vadd.f32 %v1637, %v1884
        %v1997 = vadd.f32 %v1638, %v1889
        %v1998 = vadd.f32 %v1639, %v1892
        %v1999 = vadd.f32 %v1640, %v1897
        %v2000 = vadd.f32 %v1641, %v1900
        %v2001 = vadd.f32 %v1642, %v1905
        %v2002 = vadd.f32 %v1643, %v1908
        %v2003 = vadd.f32 %v1644, %v1913
        %v2004 = vadd.f32 %v1645, %v1916
        %v2005 = vadd.f32 %v1646, %v1921
        %v2006 = vadd.f32 %v1647, %v1924
        %v2007 = vadd.f32 %v1648, %v1929
        %v2008 = vadd.f32 %v1649, %v1932
        %v2009 = vadd.f32 %v1650, %v1937
        %v2010 = vadd.f32 %v1651, %v1940
        %v2011 = vadd.f32 %v1652, %v1945
        %v2012 = vadd.f32 %v1653, %v1948
        %v2013 = vadd.f32 %v1654, %v1953
        %v2014 = vadd.f32 %v1655, %v1956
        %v2015 = vadd.f32 %v1656, %v1961
        %v2016 = vadd.f32 %v1657, %v1964
        %v2017 = vadd.f32 %v1658, %v1969
        %v2018 = vadd.f32 %v1659, %v1972
        %v2019 = vadd.f32 %v1660, %v1977
        %v2020 = vadd.f32 %v1661, %v1980
        %v2021 = vadd.f32 %v1662, %v1985
        %v2022 = vadd.f32 %v1663, %v1988
        %v2023 = vld [vmem:[%s1664] sm:$0xf]
        %v2024 = vld [vmem:[%s1664 + $0x4] sm:$0xf]
        %v2025 = vld [vmem:[%s1664 + $0x8] sm:$0x1]
        %v2026 = vld [vmem:[%s1664 + $0xc] sm:$0xf]
        %v2027 = vld [vmem:[%s1664 + $0x10] sm:$0xf]
        %v2028 = vld [vmem:[%s1664 + $0x14] sm:$0x1]
        %v2029 = vld [vmem:[%s1664 + $0x18] sm:$0xf]
        %v2030 = vld [vmem:[%s1664 + $0x1c] sm:$0xf]
        %v2031 = vld [vmem:[%s1664 + $0x20] sm:$0x1]
        %v2032 = vld [vmem:[%s1664 + $0x24] sm:$0xf]
        %v2033 = vld [vmem:[%s1664 + $0x28] sm:$0xf]
        %v2034 = vld [vmem:[%s1664 + $0x2c] sm:$0x1]
        %v2035 = vld [vmem:[%s1664 + $0x30] sm:$0xf]
        %v2036 = vld [vmem:[%s1664 + $0x34] sm:$0xf]
        %v2037 = vld [vmem:[%s1664 + $0x38] sm:$0x1]
        %v2038 = vld [vmem:[%s1664 + $0x3c] sm:$0xf]
        %v2039 = vld [vmem:[%s1664 + $0x40] sm:$0xf]
        %v2040 = vld [vmem:[%s1664 + $0x44] sm:$0x1]
        %v2041 = vld [vmem:[%s1664 + $0x48] sm:$0xf]
        %v2042 = vld [vmem:[%s1664 + $0x4c] sm:$0xf]
        %v2043 = vld [vmem:[%s1664 + $0x50] sm:$0x1]
        %v2044 = vld [vmem:[%s1664 + $0x54] sm:$0xf]
        %v2045 = vld [vmem:[%s1664 + $0x58] sm:$0xf]
        %v2046 = vld [vmem:[%s1664 + $0x5c] sm:$0x1]
        %v2047 = vld [vmem:[%s1664 + $0x60] sm:$0xf]
        %v2048 = vld [vmem:[%s1664 + $0x64] sm:$0xf]
        %v2049 = vld [vmem:[%s1664 + $0x68] sm:$0x1]
        %v2050 = vld [vmem:[%s1664 + $0x6c] sm:$0xf]
        %v2051 = vld [vmem:[%s1664 + $0x70] sm:$0xf]
        %v2052 = vld [vmem:[%s1664 + $0x74] sm:$0x1]
        %v2053 = vld [vmem:[%s1664 + $0x78] sm:$0xf]
        %v2054 = vld [vmem:[%s1664 + $0x7c] sm:$0xf]
        %v2055 = vld [vmem:[%s1664 + $0x80] sm:$0x1]
        %v2056 = vld [vmem:[%s1664 + $0x84] sm:$0xf]
        %v2057 = vld [vmem:[%s1664 + $0x88] sm:$0xf]
        %v2058 = vld [vmem:[%s1664 + $0x8c] sm:$0x1]
        %v2059 = vld [vmem:[%s1664 + $0x90] sm:$0xf]
        %v2060 = vld [vmem:[%s1664 + $0x94] sm:$0xf]
        %v2061 = vld [vmem:[%s1664 + $0x98] sm:$0x1]
        %v2062 = vld [vmem:[%s1664 + $0x9c] sm:$0xf]
        %v2063 = vld [vmem:[%s1664 + $0xa0] sm:$0xf]
        %v2064 = vld [vmem:[%s1664 + $0xa4] sm:$0x1]
        %v2065 = vld [vmem:[%s1664 + $0xa8] sm:$0xf]
        %v2066 = vld [vmem:[%s1664 + $0xac] sm:$0xf]
        %v2067 = vld [vmem:[%s1664 + $0xb0] sm:$0x1]
        %v2068 = vld [vmem:[%s1664 + $0xb4] sm:$0xf]
        %v2069 = vld [vmem:[%s1664 + $0xb8] sm:$0xf]
        %v2070 = vld [vmem:[%s1664 + $0xbc] sm:$0x1]
        %v2072 = vshrl.u32 %v2023, 16
        %v2074 = vrot.slane %v2072, 4
        %v2075 = vshll.u32 %v2023, 16
        %v2077 = vrot.slane %v2075, 5
        %v2078 = vor.u32 %v2074, %v2077
        %v2079 = vrot.slane %v2078, 4
        %v2081 = vshll.u32 %v2024, 16
        %v2083 = vrot.slane %v2081, 5
        %v2084 = vsel %vm266, %v2079, %v2083
        %v2085 = vshrl.u32 %v2024, 16
        %v2087 = vrot.slane %v2085, 4
        %v2088 = vor.u32 %v2087, %v2083
        %v2089 = vrot.slane %v2088, 4
        %v2091 = vshll.u32 %v2025, 16
        %v2093 = vrot.slane %v2091, 5
        %v2094 = vsel %vm266, %v2089, %v2093
        %v2096 = vshrl.u32 %v2026, 16
        %v2098 = vrot.slane %v2096, 4
        %v2099 = vshll.u32 %v2026, 16
        %v2101 = vrot.slane %v2099, 5
        %v2102 = vor.u32 %v2098, %v2101
        %v2103 = vrot.slane %v2102, 4
        %v2105 = vshll.u32 %v2027, 16
        %v2107 = vrot.slane %v2105, 5
        %v2108 = vsel %vm266, %v2103, %v2107
        %v2109 = vshrl.u32 %v2027, 16
        %v2111 = vrot.slane %v2109, 4
        %v2112 = vor.u32 %v2111, %v2107
        %v2113 = vrot.slane %v2112, 4
        %v2115 = vshll.u32 %v2028, 16
        %v2117 = vrot.slane %v2115, 5
        %v2118 = vsel %vm266, %v2113, %v2117
        %v2120 = vshrl.u32 %v2029, 16
        %v2122 = vrot.slane %v2120, 4
        %v2123 = vshll.u32 %v2029, 16
        %v2125 = vrot.slane %v2123, 5
        %v2126 = vor.u32 %v2122, %v2125
        %v2127 = vrot.slane %v2126, 4
        %v2129 = vshll.u32 %v2030, 16
        %v2131 = vrot.slane %v2129, 5
        %v2132 = vsel %vm266, %v2127, %v2131
        %v2133 = vshrl.u32 %v2030, 16
        %v2135 = vrot.slane %v2133, 4
        %v2136 = vor.u32 %v2135, %v2131
        %v2137 = vrot.slane %v2136, 4
        %v2139 = vshll.u32 %v2031, 16
        %v2141 = vrot.slane %v2139, 5
        %v2142 = vsel %vm266, %v2137, %v2141
        %v2144 = vshrl.u32 %v2032, 16
        %v2146 = vrot.slane %v2144, 4
        %v2147 = vshll.u32 %v2032, 16
        %v2149 = vrot.slane %v2147, 5
        %v2150 = vor.u32 %v2146, %v2149
        %v2151 = vrot.slane %v2150, 4
        %v2153 = vshll.u32 %v2033, 16
        %v2155 = vrot.slane %v2153, 5
        %v2156 = vsel %vm266, %v2151, %v2155
        %v2157 = vshrl.u32 %v2033, 16
        %v2159 = vrot.slane %v2157, 4
        %v2160 = vor.u32 %v2159, %v2155
        %v2161 = vrot.slane %v2160, 4
        %v2163 = vshll.u32 %v2034, 16
        %v2165 = vrot.slane %v2163, 5
        %v2166 = vsel %vm266, %v2161, %v2165
        %v2168 = vshrl.u32 %v2035, 16
        %v2170 = vrot.slane %v2168, 4
        %v2171 = vshll.u32 %v2035, 16
        %v2173 = vrot.slane %v2171, 5
        %v2174 = vor.u32 %v2170, %v2173
        %v2175 = vrot.slane %v2174, 4
        %v2177 = vshll.u32 %v2036, 16
        %v2179 = vrot.slane %v2177, 5
        %v2180 = vsel %vm266, %v2175, %v2179
        %v2181 = vshrl.u32 %v2036, 16
        %v2183 = vrot.slane %v2181, 4
        %v2184 = vor.u32 %v2183, %v2179
        %v2185 = vrot.slane %v2184, 4
        %v2187 = vshll.u32 %v2037, 16
        %v2189 = vrot.slane %v2187, 5
        %v2190 = vsel %vm266, %v2185, %v2189
        %v2192 = vshrl.u32 %v2038, 16
        %v2194 = vrot.slane %v2192, 4
        %v2195 = vshll.u32 %v2038, 16
        %v2197 = vrot.slane %v2195, 5
        %v2198 = vor.u32 %v2194, %v2197
        %v2199 = vrot.slane %v2198, 4
        %v2201 = vshll.u32 %v2039, 16
        %v2203 = vrot.slane %v2201, 5
        %v2204 = vsel %vm266, %v2199, %v2203
        %v2205 = vshrl.u32 %v2039, 16
        %v2207 = vrot.slane %v2205, 4
        %v2208 = vor.u32 %v2207, %v2203
        %v2209 = vrot.slane %v2208, 4
        %v2211 = vshll.u32 %v2040, 16
        %v2213 = vrot.slane %v2211, 5
        %v2214 = vsel %vm266, %v2209, %v2213
        %v2216 = vshrl.u32 %v2041, 16
        %v2218 = vrot.slane %v2216, 4
        %v2219 = vshll.u32 %v2041, 16
        %v2221 = vrot.slane %v2219, 5
        %v2222 = vor.u32 %v2218, %v2221
        %v2223 = vrot.slane %v2222, 4
        %v2225 = vshll.u32 %v2042, 16
        %v2227 = vrot.slane %v2225, 5
        %v2228 = vsel %vm266, %v2223, %v2227
        %v2229 = vshrl.u32 %v2042, 16
        %v2231 = vrot.slane %v2229, 4
        %v2232 = vor.u32 %v2231, %v2227
        %v2233 = vrot.slane %v2232, 4
        %v2235 = vshll.u32 %v2043, 16
        %v2237 = vrot.slane %v2235, 5
        %v2238 = vsel %vm266, %v2233, %v2237
        %v2240 = vshrl.u32 %v2044, 16
        %v2242 = vrot.slane %v2240, 4
        %v2243 = vshll.u32 %v2044, 16
        %v2245 = vrot.slane %v2243, 5
        %v2246 = vor.u32 %v2242, %v2245
        %v2247 = vrot.slane %v2246, 4
        %v2249 = vshll.u32 %v2045, 16
        %v2251 = vrot.slane %v2249, 5
        %v2252 = vsel %vm266, %v2247, %v2251
        %v2253 = vshrl.u32 %v2045, 16
        %v2255 = vrot.slane %v2253, 4
        %v2256 = vor.u32 %v2255, %v2251
        %v2257 = vrot.slane %v2256, 4
        %v2259 = vshll.u32 %v2046, 16
        %v2261 = vrot.slane %v2259, 5
        %v2262 = vsel %vm266, %v2257, %v2261
        %v2264 = vshrl.u32 %v2047, 16
        %v2266 = vrot.slane %v2264, 4
        %v2267 = vshll.u32 %v2047, 16
        %v2269 = vrot.slane %v2267, 5
        %v2270 = vor.u32 %v2266, %v2269
        %v2271 = vrot.slane %v2270, 4
        %v2273 = vshll.u32 %v2048, 16
        %v2275 = vrot.slane %v2273, 5
        %v2276 = vsel %vm266, %v2271, %v2275
        %v2277 = vshrl.u32 %v2048, 16
        %v2279 = vrot.slane %v2277, 4
        %v2280 = vor.u32 %v2279, %v2275
        %v2281 = vrot.slane %v2280, 4
        %v2283 = vshll.u32 %v2049, 16
        %v2285 = vrot.slane %v2283, 5
        %v2286 = vsel %vm266, %v2281, %v2285
        %v2288 = vshrl.u32 %v2050, 16
        %v2290 = vrot.slane %v2288, 4
        %v2291 = vshll.u32 %v2050, 16
        %v2293 = vrot.slane %v2291, 5
        %v2294 = vor.u32 %v2290, %v2293
        %v2295 = vrot.slane %v2294, 4
        %v2297 = vshll.u32 %v2051, 16
        %v2299 = vrot.slane %v2297, 5
        %v2300 = vsel %vm266, %v2295, %v2299
        %v2301 = vshrl.u32 %v2051, 16
        %v2303 = vrot.slane %v2301, 4
        %v2304 = vor.u32 %v2303, %v2299
        %v2305 = vrot.slane %v2304, 4
        %v2307 = vshll.u32 %v2052, 16
        %v2309 = vrot.slane %v2307, 5
        %v2310 = vsel %vm266, %v2305, %v2309
        %v2312 = vshrl.u32 %v2053, 16
        %v2314 = vrot.slane %v2312, 4
        %v2315 = vshll.u32 %v2053, 16
        %v2317 = vrot.slane %v2315, 5
        %v2318 = vor.u32 %v2314, %v2317
        %v2319 = vrot.slane %v2318, 4
        %v2321 = vshll.u32 %v2054, 16
        %v2323 = vrot.slane %v2321, 5
        %v2324 = vsel %vm266, %v2319, %v2323
        %v2325 = vshrl.u32 %v2054, 16
        %v2327 = vrot.slane %v2325, 4
        %v2328 = vor.u32 %v2327, %v2323
        %v2329 = vrot.slane %v2328, 4
        %v2331 = vshll.u32 %v2055, 16
        %v2333 = vrot.slane %v2331, 5
        %v2334 = vsel %vm266, %v2329, %v2333
        %v2336 = vshrl.u32 %v2056, 16
        %v2338 = vrot.slane %v2336, 4
        %v2339 = vshll.u32 %v2056, 16
        %v2341 = vrot.slane %v2339, 5
        %v2342 = vor.u32 %v2338, %v2341
        %v2343 = vrot.slane %v2342, 4
        %v2345 = vshll.u32 %v2057, 16
        %v2347 = vrot.slane %v2345, 5
        %v2348 = vsel %vm266, %v2343, %v2347
        %v2349 = vshrl.u32 %v2057, 16
        %v2351 = vrot.slane %v2349, 4
        %v2352 = vor.u32 %v2351, %v2347
        %v2353 = vrot.slane %v2352, 4
        %v2355 = vshll.u32 %v2058, 16
        %v2357 = vrot.slane %v2355, 5
        %v2358 = vsel %vm266, %v2353, %v2357
        %v2360 = vshrl.u32 %v2059, 16
        %v2362 = vrot.slane %v2360, 4
        %v2363 = vshll.u32 %v2059, 16
        %v2365 = vrot.slane %v2363, 5
        %v2366 = vor.u32 %v2362, %v2365
        %v2367 = vrot.slane %v2366, 4
        %v2369 = vshll.u32 %v2060, 16
        %v2371 = vrot.slane %v2369, 5
        %v2372 = vsel %vm266, %v2367, %v2371
        %v2373 = vshrl.u32 %v2060, 16
        %v2375 = vrot.slane %v2373, 4
        %v2376 = vor.u32 %v2375, %v2371
        %v2377 = vrot.slane %v2376, 4
        %v2379 = vshll.u32 %v2061, 16
        %v2381 = vrot.slane %v2379, 5
        %v2382 = vsel %vm266, %v2377, %v2381
        %v2384 = vshrl.u32 %v2062, 16
        %v2386 = vrot.slane %v2384, 4
        %v2387 = vshll.u32 %v2062, 16
        %v2389 = vrot.slane %v2387, 5
        %v2390 = vor.u32 %v2386, %v2389
        %v2391 = vrot.slane %v2390, 4
        %v2393 = vshll.u32 %v2063, 16
        %v2395 = vrot.slane %v2393, 5
        %v2396 = vsel %vm266, %v2391, %v2395
        %v2397 = vshrl.u32 %v2063, 16
        %v2399 = vrot.slane %v2397, 4
        %v2400 = vor.u32 %v2399, %v2395
        %v2401 = vrot.slane %v2400, 4
        %v2403 = vshll.u32 %v2064, 16
        %v2405 = vrot.slane %v2403, 5
        %v2406 = vsel %vm266, %v2401, %v2405
        %v2408 = vshrl.u32 %v2065, 16
        %v2410 = vrot.slane %v2408, 4
        %v2411 = vshll.u32 %v2065, 16
        %v2413 = vrot.slane %v2411, 5
        %v2414 = vor.u32 %v2410, %v2413
        %v2415 = vrot.slane %v2414, 4
        %v2417 = vshll.u32 %v2066, 16
        %v2419 = vrot.slane %v2417, 5
        %v2420 = vsel %vm266, %v2415, %v2419
        %v2421 = vshrl.u32 %v2066, 16
        %v2423 = vrot.slane %v2421, 4
        %v2424 = vor.u32 %v2423, %v2419
        %v2425 = vrot.slane %v2424, 4
        %v2427 = vshll.u32 %v2067, 16
        %v2429 = vrot.slane %v2427, 5
        %v2430 = vsel %vm266, %v2425, %v2429
        %v2432 = vshrl.u32 %v2068, 16
        %v2434 = vrot.slane %v2432, 4
        %v2435 = vshll.u32 %v2068, 16
        %v2437 = vrot.slane %v2435, 5
        %v2438 = vor.u32 %v2434, %v2437
        %v2439 = vrot.slane %v2438, 4
        %v2441 = vshll.u32 %v2069, 16
        %v2443 = vrot.slane %v2441, 5
        %v2444 = vsel %vm266, %v2439, %v2443
        %v2445 = vshrl.u32 %v2069, 16
        %v2447 = vrot.slane %v2445, 4
        %v2448 = vor.u32 %v2447, %v2443
        %v2449 = vrot.slane %v2448, 4
        %v2451 = vshll.u32 %v2070, 16
        %v2453 = vrot.slane %v2451, 5
        %v2454 = vsel %vm266, %v2449, %v2453
        %s2455 = scalar_lea.vmem %s210, 8
        %v2456 = vld [vmem:[%s2455] sm:$0x3]
        %v2457 = vunpack.c.l.b16 %v2084
        %v2458 = vunpack.c.l.b16 %v2094
        %v2459 = vunpack.c.l.b16 %v2108
        %v2460 = vunpack.c.l.b16 %v2118
        %v2461 = vunpack.c.l.b16 %v2132
        %v2462 = vunpack.c.l.b16 %v2142
        %v2463 = vunpack.c.l.b16 %v2156
        %v2464 = vunpack.c.l.b16 %v2166
        %v2465 = vunpack.c.l.b16 %v2180
        %v2466 = vunpack.c.l.b16 %v2190
        %v2467 = vunpack.c.l.b16 %v2204
        %v2468 = vunpack.c.l.b16 %v2214
        %v2469 = vunpack.c.l.b16 %v2228
        %v2470 = vunpack.c.l.b16 %v2238
        %v2471 = vunpack.c.l.b16 %v2252
        %v2472 = vunpack.c.l.b16 %v2262
        %v2473 = vunpack.c.l.b16 %v2276
        %v2474 = vunpack.c.l.b16 %v2286
        %v2475 = vunpack.c.l.b16 %v2300
        %v2476 = vunpack.c.l.b16 %v2310
        %v2477 = vunpack.c.l.b16 %v2324
        %v2478 = vunpack.c.l.b16 %v2334
        %v2479 = vunpack.c.l.b16 %v2348
        %v2480 = vunpack.c.l.b16 %v2358
        %v2481 = vunpack.c.l.b16 %v2372
        %v2482 = vunpack.c.l.b16 %v2382
        %v2483 = vunpack.c.l.b16 %v2396
        %v2484 = vunpack.c.l.b16 %v2406
        %v2485 = vunpack.c.l.b16 %v2420
        %v2486 = vunpack.c.l.b16 %v2430
        %v2487 = vunpack.c.l.b16 %v2444
        %v2488 = vunpack.c.l.b16 %v2454
        %v2489 = vpack.c.b16 %v2458, %v2457
        %v2490 = vpack.c.b16 %v2460, %v2459
        %v2491 = vpack.c.b16 %v2462, %v2461
        %v2492 = vpack.c.b16 %v2464, %v2463
        %v2493 = vpack.c.b16 %v2466, %v2465
        %v2494 = vpack.c.b16 %v2468, %v2467
        %v2495 = vpack.c.b16 %v2470, %v2469
        %v2496 = vpack.c.b16 %v2472, %v2471
        %v2497 = vpack.c.b16 %v2474, %v2473
        %v2498 = vpack.c.b16 %v2476, %v2475
        %v2499 = vpack.c.b16 %v2478, %v2477
        %v2500 = vpack.c.b16 %v2480, %v2479
        %v2501 = vpack.c.b16 %v2482, %v2481
        %v2502 = vpack.c.b16 %v2484, %v2483
        %v2503 = vpack.c.b16 %v2486, %v2485
        %v2504 = vpack.c.b16 %v2488, %v2487
        %v2506 = vsel %vm701, %v2489, 0
        %v2509 = vsel %vm701, %v2490, 0
        %v2512 = vsel %vm701, %v2491, 0
        %v2515 = vsel %vm701, %v2492, 0
        %v2518 = vsel %vm701, %v2493, 0
        %v2521 = vsel %vm701, %v2494, 0
        %v2524 = vsel %vm701, %v2495, 0
        %v2527 = vsel %vm701, %v2496, 0
        %v2530 = vsel %vm701, %v2497, 0
        %v2533 = vsel %vm701, %v2498, 0
        %v2536 = vsel %vm701, %v2499, 0
        %v2539 = vsel %vm701, %v2500, 0
        %v2542 = vsel %vm701, %v2501, 0
        %v2545 = vsel %vm701, %v2502, 0
        %v2548 = vsel %vm701, %v2503, 0
        %v2551 = vsel %vm701, %v2504, 0
        %v2554 = vsel %vm750, %v2456, 0
        %2556 = vmatprep.subr.bf16.mxu0 0
        %2557 = vmatpush1.bf16.msra.mxu0 0
        %2558 = vmatprep.subr.bf16.mxu0 0
        %2559 = vmatpush1.bf16.msra.mxu0 0
        %2560 = vmatprep.subr.bf16.mxu0 0
        %2561 = vmatpush1.bf16.msra.mxu0 0
        %2562 = vmatprep.subr.bf16.mxu0 0
        %2563 = vmatpush1.bf16.msra.mxu0 0
        %2564 = vmatprep.subr.bf16.mxu0 0
        %2565 = vmatpush1.bf16.msra.mxu0 0
        %2566 = vmatprep.subr.bf16.mxu0 0
        %2567 = vmatpush1.bf16.msra.mxu0 0
        %2568 = vmatprep.subr.bf16.mxu0 0
        %2569 = vmatpush1.bf16.msra.mxu0 0
        %2570 = vmatprep.subr.bf16.mxu0 0
        %2571 = vmatpush1.bf16.msra.mxu0 %v2554
        %2572 = vmatprep.subr.bf16.mxu0 0
        %2573 = vmatpush2.bf16.msra.mxu0 0
        %2574 = vmatprep.subr.bf16.mxu0 0
        %2575 = vmatpush2.bf16.msra.mxu0 0
        %2576 = vmatprep.subr.bf16.mxu0 0
        %2577 = vmatpush2.bf16.msra.mxu0 0
        %2578 = vmatprep.subr.bf16.mxu0 0
        %2579 = vmatpush2.bf16.msra.mxu0 0
        %2580 = vmatprep.subr.bf16.mxu0 0
        %2581 = vmatpush2.bf16.msra.mxu0 0
        %2582 = vmatprep.subr.bf16.mxu0 0
        %2583 = vmatpush2.bf16.msra.mxu0 0
        %2584 = vmatprep.subr.bf16.mxu0 0
        %2585 = vmatpush2.bf16.msra.mxu0 0
        %2586 = vmatprep.subr.bf16.mxu0 0
        %2587 = vmatpush2.bf16.msra.mxu0 0
        %2588 = vmatprep.mubr.bf16.mxu0 0
        %2589 = vmatmul.mubr.bf16.gmra.mxu0 %v2506
        %v2590 = vpop.f32.mrf.mxu0
        %v2591 = vadd.f32 0.0, %v2590
        %v2592 = vpop.f32.mrf.mxu0
        %v2593 = vpop.f32.mrf.mxu0
        %v2594 = vadd.f32 0.0, %v2593
        %v2595 = vpop.f32.mrf.mxu0
        %2596 = vmatprep.mubr.bf16.mxu0 0
        %2597 = vmatmul.mubr.bf16.gmra.mxu0 %v2509
        %v2598 = vpop.f32.mrf.mxu0
        %v2599 = vadd.f32 0.0, %v2598
        %v2600 = vpop.f32.mrf.mxu0
        %v2601 = vpop.f32.mrf.mxu0
        %v2602 = vadd.f32 0.0, %v2601
        %v2603 = vpop.f32.mrf.mxu0
        %2604 = vmatprep.mubr.bf16.mxu0 0
        %2605 = vmatmul.mubr.bf16.gmra.mxu0 %v2512
        %v2606 = vpop.f32.mrf.mxu0
        %v2607 = vadd.f32 0.0, %v2606
        %v2608 = vpop.f32.mrf.mxu0
        %v2609 = vpop.f32.mrf.mxu0
        %v2610 = vadd.f32 0.0, %v2609
        %v2611 = vpop.f32.mrf.mxu0
        %2612 = vmatprep.mubr.bf16.mxu0 0
        %2613 = vmatmul.mubr.bf16.gmra.mxu0 %v2515
        %v2614 = vpop.f32.mrf.mxu0
        %v2615 = vadd.f32 0.0, %v2614
        %v2616 = vpop.f32.mrf.mxu0
        %v2617 = vpop.f32.mrf.mxu0
        %v2618 = vadd.f32 0.0, %v2617
        %v2619 = vpop.f32.mrf.mxu0
        %2620 = vmatprep.mubr.bf16.mxu0 0
        %2621 = vmatmul.mubr.bf16.gmra.mxu0 %v2518
        %v2622 = vpop.f32.mrf.mxu0
        %v2623 = vadd.f32 0.0, %v2622
        %v2624 = vpop.f32.mrf.mxu0
        %v2625 = vpop.f32.mrf.mxu0
        %v2626 = vadd.f32 0.0, %v2625
        %v2627 = vpop.f32.mrf.mxu0
        %2628 = vmatprep.mubr.bf16.mxu0 0
        %2629 = vmatmul.mubr.bf16.gmra.mxu0 %v2521
        %v2630 = vpop.f32.mrf.mxu0
        %v2631 = vadd.f32 0.0, %v2630
        %v2632 = vpop.f32.mrf.mxu0
        %v2633 = vpop.f32.mrf.mxu0
        %v2634 = vadd.f32 0.0, %v2633
        %v2635 = vpop.f32.mrf.mxu0
        %2636 = vmatprep.mubr.bf16.mxu0 0
        %2637 = vmatmul.mubr.bf16.gmra.mxu0 %v2524
        %v2638 = vpop.f32.mrf.mxu0
        %v2639 = vadd.f32 0.0, %v2638
        %v2640 = vpop.f32.mrf.mxu0
        %v2641 = vpop.f32.mrf.mxu0
        %v2642 = vadd.f32 0.0, %v2641
        %v2643 = vpop.f32.mrf.mxu0
        %2644 = vmatprep.mubr.bf16.mxu0 0
        %2645 = vmatmul.mubr.bf16.gmra.mxu0 %v2527
        %v2646 = vpop.f32.mrf.mxu0
        %v2647 = vadd.f32 0.0, %v2646
        %v2648 = vpop.f32.mrf.mxu0
        %v2649 = vpop.f32.mrf.mxu0
        %v2650 = vadd.f32 0.0, %v2649
        %v2651 = vpop.f32.mrf.mxu0
        %2652 = vmatprep.mubr.bf16.mxu0 0
        %2653 = vmatmul.mubr.bf16.gmra.mxu0 %v2530
        %v2654 = vpop.f32.mrf.mxu0
        %v2655 = vadd.f32 0.0, %v2654
        %v2656 = vpop.f32.mrf.mxu0
        %v2657 = vpop.f32.mrf.mxu0
        %v2658 = vadd.f32 0.0, %v2657
        %v2659 = vpop.f32.mrf.mxu0
        %2660 = vmatprep.mubr.bf16.mxu0 0
        %2661 = vmatmul.mubr.bf16.gmra.mxu0 %v2533
        %v2662 = vpop.f32.mrf.mxu0
        %v2663 = vadd.f32 0.0, %v2662
        %v2664 = vpop.f32.mrf.mxu0
        %v2665 = vpop.f32.mrf.mxu0
        %v2666 = vadd.f32 0.0, %v2665
        %v2667 = vpop.f32.mrf.mxu0
        %2668 = vmatprep.mubr.bf16.mxu0 0
        %2669 = vmatmul.mubr.bf16.gmra.mxu0 %v2536
        %v2670 = vpop.f32.mrf.mxu0
        %v2671 = vadd.f32 0.0, %v2670
        %v2672 = vpop.f32.mrf.mxu0
        %v2673 = vpop.f32.mrf.mxu0
        %v2674 = vadd.f32 0.0, %v2673
        %v2675 = vpop.f32.mrf.mxu0
        %2676 = vmatprep.mubr.bf16.mxu0 0
        %2677 = vmatmul.mubr.bf16.gmra.mxu0 %v2539
        %v2678 = vpop.f32.mrf.mxu0
        %v2679 = vadd.f32 0.0, %v2678
        %v2680 = vpop.f32.mrf.mxu0
        %v2681 = vpop.f32.mrf.mxu0
        %v2682 = vadd.f32 0.0, %v2681
        %v2683 = vpop.f32.mrf.mxu0
        %2684 = vmatprep.mubr.bf16.mxu0 0
        %2685 = vmatmul.mubr.bf16.gmra.mxu0 %v2542
        %v2686 = vpop.f32.mrf.mxu0
        %v2687 = vadd.f32 0.0, %v2686
        %v2688 = vpop.f32.mrf.mxu0
        %v2689 = vpop.f32.mrf.mxu0
        %v2690 = vadd.f32 0.0, %v2689
        %v2691 = vpop.f32.mrf.mxu0
        %2692 = vmatprep.mubr.bf16.mxu0 0
        %2693 = vmatmul.mubr.bf16.gmra.mxu0 %v2545
        %v2694 = vpop.f32.mrf.mxu0
        %v2695 = vadd.f32 0.0, %v2694
        %v2696 = vpop.f32.mrf.mxu0
        %v2697 = vpop.f32.mrf.mxu0
        %v2698 = vadd.f32 0.0, %v2697
        %v2699 = vpop.f32.mrf.mxu0
        %2700 = vmatprep.mubr.bf16.mxu0 0
        %2701 = vmatmul.mubr.bf16.gmra.mxu0 %v2548
        %v2702 = vpop.f32.mrf.mxu0
        %v2703 = vadd.f32 0.0, %v2702
        %v2704 = vpop.f32.mrf.mxu0
        %v2705 = vpop.f32.mrf.mxu0
        %v2706 = vadd.f32 0.0, %v2705
        %v2707 = vpop.f32.mrf.mxu0
        %2708 = vmatprep.mubr.bf16.mxu0 0
        %2709 = vmatmul.mubr.bf16.gmra.mxu0 %v2551
        %v2710 = vpop.f32.mrf.mxu0
        %v2711 = vadd.f32 0.0, %v2710
        %v2712 = vpop.f32.mrf.mxu0
        %v2713 = vpop.f32.mrf.mxu0
        %v2714 = vadd.f32 0.0, %v2713
        %v2715 = vpop.f32.mrf.mxu0
        %2716 = vdwg.mxu0
        %v2717 = vadd.f32 %v1991, %v2591
        %v2718 = vadd.f32 %v1992, %v2594
        %v2719 = vadd.f32 %v1993, %v2599
        %v2720 = vadd.f32 %v1994, %v2602
        %v2721 = vadd.f32 %v1995, %v2607
        %v2722 = vadd.f32 %v1996, %v2610
        %v2723 = vadd.f32 %v1997, %v2615
        %v2724 = vadd.f32 %v1998, %v2618
        %v2725 = vadd.f32 %v1999, %v2623
        %v2726 = vadd.f32 %v2000, %v2626
        %v2727 = vadd.f32 %v2001, %v2631
        %v2728 = vadd.f32 %v2002, %v2634
        %v2729 = vadd.f32 %v2003, %v2639
        %v2730 = vadd.f32 %v2004, %v2642
        %v2731 = vadd.f32 %v2005, %v2647
        %v2732 = vadd.f32 %v2006, %v2650
        %v2733 = vadd.f32 %v2007, %v2655
        %v2734 = vadd.f32 %v2008, %v2658
        %v2735 = vadd.f32 %v2009, %v2663
        %v2736 = vadd.f32 %v2010, %v2666
        %v2737 = vadd.f32 %v2011, %v2671
        %v2738 = vadd.f32 %v2012, %v2674
        %v2739 = vadd.f32 %v2013, %v2679
        %v2740 = vadd.f32 %v2014, %v2682
        %v2741 = vadd.f32 %v2015, %v2687
        %v2742 = vadd.f32 %v2016, %v2690
        %v2743 = vadd.f32 %v2017, %v2695
        %v2744 = vadd.f32 %v2018, %v2698
        %v2745 = vadd.f32 %v2019, %v2703
        %v2746 = vadd.f32 %v2020, %v2706
        %v2747 = vadd.f32 %v2021, %v2711
        %v2748 = vadd.f32 %v2022, %v2714
        %v2749 = vld [vmem:[%s1664] sm:$0xe]
        %v2750 = vld [vmem:[%s1664 + $0xc] sm:$0xe]
        %v2751 = vld [vmem:[%s1664 + $0x18] sm:$0xe]
        %v2752 = vld [vmem:[%s1664 + $0x24] sm:$0xe]
        %v2753 = vld [vmem:[%s1664 + $0x30] sm:$0xe]
        %v2754 = vld [vmem:[%s1664 + $0x3c] sm:$0xe]
        %v2755 = vld [vmem:[%s1664 + $0x48] sm:$0xe]
        %v2756 = vld [vmem:[%s1664 + $0x54] sm:$0xe]
        %v2757 = vld [vmem:[%s1664 + $0x60] sm:$0xe]
        %v2758 = vld [vmem:[%s1664 + $0x6c] sm:$0xe]
        %v2759 = vld [vmem:[%s1664 + $0x78] sm:$0xe]
        %v2760 = vld [vmem:[%s1664 + $0x84] sm:$0xe]
        %v2761 = vld [vmem:[%s1664 + $0x90] sm:$0xe]
        %v2762 = vld [vmem:[%s1664 + $0x9c] sm:$0xe]
        %v2763 = vld [vmem:[%s1664 + $0xa8] sm:$0xe]
        %v2764 = vld [vmem:[%s1664 + $0xb4] sm:$0xe]
        %v2813 = vrot.slane %v2749, 5
        %v2814 = vrot.slane %v2813, 4
        %v2815 = vrot.slane %v2024, 5
        %v2816 = vsel %vm1257, %v2814, %v2815
        %v2817 = vrot.slane %v2815, 4
        %v2818 = vrot.slane %v2025, 5
        %v2819 = vsel %vm1257, %v2817, %v2818
        %v2820 = vrot.slane %v2750, 5
        %v2821 = vrot.slane %v2820, 4
        %v2822 = vrot.slane %v2027, 5
        %v2823 = vsel %vm1257, %v2821, %v2822
        %v2824 = vrot.slane %v2822, 4
        %v2825 = vrot.slane %v2028, 5
        %v2826 = vsel %vm1257, %v2824, %v2825
        %v2827 = vrot.slane %v2751, 5
        %v2828 = vrot.slane %v2827, 4
        %v2829 = vrot.slane %v2030, 5
        %v2830 = vsel %vm1257, %v2828, %v2829
        %v2831 = vrot.slane %v2829, 4
        %v2832 = vrot.slane %v2031, 5
        %v2833 = vsel %vm1257, %v2831, %v2832
        %v2834 = vrot.slane %v2752, 5
        %v2835 = vrot.slane %v2834, 4
        %v2836 = vrot.slane %v2033, 5
        %v2837 = vsel %vm1257, %v2835, %v2836
        %v2838 = vrot.slane %v2836, 4
        %v2839 = vrot.slane %v2034, 5
        %v2840 = vsel %vm1257, %v2838, %v2839
        %v2841 = vrot.slane %v2753, 5
        %v2842 = vrot.slane %v2841, 4
        %v2843 = vrot.slane %v2036, 5
        %v2844 = vsel %vm1257, %v2842, %v2843
        %v2845 = vrot.slane %v2843, 4
        %v2846 = vrot.slane %v2037, 5
        %v2847 = vsel %vm1257, %v2845, %v2846
        %v2848 = vrot.slane %v2754, 5
        %v2849 = vrot.slane %v2848, 4
        %v2850 = vrot.slane %v2039, 5
        %v2851 = vsel %vm1257, %v2849, %v2850
        %v2852 = vrot.slane %v2850, 4
        %v2853 = vrot.slane %v2040, 5
        %v2854 = vsel %vm1257, %v2852, %v2853
        %v2855 = vrot.slane %v2755, 5
        %v2856 = vrot.slane %v2855, 4
        %v2857 = vrot.slane %v2042, 5
        %v2858 = vsel %vm1257, %v2856, %v2857
        %v2859 = vrot.slane %v2857, 4
        %v2860 = vrot.slane %v2043, 5
        %v2861 = vsel %vm1257, %v2859, %v2860
        %v2862 = vrot.slane %v2756, 5
        %v2863 = vrot.slane %v2862, 4
        %v2864 = vrot.slane %v2045, 5
        %v2865 = vsel %vm1257, %v2863, %v2864
        %v2866 = vrot.slane %v2864, 4
        %v2867 = vrot.slane %v2046, 5
        %v2868 = vsel %vm1257, %v2866, %v2867
        %v2869 = vrot.slane %v2757, 5
        %v2870 = vrot.slane %v2869, 4
        %v2871 = vrot.slane %v2048, 5
        %v2872 = vsel %vm1257, %v2870, %v2871
        %v2873 = vrot.slane %v2871, 4
        %v2874 = vrot.slane %v2049, 5
        %v2875 = vsel %vm1257, %v2873, %v2874
        %v2876 = vrot.slane %v2758, 5
        %v2877 = vrot.slane %v2876, 4
        %v2878 = vrot.slane %v2051, 5
        %v2879 = vsel %vm1257, %v2877, %v2878
        %v2880 = vrot.slane %v2878, 4
        %v2881 = vrot.slane %v2052, 5
        %v2882 = vsel %vm1257, %v2880, %v2881
        %v2883 = vrot.slane %v2759, 5
        %v2884 = vrot.slane %v2883, 4
        %v2885 = vrot.slane %v2054, 5
        %v2886 = vsel %vm1257, %v2884, %v2885
        %v2887 = vrot.slane %v2885, 4
        %v2888 = vrot.slane %v2055, 5
        %v2889 = vsel %vm1257, %v2887, %v2888
        %v2890 = vrot.slane %v2760, 5
        %v2891 = vrot.slane %v2890, 4
        %v2892 = vrot.slane %v2057, 5
        %v2893 = vsel %vm1257, %v2891, %v2892
        %v2894 = vrot.slane %v2892, 4
        %v2895 = vrot.slane %v2058, 5
        %v2896 = vsel %vm1257, %v2894, %v2895
        %v2897 = vrot.slane %v2761, 5
        %v2898 = vrot.slane %v2897, 4
        %v2899 = vrot.slane %v2060, 5
        %v2900 = vsel %vm1257, %v2898, %v2899
        %v2901 = vrot.slane %v2899, 4
        %v2902 = vrot.slane %v2061, 5
        %v2903 = vsel %vm1257, %v2901, %v2902
        %v2904 = vrot.slane %v2762, 5
        %v2905 = vrot.slane %v2904, 4
        %v2906 = vrot.slane %v2063, 5
        %v2907 = vsel %vm1257, %v2905, %v2906
        %v2908 = vrot.slane %v2906, 4
        %v2909 = vrot.slane %v2064, 5
        %v2910 = vsel %vm1257, %v2908, %v2909
        %v2911 = vrot.slane %v2763, 5
        %v2912 = vrot.slane %v2911, 4
        %v2913 = vrot.slane %v2066, 5
        %v2914 = vsel %vm1257, %v2912, %v2913
        %v2915 = vrot.slane %v2913, 4
        %v2916 = vrot.slane %v2067, 5
        %v2917 = vsel %vm1257, %v2915, %v2916
        %v2918 = vrot.slane %v2764, 5
        %v2919 = vrot.slane %v2918, 4
        %v2920 = vrot.slane %v2069, 5
        %v2921 = vsel %vm1257, %v2919, %v2920
        %v2922 = vrot.slane %v2920, 4
        %v2923 = vrot.slane %v2070, 5
        %v2924 = vsel %vm1257, %v2922, %v2923
        %s2925 = scalar_lea.vmem %s210, 10
        %v2926 = vld [vmem:[%s2925] sm:$0x3]
        %v2927 = vunpack.c.l.b16 %v2816
        %v2928 = vunpack.c.l.b16 %v2819
        %v2929 = vunpack.c.l.b16 %v2823
        %v2930 = vunpack.c.l.b16 %v2826
        %v2931 = vunpack.c.l.b16 %v2830
        %v2932 = vunpack.c.l.b16 %v2833
        %v2933 = vunpack.c.l.b16 %v2837
        %v2934 = vunpack.c.l.b16 %v2840
        %v2935 = vunpack.c.l.b16 %v2844
        %v2936 = vunpack.c.l.b16 %v2847
        %v2937 = vunpack.c.l.b16 %v2851
        %v2938 = vunpack.c.l.b16 %v2854
        %v2939 = vunpack.c.l.b16 %v2858
        %v2940 = vunpack.c.l.b16 %v2861
        %v2941 = vunpack.c.l.b16 %v2865
        %v2942 = vunpack.c.l.b16 %v2868
        %v2943 = vunpack.c.l.b16 %v2872
        %v2944 = vunpack.c.l.b16 %v2875
        %v2945 = vunpack.c.l.b16 %v2879
        %v2946 = vunpack.c.l.b16 %v2882
        %v2947 = vunpack.c.l.b16 %v2886
        %v2948 = vunpack.c.l.b16 %v2889
        %v2949 = vunpack.c.l.b16 %v2893
        %v2950 = vunpack.c.l.b16 %v2896
        %v2951 = vunpack.c.l.b16 %v2900
        %v2952 = vunpack.c.l.b16 %v2903
        %v2953 = vunpack.c.l.b16 %v2907
        %v2954 = vunpack.c.l.b16 %v2910
        %v2955 = vunpack.c.l.b16 %v2914
        %v2956 = vunpack.c.l.b16 %v2917
        %v2957 = vunpack.c.l.b16 %v2921
        %v2958 = vunpack.c.l.b16 %v2924
        %v2959 = vpack.c.b16 %v2928, %v2927
        %v2960 = vpack.c.b16 %v2930, %v2929
        %v2961 = vpack.c.b16 %v2932, %v2931
        %v2962 = vpack.c.b16 %v2934, %v2933
        %v2963 = vpack.c.b16 %v2936, %v2935
        %v2964 = vpack.c.b16 %v2938, %v2937
        %v2965 = vpack.c.b16 %v2940, %v2939
        %v2966 = vpack.c.b16 %v2942, %v2941
        %v2967 = vpack.c.b16 %v2944, %v2943
        %v2968 = vpack.c.b16 %v2946, %v2945
        %v2969 = vpack.c.b16 %v2948, %v2947
        %v2970 = vpack.c.b16 %v2950, %v2949
        %v2971 = vpack.c.b16 %v2952, %v2951
        %v2972 = vpack.c.b16 %v2954, %v2953
        %v2973 = vpack.c.b16 %v2956, %v2955
        %v2974 = vpack.c.b16 %v2958, %v2957
        %v2976 = vsel %vm701, %v2959, 0
        %v2979 = vsel %vm701, %v2960, 0
        %v2982 = vsel %vm701, %v2961, 0
        %v2985 = vsel %vm701, %v2962, 0
        %v2988 = vsel %vm701, %v2963, 0
        %v2991 = vsel %vm701, %v2964, 0
        %v2994 = vsel %vm701, %v2965, 0
        %v2997 = vsel %vm701, %v2966, 0
        %v3000 = vsel %vm701, %v2967, 0
        %v3003 = vsel %vm701, %v2968, 0
        %v3006 = vsel %vm701, %v2969, 0
        %v3009 = vsel %vm701, %v2970, 0
        %v3012 = vsel %vm701, %v2971, 0
        %v3015 = vsel %vm701, %v2972, 0
        %v3018 = vsel %vm701, %v2973, 0
        %v3021 = vsel %vm701, %v2974, 0
        %v3024 = vsel %vm750, %v2926, 0
        %3026 = vmatprep.subr.bf16.mxu0 0
        %3027 = vmatpush1.bf16.msra.mxu0 0
        %3028 = vmatprep.subr.bf16.mxu0 0
        %3029 = vmatpush1.bf16.msra.mxu0 0
        %3030 = vmatprep.subr.bf16.mxu0 0
        %3031 = vmatpush1.bf16.msra.mxu0 0
        %3032 = vmatprep.subr.bf16.mxu0 0
        %3033 = vmatpush1.bf16.msra.mxu0 0
        %3034 = vmatprep.subr.bf16.mxu0 0
        %3035 = vmatpush1.bf16.msra.mxu0 0
        %3036 = vmatprep.subr.bf16.mxu0 0
        %3037 = vmatpush1.bf16.msra.mxu0 0
        %3038 = vmatprep.subr.bf16.mxu0 0
        %3039 = vmatpush1.bf16.msra.mxu0 0
        %3040 = vmatprep.subr.bf16.mxu0 0
        %3041 = vmatpush1.bf16.msra.mxu0 %v3024
        %3042 = vmatprep.subr.bf16.mxu0 0
        %3043 = vmatpush2.bf16.msra.mxu0 0
        %3044 = vmatprep.subr.bf16.mxu0 0
        %3045 = vmatpush2.bf16.msra.mxu0 0
        %3046 = vmatprep.subr.bf16.mxu0 0
        %3047 = vmatpush2.bf16.msra.mxu0 0
        %3048 = vmatprep.subr.bf16.mxu0 0
        %3049 = vmatpush2.bf16.msra.mxu0 0
        %3050 = vmatprep.subr.bf16.mxu0 0
        %3051 = vmatpush2.bf16.msra.mxu0 0
        %3052 = vmatprep.subr.bf16.mxu0 0
        %3053 = vmatpush2.bf16.msra.mxu0 0
        %3054 = vmatprep.subr.bf16.mxu0 0
        %3055 = vmatpush2.bf16.msra.mxu0 0
        %3056 = vmatprep.subr.bf16.mxu0 0
        %3057 = vmatpush2.bf16.msra.mxu0 0
        %3058 = vmatprep.mubr.bf16.mxu0 0
        %3059 = vmatmul.mubr.bf16.gmra.mxu0 %v2976
        %v3060 = vpop.f32.mrf.mxu0
        %v3061 = vadd.f32 0.0, %v3060
        %v3062 = vpop.f32.mrf.mxu0
        %v3063 = vpop.f32.mrf.mxu0
        %v3064 = vadd.f32 0.0, %v3063
        %v3065 = vpop.f32.mrf.mxu0
        %3066 = vmatprep.mubr.bf16.mxu0 0
        %3067 = vmatmul.mubr.bf16.gmra.mxu0 %v2979
        %v3068 = vpop.f32.mrf.mxu0
        %v3069 = vadd.f32 0.0, %v3068
        %v3070 = vpop.f32.mrf.mxu0
        %v3071 = vpop.f32.mrf.mxu0
        %v3072 = vadd.f32 0.0, %v3071
        %v3073 = vpop.f32.mrf.mxu0
        %3074 = vmatprep.mubr.bf16.mxu0 0
        %3075 = vmatmul.mubr.bf16.gmra.mxu0 %v2982
        %v3076 = vpop.f32.mrf.mxu0
        %v3077 = vadd.f32 0.0, %v3076
        %v3078 = vpop.f32.mrf.mxu0
        %v3079 = vpop.f32.mrf.mxu0
        %v3080 = vadd.f32 0.0, %v3079
        %v3081 = vpop.f32.mrf.mxu0
        %3082 = vmatprep.mubr.bf16.mxu0 0
        %3083 = vmatmul.mubr.bf16.gmra.mxu0 %v2985
        %v3084 = vpop.f32.mrf.mxu0
        %v3085 = vadd.f32 0.0, %v3084
        %v3086 = vpop.f32.mrf.mxu0
        %v3087 = vpop.f32.mrf.mxu0
        %v3088 = vadd.f32 0.0, %v3087
        %v3089 = vpop.f32.mrf.mxu0
        %3090 = vmatprep.mubr.bf16.mxu0 0
        %3091 = vmatmul.mubr.bf16.gmra.mxu0 %v2988
        %v3092 = vpop.f32.mrf.mxu0
        %v3093 = vadd.f32 0.0, %v3092
        %v3094 = vpop.f32.mrf.mxu0
        %v3095 = vpop.f32.mrf.mxu0
        %v3096 = vadd.f32 0.0, %v3095
        %v3097 = vpop.f32.mrf.mxu0
        %3098 = vmatprep.mubr.bf16.mxu0 0
        %3099 = vmatmul.mubr.bf16.gmra.mxu0 %v2991
        %v3100 = vpop.f32.mrf.mxu0
        %v3101 = vadd.f32 0.0, %v3100
        %v3102 = vpop.f32.mrf.mxu0
        %v3103 = vpop.f32.mrf.mxu0
        %v3104 = vadd.f32 0.0, %v3103
        %v3105 = vpop.f32.mrf.mxu0
        %3106 = vmatprep.mubr.bf16.mxu0 0
        %3107 = vmatmul.mubr.bf16.gmra.mxu0 %v2994
        %v3108 = vpop.f32.mrf.mxu0
        %v3109 = vadd.f32 0.0, %v3108
        %v3110 = vpop.f32.mrf.mxu0
        %v3111 = vpop.f32.mrf.mxu0
        %v3112 = vadd.f32 0.0, %v3111
        %v3113 = vpop.f32.mrf.mxu0
        %3114 = vmatprep.mubr.bf16.mxu0 0
        %3115 = vmatmul.mubr.bf16.gmra.mxu0 %v2997
        %v3116 = vpop.f32.mrf.mxu0
        %v3117 = vadd.f32 0.0, %v3116
        %v3118 = vpop.f32.mrf.mxu0
        %v3119 = vpop.f32.mrf.mxu0
        %v3120 = vadd.f32 0.0, %v3119
        %v3121 = vpop.f32.mrf.mxu0
        %3122 = vmatprep.mubr.bf16.mxu0 0
        %3123 = vmatmul.mubr.bf16.gmra.mxu0 %v3000
        %v3124 = vpop.f32.mrf.mxu0
        %v3125 = vadd.f32 0.0, %v3124
        %v3126 = vpop.f32.mrf.mxu0
        %v3127 = vpop.f32.mrf.mxu0
        %v3128 = vadd.f32 0.0, %v3127
        %v3129 = vpop.f32.mrf.mxu0
        %3130 = vmatprep.mubr.bf16.mxu0 0
        %3131 = vmatmul.mubr.bf16.gmra.mxu0 %v3003
        %v3132 = vpop.f32.mrf.mxu0
        %v3133 = vadd.f32 0.0, %v3132
        %v3134 = vpop.f32.mrf.mxu0
        %v3135 = vpop.f32.mrf.mxu0
        %v3136 = vadd.f32 0.0, %v3135
        %v3137 = vpop.f32.mrf.mxu0
        %3138 = vmatprep.mubr.bf16.mxu0 0
        %3139 = vmatmul.mubr.bf16.gmra.mxu0 %v3006
        %v3140 = vpop.f32.mrf.mxu0
        %v3141 = vadd.f32 0.0, %v3140
        %v3142 = vpop.f32.mrf.mxu0
        %v3143 = vpop.f32.mrf.mxu0
        %v3144 = vadd.f32 0.0, %v3143
        %v3145 = vpop.f32.mrf.mxu0
        %3146 = vmatprep.mubr.bf16.mxu0 0
        %3147 = vmatmul.mubr.bf16.gmra.mxu0 %v3009
        %v3148 = vpop.f32.mrf.mxu0
        %v3149 = vadd.f32 0.0, %v3148
        %v3150 = vpop.f32.mrf.mxu0
        %v3151 = vpop.f32.mrf.mxu0
        %v3152 = vadd.f32 0.0, %v3151
        %v3153 = vpop.f32.mrf.mxu0
        %3154 = vmatprep.mubr.bf16.mxu0 0
        %3155 = vmatmul.mubr.bf16.gmra.mxu0 %v3012
        %v3156 = vpop.f32.mrf.mxu0
        %v3157 = vadd.f32 0.0, %v3156
        %v3158 = vpop.f32.mrf.mxu0
        %v3159 = vpop.f32.mrf.mxu0
        %v3160 = vadd.f32 0.0, %v3159
        %v3161 = vpop.f32.mrf.mxu0
        %3162 = vmatprep.mubr.bf16.mxu0 0
        %3163 = vmatmul.mubr.bf16.gmra.mxu0 %v3015
        %v3164 = vpop.f32.mrf.mxu0
        %v3165 = vadd.f32 0.0, %v3164
        %v3166 = vpop.f32.mrf.mxu0
        %v3167 = vpop.f32.mrf.mxu0
        %v3168 = vadd.f32 0.0, %v3167
        %v3169 = vpop.f32.mrf.mxu0
        %3170 = vmatprep.mubr.bf16.mxu0 0
        %3171 = vmatmul.mubr.bf16.gmra.mxu0 %v3018
        %v3172 = vpop.f32.mrf.mxu0
        %v3173 = vadd.f32 0.0, %v3172
        %v3174 = vpop.f32.mrf.mxu0
        %v3175 = vpop.f32.mrf.mxu0
        %v3176 = vadd.f32 0.0, %v3175
        %v3177 = vpop.f32.mrf.mxu0
        %3178 = vmatprep.mubr.bf16.mxu0 0
        %3179 = vmatmul.mubr.bf16.gmra.mxu0 %v3021
        %v3180 = vpop.f32.mrf.mxu0
        %v3181 = vadd.f32 0.0, %v3180
        %v3182 = vpop.f32.mrf.mxu0
        %v3183 = vpop.f32.mrf.mxu0
        %v3184 = vadd.f32 0.0, %v3183
        %v3185 = vpop.f32.mrf.mxu0
        %3186 = vdwg.mxu0
        %v3187 = vadd.f32 %v2717, %v3061
        %v3188 = vadd.f32 %v2718, %v3064
        %v3189 = vadd.f32 %v2719, %v3069
        %v3190 = vadd.f32 %v2720, %v3072
        %v3191 = vadd.f32 %v2721, %v3077
        %v3192 = vadd.f32 %v2722, %v3080
        %v3193 = vadd.f32 %v2723, %v3085
        %v3194 = vadd.f32 %v2724, %v3088
        %v3195 = vadd.f32 %v2725, %v3093
        %v3196 = vadd.f32 %v2726, %v3096
        %v3197 = vadd.f32 %v2727, %v3101
        %v3198 = vadd.f32 %v2728, %v3104
        %v3199 = vadd.f32 %v2729, %v3109
        %v3200 = vadd.f32 %v2730, %v3112
        %v3201 = vadd.f32 %v2731, %v3117
        %v3202 = vadd.f32 %v2732, %v3120
        %v3203 = vadd.f32 %v2733, %v3125
        %v3204 = vadd.f32 %v2734, %v3128
        %v3205 = vadd.f32 %v2735, %v3133
        %v3206 = vadd.f32 %v2736, %v3136
        %v3207 = vadd.f32 %v2737, %v3141
        %v3208 = vadd.f32 %v2738, %v3144
        %v3209 = vadd.f32 %v2739, %v3149
        %v3210 = vadd.f32 %v2740, %v3152
        %v3211 = vadd.f32 %v2741, %v3157
        %v3212 = vadd.f32 %v2742, %v3160
        %v3213 = vadd.f32 %v2743, %v3165
        %v3214 = vadd.f32 %v2744, %v3168
        %v3215 = vadd.f32 %v2745, %v3173
        %v3216 = vadd.f32 %v2746, %v3176
        %v3217 = vadd.f32 %v2747, %v3181
        %v3218 = vadd.f32 %v2748, %v3184
        %s3219 = scalar_lea.vmem %s206, 24
        %v3220 = vld [vmem:[%s3219] sm:$0xf]
        %v3221 = vld [vmem:[%s3219 + $0x4] sm:$0xf]
        %v3222 = vld [vmem:[%s3219 + $0xc] sm:$0xf]
        %v3223 = vld [vmem:[%s3219 + $0x10] sm:$0xf]
        %v3224 = vld [vmem:[%s3219 + $0x18] sm:$0xf]
        %v3225 = vld [vmem:[%s3219 + $0x1c] sm:$0xf]
        %v3226 = vld [vmem:[%s3219 + $0x24] sm:$0xf]
        %v3227 = vld [vmem:[%s3219 + $0x28] sm:$0xf]
        %v3228 = vld [vmem:[%s3219 + $0x30] sm:$0xf]
        %v3229 = vld [vmem:[%s3219 + $0x34] sm:$0xf]
        %v3230 = vld [vmem:[%s3219 + $0x3c] sm:$0xf]
        %v3231 = vld [vmem:[%s3219 + $0x40] sm:$0xf]
        %v3232 = vld [vmem:[%s3219 + $0x48] sm:$0xf]
        %v3233 = vld [vmem:[%s3219 + $0x4c] sm:$0xf]
        %v3234 = vld [vmem:[%s3219 + $0x54] sm:$0xf]
        %v3235 = vld [vmem:[%s3219 + $0x58] sm:$0xf]
        %v3236 = vld [vmem:[%s3219 + $0x60] sm:$0xf]
        %v3237 = vld [vmem:[%s3219 + $0x64] sm:$0xf]
        %v3238 = vld [vmem:[%s3219 + $0x6c] sm:$0xf]
        %v3239 = vld [vmem:[%s3219 + $0x70] sm:$0xf]
        %v3240 = vld [vmem:[%s3219 + $0x78] sm:$0xf]
        %v3241 = vld [vmem:[%s3219 + $0x7c] sm:$0xf]
        %v3242 = vld [vmem:[%s3219 + $0x84] sm:$0xf]
        %v3243 = vld [vmem:[%s3219 + $0x88] sm:$0xf]
        %v3244 = vld [vmem:[%s3219 + $0x90] sm:$0xf]
        %v3245 = vld [vmem:[%s3219 + $0x94] sm:$0xf]
        %v3246 = vld [vmem:[%s3219 + $0x9c] sm:$0xf]
        %v3247 = vld [vmem:[%s3219 + $0xa0] sm:$0xf]
        %v3248 = vld [vmem:[%s3219 + $0xa8] sm:$0xf]
        %v3249 = vld [vmem:[%s3219 + $0xac] sm:$0xf]
        %v3250 = vld [vmem:[%s3219 + $0xb4] sm:$0xf]
        %v3251 = vld [vmem:[%s3219 + $0xb8] sm:$0xf]
        %s3252 = scalar_lea.vmem %s210, 12
        %v3253 = vld [vmem:[%s3252] sm:$0x3]
        %v3286 = vunpack.c.l.b16 %v3220
        %v3287 = vunpack.c.l.b16 %v3221
        %v3288 = vunpack.c.l.b16 %v3222
        %v3289 = vunpack.c.l.b16 %v3223
        %v3290 = vunpack.c.l.b16 %v3224
        %v3291 = vunpack.c.l.b16 %v3225
        %v3292 = vunpack.c.l.b16 %v3226
        %v3293 = vunpack.c.l.b16 %v3227
        %v3294 = vunpack.c.l.b16 %v3228
        %v3295 = vunpack.c.l.b16 %v3229
        %v3296 = vunpack.c.l.b16 %v3230
        %v3297 = vunpack.c.l.b16 %v3231
        %v3298 = vunpack.c.l.b16 %v3232
        %v3299 = vunpack.c.l.b16 %v3233
        %v3300 = vunpack.c.l.b16 %v3234
        %v3301 = vunpack.c.l.b16 %v3235
        %v3302 = vunpack.c.l.b16 %v3236
        %v3303 = vunpack.c.l.b16 %v3237
        %v3304 = vunpack.c.l.b16 %v3238
        %v3305 = vunpack.c.l.b16 %v3239
        %v3306 = vunpack.c.l.b16 %v3240
        %v3307 = vunpack.c.l.b16 %v3241
        %v3308 = vunpack.c.l.b16 %v3242
        %v3309 = vunpack.c.l.b16 %v3243
        %v3310 = vunpack.c.l.b16 %v3244
        %v3311 = vunpack.c.l.b16 %v3245
        %v3312 = vunpack.c.l.b16 %v3246
        %v3313 = vunpack.c.l.b16 %v3247
        %v3314 = vunpack.c.l.b16 %v3248
        %v3315 = vunpack.c.l.b16 %v3249
        %v3316 = vunpack.c.l.b16 %v3250
        %v3317 = vunpack.c.l.b16 %v3251
        %v3318 = vpack.c.b16 %v3287, %v3286
        %v3319 = vpack.c.b16 %v3289, %v3288
        %v3320 = vpack.c.b16 %v3291, %v3290
        %v3321 = vpack.c.b16 %v3293, %v3292
        %v3322 = vpack.c.b16 %v3295, %v3294
        %v3323 = vpack.c.b16 %v3297, %v3296
        %v3324 = vpack.c.b16 %v3299, %v3298
        %v3325 = vpack.c.b16 %v3301, %v3300
        %v3326 = vpack.c.b16 %v3303, %v3302
        %v3327 = vpack.c.b16 %v3305, %v3304
        %v3328 = vpack.c.b16 %v3307, %v3306
        %v3329 = vpack.c.b16 %v3309, %v3308
        %v3330 = vpack.c.b16 %v3311, %v3310
        %v3331 = vpack.c.b16 %v3313, %v3312
        %v3332 = vpack.c.b16 %v3315, %v3314
        %v3333 = vpack.c.b16 %v3317, %v3316
        %v3335 = vsel %vm701, %v3318, 0
        %v3338 = vsel %vm701, %v3319, 0
        %v3341 = vsel %vm701, %v3320, 0
        %v3344 = vsel %vm701, %v3321, 0
        %v3347 = vsel %vm701, %v3322, 0
        %v3350 = vsel %vm701, %v3323, 0
        %v3353 = vsel %vm701, %v3324, 0
        %v3356 = vsel %vm701, %v3325, 0
        %v3359 = vsel %vm701, %v3326, 0
        %v3362 = vsel %vm701, %v3327, 0
        %v3365 = vsel %vm701, %v3328, 0
        %v3368 = vsel %vm701, %v3329, 0
        %v3371 = vsel %vm701, %v3330, 0
        %v3374 = vsel %vm701, %v3331, 0
        %v3377 = vsel %vm701, %v3332, 0
        %v3380 = vsel %vm701, %v3333, 0
        %v3383 = vsel %vm750, %v3253, 0
        %3385 = vmatprep.subr.bf16.mxu0 0
        %3386 = vmatpush1.bf16.msra.mxu0 0
        %3387 = vmatprep.subr.bf16.mxu0 0
        %3388 = vmatpush1.bf16.msra.mxu0 0
        %3389 = vmatprep.subr.bf16.mxu0 0
        %3390 = vmatpush1.bf16.msra.mxu0 0
        %3391 = vmatprep.subr.bf16.mxu0 0
        %3392 = vmatpush1.bf16.msra.mxu0 0
        %3393 = vmatprep.subr.bf16.mxu0 0
        %3394 = vmatpush1.bf16.msra.mxu0 0
        %3395 = vmatprep.subr.bf16.mxu0 0
        %3396 = vmatpush1.bf16.msra.mxu0 0
        %3397 = vmatprep.subr.bf16.mxu0 0
        %3398 = vmatpush1.bf16.msra.mxu0 0
        %3399 = vmatprep.subr.bf16.mxu0 0
        %3400 = vmatpush1.bf16.msra.mxu0 %v3383
        %3401 = vmatprep.subr.bf16.mxu0 0
        %3402 = vmatpush2.bf16.msra.mxu0 0
        %3403 = vmatprep.subr.bf16.mxu0 0
        %3404 = vmatpush2.bf16.msra.mxu0 0
        %3405 = vmatprep.subr.bf16.mxu0 0
        %3406 = vmatpush2.bf16.msra.mxu0 0
        %3407 = vmatprep.subr.bf16.mxu0 0
        %3408 = vmatpush2.bf16.msra.mxu0 0
        %3409 = vmatprep.subr.bf16.mxu0 0
        %3410 = vmatpush2.bf16.msra.mxu0 0
        %3411 = vmatprep.subr.bf16.mxu0 0
        %3412 = vmatpush2.bf16.msra.mxu0 0
        %3413 = vmatprep.subr.bf16.mxu0 0
        %3414 = vmatpush2.bf16.msra.mxu0 0
        %3415 = vmatprep.subr.bf16.mxu0 0
        %3416 = vmatpush2.bf16.msra.mxu0 0
        %3417 = vmatprep.mubr.bf16.mxu0 0
        %3418 = vmatmul.mubr.bf16.gmra.mxu0 %v3335
        %v3419 = vpop.f32.mrf.mxu0
        %v3420 = vadd.f32 0.0, %v3419
        %v3421 = vpop.f32.mrf.mxu0
        %v3422 = vpop.f32.mrf.mxu0
        %v3423 = vadd.f32 0.0, %v3422
        %v3424 = vpop.f32.mrf.mxu0
        %3425 = vmatprep.mubr.bf16.mxu0 0
        %3426 = vmatmul.mubr.bf16.gmra.mxu0 %v3338
        %v3427 = vpop.f32.mrf.mxu0
        %v3428 = vadd.f32 0.0, %v3427
        %v3429 = vpop.f32.mrf.mxu0
        %v3430 = vpop.f32.mrf.mxu0
        %v3431 = vadd.f32 0.0, %v3430
        %v3432 = vpop.f32.mrf.mxu0
        %3433 = vmatprep.mubr.bf16.mxu0 0
        %3434 = vmatmul.mubr.bf16.gmra.mxu0 %v3341
        %v3435 = vpop.f32.mrf.mxu0
        %v3436 = vadd.f32 0.0, %v3435
        %v3437 = vpop.f32.mrf.mxu0
        %v3438 = vpop.f32.mrf.mxu0
        %v3439 = vadd.f32 0.0, %v3438
        %v3440 = vpop.f32.mrf.mxu0
        %3441 = vmatprep.mubr.bf16.mxu0 0
        %3442 = vmatmul.mubr.bf16.gmra.mxu0 %v3344
        %v3443 = vpop.f32.mrf.mxu0
        %v3444 = vadd.f32 0.0, %v3443
        %v3445 = vpop.f32.mrf.mxu0
        %v3446 = vpop.f32.mrf.mxu0
        %v3447 = vadd.f32 0.0, %v3446
        %v3448 = vpop.f32.mrf.mxu0
        %3449 = vmatprep.mubr.bf16.mxu0 0
        %3450 = vmatmul.mubr.bf16.gmra.mxu0 %v3347
        %v3451 = vpop.f32.mrf.mxu0
        %v3452 = vadd.f32 0.0, %v3451
        %v3453 = vpop.f32.mrf.mxu0
        %v3454 = vpop.f32.mrf.mxu0
        %v3455 = vadd.f32 0.0, %v3454
        %v3456 = vpop.f32.mrf.mxu0
        %3457 = vmatprep.mubr.bf16.mxu0 0
        %3458 = vmatmul.mubr.bf16.gmra.mxu0 %v3350
        %v3459 = vpop.f32.mrf.mxu0
        %v3460 = vadd.f32 0.0, %v3459
        %v3461 = vpop.f32.mrf.mxu0
        %v3462 = vpop.f32.mrf.mxu0
        %v3463 = vadd.f32 0.0, %v3462
        %v3464 = vpop.f32.mrf.mxu0
        %3465 = vmatprep.mubr.bf16.mxu0 0
        %3466 = vmatmul.mubr.bf16.gmra.mxu0 %v3353
        %v3467 = vpop.f32.mrf.mxu0
        %v3468 = vadd.f32 0.0, %v3467
        %v3469 = vpop.f32.mrf.mxu0
        %v3470 = vpop.f32.mrf.mxu0
        %v3471 = vadd.f32 0.0, %v3470
        %v3472 = vpop.f32.mrf.mxu0
        %3473 = vmatprep.mubr.bf16.mxu0 0
        %3474 = vmatmul.mubr.bf16.gmra.mxu0 %v3356
        %v3475 = vpop.f32.mrf.mxu0
        %v3476 = vadd.f32 0.0, %v3475
        %v3477 = vpop.f32.mrf.mxu0
        %v3478 = vpop.f32.mrf.mxu0
        %v3479 = vadd.f32 0.0, %v3478
        %v3480 = vpop.f32.mrf.mxu0
        %3481 = vmatprep.mubr.bf16.mxu0 0
        %3482 = vmatmul.mubr.bf16.gmra.mxu0 %v3359
        %v3483 = vpop.f32.mrf.mxu0
        %v3484 = vadd.f32 0.0, %v3483
        %v3485 = vpop.f32.mrf.mxu0
        %v3486 = vpop.f32.mrf.mxu0
        %v3487 = vadd.f32 0.0, %v3486
        %v3488 = vpop.f32.mrf.mxu0
        %3489 = vmatprep.mubr.bf16.mxu0 0
        %3490 = vmatmul.mubr.bf16.gmra.mxu0 %v3362
        %v3491 = vpop.f32.mrf.mxu0
        %v3492 = vadd.f32 0.0, %v3491
        %v3493 = vpop.f32.mrf.mxu0
        %v3494 = vpop.f32.mrf.mxu0
        %v3495 = vadd.f32 0.0, %v3494
        %v3496 = vpop.f32.mrf.mxu0
        %3497 = vmatprep.mubr.bf16.mxu0 0
        %3498 = vmatmul.mubr.bf16.gmra.mxu0 %v3365
        %v3499 = vpop.f32.mrf.mxu0
        %v3500 = vadd.f32 0.0, %v3499
        %v3501 = vpop.f32.mrf.mxu0
        %v3502 = vpop.f32.mrf.mxu0
        %v3503 = vadd.f32 0.0, %v3502
        %v3504 = vpop.f32.mrf.mxu0
        %3505 = vmatprep.mubr.bf16.mxu0 0
        %3506 = vmatmul.mubr.bf16.gmra.mxu0 %v3368
        %v3507 = vpop.f32.mrf.mxu0
        %v3508 = vadd.f32 0.0, %v3507
        %v3509 = vpop.f32.mrf.mxu0
        %v3510 = vpop.f32.mrf.mxu0
        %v3511 = vadd.f32 0.0, %v3510
        %v3512 = vpop.f32.mrf.mxu0
        %3513 = vmatprep.mubr.bf16.mxu0 0
        %3514 = vmatmul.mubr.bf16.gmra.mxu0 %v3371
        %v3515 = vpop.f32.mrf.mxu0
        %v3516 = vadd.f32 0.0, %v3515
        %v3517 = vpop.f32.mrf.mxu0
        %v3518 = vpop.f32.mrf.mxu0
        %v3519 = vadd.f32 0.0, %v3518
        %v3520 = vpop.f32.mrf.mxu0
        %3521 = vmatprep.mubr.bf16.mxu0 0
        %3522 = vmatmul.mubr.bf16.gmra.mxu0 %v3374
        %v3523 = vpop.f32.mrf.mxu0
        %v3524 = vadd.f32 0.0, %v3523
        %v3525 = vpop.f32.mrf.mxu0
        %v3526 = vpop.f32.mrf.mxu0
        %v3527 = vadd.f32 0.0, %v3526
        %v3528 = vpop.f32.mrf.mxu0
        %3529 = vmatprep.mubr.bf16.mxu0 0
        %3530 = vmatmul.mubr.bf16.gmra.mxu0 %v3377
        %v3531 = vpop.f32.mrf.mxu0
        %v3532 = vadd.f32 0.0, %v3531
        %v3533 = vpop.f32.mrf.mxu0
        %v3534 = vpop.f32.mrf.mxu0
        %v3535 = vadd.f32 0.0, %v3534
        %v3536 = vpop.f32.mrf.mxu0
        %3537 = vmatprep.mubr.bf16.mxu0 0
        %3538 = vmatmul.mubr.bf16.gmra.mxu0 %v3380
        %v3539 = vpop.f32.mrf.mxu0
        %v3540 = vadd.f32 0.0, %v3539
        %v3541 = vpop.f32.mrf.mxu0
        %v3542 = vpop.f32.mrf.mxu0
        %v3543 = vadd.f32 0.0, %v3542
        %v3544 = vpop.f32.mrf.mxu0
        %3545 = vdwg.mxu0
        %v3546 = vadd.f32 %v3187, %v3420
        %v3547 = vadd.f32 %v3188, %v3423
        %v3548 = vadd.f32 %v3189, %v3428
        %v3549 = vadd.f32 %v3190, %v3431
        %v3550 = vadd.f32 %v3191, %v3436
        %v3551 = vadd.f32 %v3192, %v3439
        %v3552 = vadd.f32 %v3193, %v3444
        %v3553 = vadd.f32 %v3194, %v3447
        %v3554 = vadd.f32 %v3195, %v3452
        %v3555 = vadd.f32 %v3196, %v3455
        %v3556 = vadd.f32 %v3197, %v3460
        %v3557 = vadd.f32 %v3198, %v3463
        %v3558 = vadd.f32 %v3199, %v3468
        %v3559 = vadd.f32 %v3200, %v3471
        %v3560 = vadd.f32 %v3201, %v3476
        %v3561 = vadd.f32 %v3202, %v3479
        %v3562 = vadd.f32 %v3203, %v3484
        %v3563 = vadd.f32 %v3204, %v3487
        %v3564 = vadd.f32 %v3205, %v3492
        %v3565 = vadd.f32 %v3206, %v3495
        %v3566 = vadd.f32 %v3207, %v3500
        %v3567 = vadd.f32 %v3208, %v3503
        %v3568 = vadd.f32 %v3209, %v3508
        %v3569 = vadd.f32 %v3210, %v3511
        %v3570 = vadd.f32 %v3211, %v3516
        %v3571 = vadd.f32 %v3212, %v3519
        %v3572 = vadd.f32 %v3213, %v3524
        %v3573 = vadd.f32 %v3214, %v3527
        %v3574 = vadd.f32 %v3215, %v3532
        %v3575 = vadd.f32 %v3216, %v3535
        %v3576 = vadd.f32 %v3217, %v3540
        %v3577 = vadd.f32 %v3218, %v3543
        %v3578 = vld [vmem:[%s3219] sm:$0xf]
        %v3579 = vld [vmem:[%s3219 + $0x4] sm:$0xf]
        %v3580 = vld [vmem:[%s3219 + $0x8] sm:$0x1]
        %v3581 = vld [vmem:[%s3219 + $0xc] sm:$0xf]
        %v3582 = vld [vmem:[%s3219 + $0x10] sm:$0xf]
        %v3583 = vld [vmem:[%s3219 + $0x14] sm:$0x1]
        %v3584 = vld [vmem:[%s3219 + $0x18] sm:$0xf]
        %v3585 = vld [vmem:[%s3219 + $0x1c] sm:$0xf]
        %v3586 = vld [vmem:[%s3219 + $0x20] sm:$0x1]
        %v3587 = vld [vmem:[%s3219 + $0x24] sm:$0xf]
        %v3588 = vld [vmem:[%s3219 + $0x28] sm:$0xf]
        %v3589 = vld [vmem:[%s3219 + $0x2c] sm:$0x1]
        %v3590 = vld [vmem:[%s3219 + $0x30] sm:$0xf]
        %v3591 = vld [vmem:[%s3219 + $0x34] sm:$0xf]
        %v3592 = vld [vmem:[%s3219 + $0x38] sm:$0x1]
        %v3593 = vld [vmem:[%s3219 + $0x3c] sm:$0xf]
        %v3594 = vld [vmem:[%s3219 + $0x40] sm:$0xf]
        %v3595 = vld [vmem:[%s3219 + $0x44] sm:$0x1]
        %v3596 = vld [vmem:[%s3219 + $0x48] sm:$0xf]
        %v3597 = vld [vmem:[%s3219 + $0x4c] sm:$0xf]
        %v3598 = vld [vmem:[%s3219 + $0x50] sm:$0x1]
        %v3599 = vld [vmem:[%s3219 + $0x54] sm:$0xf]
        %v3600 = vld [vmem:[%s3219 + $0x58] sm:$0xf]
        %v3601 = vld [vmem:[%s3219 + $0x5c] sm:$0x1]
        %v3602 = vld [vmem:[%s3219 + $0x60] sm:$0xf]
        %v3603 = vld [vmem:[%s3219 + $0x64] sm:$0xf]
        %v3604 = vld [vmem:[%s3219 + $0x68] sm:$0x1]
        %v3605 = vld [vmem:[%s3219 + $0x6c] sm:$0xf]
        %v3606 = vld [vmem:[%s3219 + $0x70] sm:$0xf]
        %v3607 = vld [vmem:[%s3219 + $0x74] sm:$0x1]
        %v3608 = vld [vmem:[%s3219 + $0x78] sm:$0xf]
        %v3609 = vld [vmem:[%s3219 + $0x7c] sm:$0xf]
        %v3610 = vld [vmem:[%s3219 + $0x80] sm:$0x1]
        %v3611 = vld [vmem:[%s3219 + $0x84] sm:$0xf]
        %v3612 = vld [vmem:[%s3219 + $0x88] sm:$0xf]
        %v3613 = vld [vmem:[%s3219 + $0x8c] sm:$0x1]
        %v3614 = vld [vmem:[%s3219 + $0x90] sm:$0xf]
        %v3615 = vld [vmem:[%s3219 + $0x94] sm:$0xf]
        %v3616 = vld [vmem:[%s3219 + $0x98] sm:$0x1]
        %v3617 = vld [vmem:[%s3219 + $0x9c] sm:$0xf]
        %v3618 = vld [vmem:[%s3219 + $0xa0] sm:$0xf]
        %v3619 = vld [vmem:[%s3219 + $0xa4] sm:$0x1]
        %v3620 = vld [vmem:[%s3219 + $0xa8] sm:$0xf]
        %v3621 = vld [vmem:[%s3219 + $0xac] sm:$0xf]
        %v3622 = vld [vmem:[%s3219 + $0xb0] sm:$0x1]
        %v3623 = vld [vmem:[%s3219 + $0xb4] sm:$0xf]
        %v3624 = vld [vmem:[%s3219 + $0xb8] sm:$0xf]
        %v3625 = vld [vmem:[%s3219 + $0xbc] sm:$0x1]
        %v3627 = vshrl.u32 %v3578, 16
        %v3629 = vrot.slane %v3627, 4
        %v3630 = vshll.u32 %v3578, 16
        %v3632 = vrot.slane %v3630, 5
        %v3633 = vor.u32 %v3629, %v3632
        %v3634 = vrot.slane %v3633, 4
        %v3636 = vshll.u32 %v3579, 16
        %v3638 = vrot.slane %v3636, 5
        %v3639 = vsel %vm266, %v3634, %v3638
        %v3640 = vshrl.u32 %v3579, 16
        %v3642 = vrot.slane %v3640, 4
        %v3643 = vor.u32 %v3642, %v3638
        %v3644 = vrot.slane %v3643, 4
        %v3646 = vshll.u32 %v3580, 16
        %v3648 = vrot.slane %v3646, 5
        %v3649 = vsel %vm266, %v3644, %v3648
        %v3651 = vshrl.u32 %v3581, 16
        %v3653 = vrot.slane %v3651, 4
        %v3654 = vshll.u32 %v3581, 16
        %v3656 = vrot.slane %v3654, 5
        %v3657 = vor.u32 %v3653, %v3656
        %v3658 = vrot.slane %v3657, 4
        %v3660 = vshll.u32 %v3582, 16
        %v3662 = vrot.slane %v3660, 5
        %v3663 = vsel %vm266, %v3658, %v3662
        %v3664 = vshrl.u32 %v3582, 16
        %v3666 = vrot.slane %v3664, 4
        %v3667 = vor.u32 %v3666, %v3662
        %v3668 = vrot.slane %v3667, 4
        %v3670 = vshll.u32 %v3583, 16
        %v3672 = vrot.slane %v3670, 5
        %v3673 = vsel %vm266, %v3668, %v3672
        %v3675 = vshrl.u32 %v3584, 16
        %v3677 = vrot.slane %v3675, 4
        %v3678 = vshll.u32 %v3584, 16
        %v3680 = vrot.slane %v3678, 5
        %v3681 = vor.u32 %v3677, %v3680
        %v3682 = vrot.slane %v3681, 4
        %v3684 = vshll.u32 %v3585, 16
        %v3686 = vrot.slane %v3684, 5
        %v3687 = vsel %vm266, %v3682, %v3686
        %v3688 = vshrl.u32 %v3585, 16
        %v3690 = vrot.slane %v3688, 4
        %v3691 = vor.u32 %v3690, %v3686
        %v3692 = vrot.slane %v3691, 4
        %v3694 = vshll.u32 %v3586, 16
        %v3696 = vrot.slane %v3694, 5
        %v3697 = vsel %vm266, %v3692, %v3696
        %v3699 = vshrl.u32 %v3587, 16
        %v3701 = vrot.slane %v3699, 4
        %v3702 = vshll.u32 %v3587, 16
        %v3704 = vrot.slane %v3702, 5
        %v3705 = vor.u32 %v3701, %v3704
        %v3706 = vrot.slane %v3705, 4
        %v3708 = vshll.u32 %v3588, 16
        %v3710 = vrot.slane %v3708, 5
        %v3711 = vsel %vm266, %v3706, %v3710
        %v3712 = vshrl.u32 %v3588, 16
        %v3714 = vrot.slane %v3712, 4
        %v3715 = vor.u32 %v3714, %v3710
        %v3716 = vrot.slane %v3715, 4
        %v3718 = vshll.u32 %v3589, 16
        %v3720 = vrot.slane %v3718, 5
        %v3721 = vsel %vm266, %v3716, %v3720
        %v3723 = vshrl.u32 %v3590, 16
        %v3725 = vrot.slane %v3723, 4
        %v3726 = vshll.u32 %v3590, 16
        %v3728 = vrot.slane %v3726, 5
        %v3729 = vor.u32 %v3725, %v3728
        %v3730 = vrot.slane %v3729, 4
        %v3732 = vshll.u32 %v3591, 16
        %v3734 = vrot.slane %v3732, 5
        %v3735 = vsel %vm266, %v3730, %v3734
        %v3736 = vshrl.u32 %v3591, 16
        %v3738 = vrot.slane %v3736, 4
        %v3739 = vor.u32 %v3738, %v3734
        %v3740 = vrot.slane %v3739, 4
        %v3742 = vshll.u32 %v3592, 16
        %v3744 = vrot.slane %v3742, 5
        %v3745 = vsel %vm266, %v3740, %v3744
        %v3747 = vshrl.u32 %v3593, 16
        %v3749 = vrot.slane %v3747, 4
        %v3750 = vshll.u32 %v3593, 16
        %v3752 = vrot.slane %v3750, 5
        %v3753 = vor.u32 %v3749, %v3752
        %v3754 = vrot.slane %v3753, 4
        %v3756 = vshll.u32 %v3594, 16
        %v3758 = vrot.slane %v3756, 5
        %v3759 = vsel %vm266, %v3754, %v3758
        %v3760 = vshrl.u32 %v3594, 16
        %v3762 = vrot.slane %v3760, 4
        %v3763 = vor.u32 %v3762, %v3758
        %v3764 = vrot.slane %v3763, 4
        %v3766 = vshll.u32 %v3595, 16
        %v3768 = vrot.slane %v3766, 5
        %v3769 = vsel %vm266, %v3764, %v3768
        %v3771 = vshrl.u32 %v3596, 16
        %v3773 = vrot.slane %v3771, 4
        %v3774 = vshll.u32 %v3596, 16
        %v3776 = vrot.slane %v3774, 5
        %v3777 = vor.u32 %v3773, %v3776
        %v3778 = vrot.slane %v3777, 4
        %v3780 = vshll.u32 %v3597, 16
        %v3782 = vrot.slane %v3780, 5
        %v3783 = vsel %vm266, %v3778, %v3782
        %v3784 = vshrl.u32 %v3597, 16
        %v3786 = vrot.slane %v3784, 4
        %v3787 = vor.u32 %v3786, %v3782
        %v3788 = vrot.slane %v3787, 4
        %v3790 = vshll.u32 %v3598, 16
        %v3792 = vrot.slane %v3790, 5
        %v3793 = vsel %vm266, %v3788, %v3792
        %v3795 = vshrl.u32 %v3599, 16
        %v3797 = vrot.slane %v3795, 4
        %v3798 = vshll.u32 %v3599, 16
        %v3800 = vrot.slane %v3798, 5
        %v3801 = vor.u32 %v3797, %v3800
        %v3802 = vrot.slane %v3801, 4
        %v3804 = vshll.u32 %v3600, 16
        %v3806 = vrot.slane %v3804, 5
        %v3807 = vsel %vm266, %v3802, %v3806
        %v3808 = vshrl.u32 %v3600, 16
        %v3810 = vrot.slane %v3808, 4
        %v3811 = vor.u32 %v3810, %v3806
        %v3812 = vrot.slane %v3811, 4
        %v3814 = vshll.u32 %v3601, 16
        %v3816 = vrot.slane %v3814, 5
        %v3817 = vsel %vm266, %v3812, %v3816
        %v3819 = vshrl.u32 %v3602, 16
        %v3821 = vrot.slane %v3819, 4
        %v3822 = vshll.u32 %v3602, 16
        %v3824 = vrot.slane %v3822, 5
        %v3825 = vor.u32 %v3821, %v3824
        %v3826 = vrot.slane %v3825, 4
        %v3828 = vshll.u32 %v3603, 16
        %v3830 = vrot.slane %v3828, 5
        %v3831 = vsel %vm266, %v3826, %v3830
        %v3832 = vshrl.u32 %v3603, 16
        %v3834 = vrot.slane %v3832, 4
        %v3835 = vor.u32 %v3834, %v3830
        %v3836 = vrot.slane %v3835, 4
        %v3838 = vshll.u32 %v3604, 16
        %v3840 = vrot.slane %v3838, 5
        %v3841 = vsel %vm266, %v3836, %v3840
        %v3843 = vshrl.u32 %v3605, 16
        %v3845 = vrot.slane %v3843, 4
        %v3846 = vshll.u32 %v3605, 16
        %v3848 = vrot.slane %v3846, 5
        %v3849 = vor.u32 %v3845, %v3848
        %v3850 = vrot.slane %v3849, 4
        %v3852 = vshll.u32 %v3606, 16
        %v3854 = vrot.slane %v3852, 5
        %v3855 = vsel %vm266, %v3850, %v3854
        %v3856 = vshrl.u32 %v3606, 16
        %v3858 = vrot.slane %v3856, 4
        %v3859 = vor.u32 %v3858, %v3854
        %v3860 = vrot.slane %v3859, 4
        %v3862 = vshll.u32 %v3607, 16
        %v3864 = vrot.slane %v3862, 5
        %v3865 = vsel %vm266, %v3860, %v3864
        %v3867 = vshrl.u32 %v3608, 16
        %v3869 = vrot.slane %v3867, 4
        %v3870 = vshll.u32 %v3608, 16
        %v3872 = vrot.slane %v3870, 5
        %v3873 = vor.u32 %v3869, %v3872
        %v3874 = vrot.slane %v3873, 4
        %v3876 = vshll.u32 %v3609, 16
        %v3878 = vrot.slane %v3876, 5
        %v3879 = vsel %vm266, %v3874, %v3878
        %v3880 = vshrl.u32 %v3609, 16
        %v3882 = vrot.slane %v3880, 4
        %v3883 = vor.u32 %v3882, %v3878
        %v3884 = vrot.slane %v3883, 4
        %v3886 = vshll.u32 %v3610, 16
        %v3888 = vrot.slane %v3886, 5
        %v3889 = vsel %vm266, %v3884, %v3888
        %v3891 = vshrl.u32 %v3611, 16
        %v3893 = vrot.slane %v3891, 4
        %v3894 = vshll.u32 %v3611, 16
        %v3896 = vrot.slane %v3894, 5
        %v3897 = vor.u32 %v3893, %v3896
        %v3898 = vrot.slane %v3897, 4
        %v3900 = vshll.u32 %v3612, 16
        %v3902 = vrot.slane %v3900, 5
        %v3903 = vsel %vm266, %v3898, %v3902
        %v3904 = vshrl.u32 %v3612, 16
        %v3906 = vrot.slane %v3904, 4
        %v3907 = vor.u32 %v3906, %v3902
        %v3908 = vrot.slane %v3907, 4
        %v3910 = vshll.u32 %v3613, 16
        %v3912 = vrot.slane %v3910, 5
        %v3913 = vsel %vm266, %v3908, %v3912
        %v3915 = vshrl.u32 %v3614, 16
        %v3917 = vrot.slane %v3915, 4
        %v3918 = vshll.u32 %v3614, 16
        %v3920 = vrot.slane %v3918, 5
        %v3921 = vor.u32 %v3917, %v3920
        %v3922 = vrot.slane %v3921, 4
        %v3924 = vshll.u32 %v3615, 16
        %v3926 = vrot.slane %v3924, 5
        %v3927 = vsel %vm266, %v3922, %v3926
        %v3928 = vshrl.u32 %v3615, 16
        %v3930 = vrot.slane %v3928, 4
        %v3931 = vor.u32 %v3930, %v3926
        %v3932 = vrot.slane %v3931, 4
        %v3934 = vshll.u32 %v3616, 16
        %v3936 = vrot.slane %v3934, 5
        %v3937 = vsel %vm266, %v3932, %v3936
        %v3939 = vshrl.u32 %v3617, 16
        %v3941 = vrot.slane %v3939, 4
        %v3942 = vshll.u32 %v3617, 16
        %v3944 = vrot.slane %v3942, 5
        %v3945 = vor.u32 %v3941, %v3944
        %v3946 = vrot.slane %v3945, 4
        %v3948 = vshll.u32 %v3618, 16
        %v3950 = vrot.slane %v3948, 5
        %v3951 = vsel %vm266, %v3946, %v3950
        %v3952 = vshrl.u32 %v3618, 16
        %v3954 = vrot.slane %v3952, 4
        %v3955 = vor.u32 %v3954, %v3950
        %v3956 = vrot.slane %v3955, 4
        %v3958 = vshll.u32 %v3619, 16
        %v3960 = vrot.slane %v3958, 5
        %v3961 = vsel %vm266, %v3956, %v3960
        %v3963 = vshrl.u32 %v3620, 16
        %v3965 = vrot.slane %v3963, 4
        %v3966 = vshll.u32 %v3620, 16
        %v3968 = vrot.slane %v3966, 5
        %v3969 = vor.u32 %v3965, %v3968
        %v3970 = vrot.slane %v3969, 4
        %v3972 = vshll.u32 %v3621, 16
        %v3974 = vrot.slane %v3972, 5
        %v3975 = vsel %vm266, %v3970, %v3974
        %v3976 = vshrl.u32 %v3621, 16
        %v3978 = vrot.slane %v3976, 4
        %v3979 = vor.u32 %v3978, %v3974
        %v3980 = vrot.slane %v3979, 4
        %v3982 = vshll.u32 %v3622, 16
        %v3984 = vrot.slane %v3982, 5
        %v3985 = vsel %vm266, %v3980, %v3984
        %v3987 = vshrl.u32 %v3623, 16
        %v3989 = vrot.slane %v3987, 4
        %v3990 = vshll.u32 %v3623, 16
        %v3992 = vrot.slane %v3990, 5
        %v3993 = vor.u32 %v3989, %v3992
        %v3994 = vrot.slane %v3993, 4
        %v3996 = vshll.u32 %v3624, 16
        %v3998 = vrot.slane %v3996, 5
        %v3999 = vsel %vm266, %v3994, %v3998
        %v4000 = vshrl.u32 %v3624, 16
        %v4002 = vrot.slane %v4000, 4
        %v4003 = vor.u32 %v4002, %v3998
        %v4004 = vrot.slane %v4003, 4
        %v4006 = vshll.u32 %v3625, 16
        %v4008 = vrot.slane %v4006, 5
        %v4009 = vsel %vm266, %v4004, %v4008
        %s4010 = scalar_lea.vmem %s210, 14
        %v4011 = vld [vmem:[%s4010] sm:$0x3]
        %v4012 = vunpack.c.l.b16 %v3639
        %v4013 = vunpack.c.l.b16 %v3649
        %v4014 = vunpack.c.l.b16 %v3663
        %v4015 = vunpack.c.l.b16 %v3673
        %v4016 = vunpack.c.l.b16 %v3687
        %v4017 = vunpack.c.l.b16 %v3697
        %v4018 = vunpack.c.l.b16 %v3711
        %v4019 = vunpack.c.l.b16 %v3721
        %v4020 = vunpack.c.l.b16 %v3735
        %v4021 = vunpack.c.l.b16 %v3745
        %v4022 = vunpack.c.l.b16 %v3759
        %v4023 = vunpack.c.l.b16 %v3769
        %v4024 = vunpack.c.l.b16 %v3783
        %v4025 = vunpack.c.l.b16 %v3793
        %v4026 = vunpack.c.l.b16 %v3807
        %v4027 = vunpack.c.l.b16 %v3817
        %v4028 = vunpack.c.l.b16 %v3831
        %v4029 = vunpack.c.l.b16 %v3841
        %v4030 = vunpack.c.l.b16 %v3855
        %v4031 = vunpack.c.l.b16 %v3865
        %v4032 = vunpack.c.l.b16 %v3879
        %v4033 = vunpack.c.l.b16 %v3889
        %v4034 = vunpack.c.l.b16 %v3903
        %v4035 = vunpack.c.l.b16 %v3913
        %v4036 = vunpack.c.l.b16 %v3927
        %v4037 = vunpack.c.l.b16 %v3937
        %v4038 = vunpack.c.l.b16 %v3951
        %v4039 = vunpack.c.l.b16 %v3961
        %v4040 = vunpack.c.l.b16 %v3975
        %v4041 = vunpack.c.l.b16 %v3985
        %v4042 = vunpack.c.l.b16 %v3999
        %v4043 = vunpack.c.l.b16 %v4009
        %v4044 = vpack.c.b16 %v4013, %v4012
        %v4045 = vpack.c.b16 %v4015, %v4014
        %v4046 = vpack.c.b16 %v4017, %v4016
        %v4047 = vpack.c.b16 %v4019, %v4018
        %v4048 = vpack.c.b16 %v4021, %v4020
        %v4049 = vpack.c.b16 %v4023, %v4022
        %v4050 = vpack.c.b16 %v4025, %v4024
        %v4051 = vpack.c.b16 %v4027, %v4026
        %v4052 = vpack.c.b16 %v4029, %v4028
        %v4053 = vpack.c.b16 %v4031, %v4030
        %v4054 = vpack.c.b16 %v4033, %v4032
        %v4055 = vpack.c.b16 %v4035, %v4034
        %v4056 = vpack.c.b16 %v4037, %v4036
        %v4057 = vpack.c.b16 %v4039, %v4038
        %v4058 = vpack.c.b16 %v4041, %v4040
        %v4059 = vpack.c.b16 %v4043, %v4042
        %v4061 = vsel %vm701, %v4044, 0
        %v4064 = vsel %vm701, %v4045, 0
        %v4067 = vsel %vm701, %v4046, 0
        %v4070 = vsel %vm701, %v4047, 0
        %v4073 = vsel %vm701, %v4048, 0
        %v4076 = vsel %vm701, %v4049, 0
        %v4079 = vsel %vm701, %v4050, 0
        %v4082 = vsel %vm701, %v4051, 0
        %v4085 = vsel %vm701, %v4052, 0
        %v4088 = vsel %vm701, %v4053, 0
        %v4091 = vsel %vm701, %v4054, 0
        %v4094 = vsel %vm701, %v4055, 0
        %v4097 = vsel %vm701, %v4056, 0
        %v4100 = vsel %vm701, %v4057, 0
        %v4103 = vsel %vm701, %v4058, 0
        %v4106 = vsel %vm701, %v4059, 0
        %v4109 = vsel %vm750, %v4011, 0
        %4111 = vmatprep.subr.bf16.mxu0 0
        %4112 = vmatpush1.bf16.msra.mxu0 0
        %4113 = vmatprep.subr.bf16.mxu0 0
        %4114 = vmatpush1.bf16.msra.mxu0 0
        %4115 = vmatprep.subr.bf16.mxu0 0
        %4116 = vmatpush1.bf16.msra.mxu0 0
        %4117 = vmatprep.subr.bf16.mxu0 0
        %4118 = vmatpush1.bf16.msra.mxu0 0
        %4119 = vmatprep.subr.bf16.mxu0 0
        %4120 = vmatpush1.bf16.msra.mxu0 0
        %4121 = vmatprep.subr.bf16.mxu0 0
        %4122 = vmatpush1.bf16.msra.mxu0 0
        %4123 = vmatprep.subr.bf16.mxu0 0
        %4124 = vmatpush1.bf16.msra.mxu0 0
        %4125 = vmatprep.subr.bf16.mxu0 0
        %4126 = vmatpush1.bf16.msra.mxu0 %v4109
        %4127 = vmatprep.subr.bf16.mxu0 0
        %4128 = vmatpush2.bf16.msra.mxu0 0
        %4129 = vmatprep.subr.bf16.mxu0 0
        %4130 = vmatpush2.bf16.msra.mxu0 0
        %4131 = vmatprep.subr.bf16.mxu0 0
        %4132 = vmatpush2.bf16.msra.mxu0 0
        %4133 = vmatprep.subr.bf16.mxu0 0
        %4134 = vmatpush2.bf16.msra.mxu0 0
        %4135 = vmatprep.subr.bf16.mxu0 0
        %4136 = vmatpush2.bf16.msra.mxu0 0
        %4137 = vmatprep.subr.bf16.mxu0 0
        %4138 = vmatpush2.bf16.msra.mxu0 0
        %4139 = vmatprep.subr.bf16.mxu0 0
        %4140 = vmatpush2.bf16.msra.mxu0 0
        %4141 = vmatprep.subr.bf16.mxu0 0
        %4142 = vmatpush2.bf16.msra.mxu0 0
        %4143 = vmatprep.mubr.bf16.mxu0 0
        %4144 = vmatmul.mubr.bf16.gmra.mxu0 %v4061
        %v4145 = vpop.f32.mrf.mxu0
        %v4146 = vadd.f32 0.0, %v4145
        %v4147 = vpop.f32.mrf.mxu0
        %v4148 = vpop.f32.mrf.mxu0
        %v4149 = vadd.f32 0.0, %v4148
        %v4150 = vpop.f32.mrf.mxu0
        %4151 = vmatprep.mubr.bf16.mxu0 0
        %4152 = vmatmul.mubr.bf16.gmra.mxu0 %v4064
        %v4153 = vpop.f32.mrf.mxu0
        %v4154 = vadd.f32 0.0, %v4153
        %v4155 = vpop.f32.mrf.mxu0
        %v4156 = vpop.f32.mrf.mxu0
        %v4157 = vadd.f32 0.0, %v4156
        %v4158 = vpop.f32.mrf.mxu0
        %4159 = vmatprep.mubr.bf16.mxu0 0
        %4160 = vmatmul.mubr.bf16.gmra.mxu0 %v4067
        %v4161 = vpop.f32.mrf.mxu0
        %v4162 = vadd.f32 0.0, %v4161
        %v4163 = vpop.f32.mrf.mxu0
        %v4164 = vpop.f32.mrf.mxu0
        %v4165 = vadd.f32 0.0, %v4164
        %v4166 = vpop.f32.mrf.mxu0
        %4167 = vmatprep.mubr.bf16.mxu0 0
        %4168 = vmatmul.mubr.bf16.gmra.mxu0 %v4070
        %v4169 = vpop.f32.mrf.mxu0
        %v4170 = vadd.f32 0.0, %v4169
        %v4171 = vpop.f32.mrf.mxu0
        %v4172 = vpop.f32.mrf.mxu0
        %v4173 = vadd.f32 0.0, %v4172
        %v4174 = vpop.f32.mrf.mxu0
        %4175 = vmatprep.mubr.bf16.mxu0 0
        %4176 = vmatmul.mubr.bf16.gmra.mxu0 %v4073
        %v4177 = vpop.f32.mrf.mxu0
        %v4178 = vadd.f32 0.0, %v4177
        %v4179 = vpop.f32.mrf.mxu0
        %v4180 = vpop.f32.mrf.mxu0
        %v4181 = vadd.f32 0.0, %v4180
        %v4182 = vpop.f32.mrf.mxu0
        %4183 = vmatprep.mubr.bf16.mxu0 0
        %4184 = vmatmul.mubr.bf16.gmra.mxu0 %v4076
        %v4185 = vpop.f32.mrf.mxu0
        %v4186 = vadd.f32 0.0, %v4185
        %v4187 = vpop.f32.mrf.mxu0
        %v4188 = vpop.f32.mrf.mxu0
        %v4189 = vadd.f32 0.0, %v4188
        %v4190 = vpop.f32.mrf.mxu0
        %4191 = vmatprep.mubr.bf16.mxu0 0
        %4192 = vmatmul.mubr.bf16.gmra.mxu0 %v4079
        %v4193 = vpop.f32.mrf.mxu0
        %v4194 = vadd.f32 0.0, %v4193
        %v4195 = vpop.f32.mrf.mxu0
        %v4196 = vpop.f32.mrf.mxu0
        %v4197 = vadd.f32 0.0, %v4196
        %v4198 = vpop.f32.mrf.mxu0
        %4199 = vmatprep.mubr.bf16.mxu0 0
        %4200 = vmatmul.mubr.bf16.gmra.mxu0 %v4082
        %v4201 = vpop.f32.mrf.mxu0
        %v4202 = vadd.f32 0.0, %v4201
        %v4203 = vpop.f32.mrf.mxu0
        %v4204 = vpop.f32.mrf.mxu0
        %v4205 = vadd.f32 0.0, %v4204
        %v4206 = vpop.f32.mrf.mxu0
        %4207 = vmatprep.mubr.bf16.mxu0 0
        %4208 = vmatmul.mubr.bf16.gmra.mxu0 %v4085
        %v4209 = vpop.f32.mrf.mxu0
        %v4210 = vadd.f32 0.0, %v4209
        %v4211 = vpop.f32.mrf.mxu0
        %v4212 = vpop.f32.mrf.mxu0
        %v4213 = vadd.f32 0.0, %v4212
        %v4214 = vpop.f32.mrf.mxu0
        %4215 = vmatprep.mubr.bf16.mxu0 0
        %4216 = vmatmul.mubr.bf16.gmra.mxu0 %v4088
        %v4217 = vpop.f32.mrf.mxu0
        %v4218 = vadd.f32 0.0, %v4217
        %v4219 = vpop.f32.mrf.mxu0
        %v4220 = vpop.f32.mrf.mxu0
        %v4221 = vadd.f32 0.0, %v4220
        %v4222 = vpop.f32.mrf.mxu0
        %4223 = vmatprep.mubr.bf16.mxu0 0
        %4224 = vmatmul.mubr.bf16.gmra.mxu0 %v4091
        %v4225 = vpop.f32.mrf.mxu0
        %v4226 = vadd.f32 0.0, %v4225
        %v4227 = vpop.f32.mrf.mxu0
        %v4228 = vpop.f32.mrf.mxu0
        %v4229 = vadd.f32 0.0, %v4228
        %v4230 = vpop.f32.mrf.mxu0
        %4231 = vmatprep.mubr.bf16.mxu0 0
        %4232 = vmatmul.mubr.bf16.gmra.mxu0 %v4094
        %v4233 = vpop.f32.mrf.mxu0
        %v4234 = vadd.f32 0.0, %v4233
        %v4235 = vpop.f32.mrf.mxu0
        %v4236 = vpop.f32.mrf.mxu0
        %v4237 = vadd.f32 0.0, %v4236
        %v4238 = vpop.f32.mrf.mxu0
        %4239 = vmatprep.mubr.bf16.mxu0 0
        %4240 = vmatmul.mubr.bf16.gmra.mxu0 %v4097
        %v4241 = vpop.f32.mrf.mxu0
        %v4242 = vadd.f32 0.0, %v4241
        %v4243 = vpop.f32.mrf.mxu0
        %v4244 = vpop.f32.mrf.mxu0
        %v4245 = vadd.f32 0.0, %v4244
        %v4246 = vpop.f32.mrf.mxu0
        %4247 = vmatprep.mubr.bf16.mxu0 0
        %4248 = vmatmul.mubr.bf16.gmra.mxu0 %v4100
        %v4249 = vpop.f32.mrf.mxu0
        %v4250 = vadd.f32 0.0, %v4249
        %v4251 = vpop.f32.mrf.mxu0
        %v4252 = vpop.f32.mrf.mxu0
        %v4253 = vadd.f32 0.0, %v4252
        %v4254 = vpop.f32.mrf.mxu0
        %4255 = vmatprep.mubr.bf16.mxu0 0
        %4256 = vmatmul.mubr.bf16.gmra.mxu0 %v4103
        %v4257 = vpop.f32.mrf.mxu0
        %v4258 = vadd.f32 0.0, %v4257
        %v4259 = vpop.f32.mrf.mxu0
        %v4260 = vpop.f32.mrf.mxu0
        %v4261 = vadd.f32 0.0, %v4260
        %v4262 = vpop.f32.mrf.mxu0
        %4263 = vmatprep.mubr.bf16.mxu0 0
        %4264 = vmatmul.mubr.bf16.gmra.mxu0 %v4106
        %v4265 = vpop.f32.mrf.mxu0
        %v4266 = vadd.f32 0.0, %v4265
        %v4267 = vpop.f32.mrf.mxu0
        %v4268 = vpop.f32.mrf.mxu0
        %v4269 = vadd.f32 0.0, %v4268
        %v4270 = vpop.f32.mrf.mxu0
        %4271 = vdwg.mxu0
        %v4272 = vadd.f32 %v3546, %v4146
        %v4273 = vadd.f32 %v3547, %v4149
        %v4274 = vadd.f32 %v3548, %v4154
        %v4275 = vadd.f32 %v3549, %v4157
        %v4276 = vadd.f32 %v3550, %v4162
        %v4277 = vadd.f32 %v3551, %v4165
        %v4278 = vadd.f32 %v3552, %v4170
        %v4279 = vadd.f32 %v3553, %v4173
        %v4280 = vadd.f32 %v3554, %v4178
        %v4281 = vadd.f32 %v3555, %v4181
        %v4282 = vadd.f32 %v3556, %v4186
        %v4283 = vadd.f32 %v3557, %v4189
        %v4284 = vadd.f32 %v3558, %v4194
        %v4285 = vadd.f32 %v3559, %v4197
        %v4286 = vadd.f32 %v3560, %v4202
        %v4287 = vadd.f32 %v3561, %v4205
        %v4288 = vadd.f32 %v3562, %v4210
        %v4289 = vadd.f32 %v3563, %v4213
        %v4290 = vadd.f32 %v3564, %v4218
        %v4291 = vadd.f32 %v3565, %v4221
        %v4292 = vadd.f32 %v3566, %v4226
        %v4293 = vadd.f32 %v3567, %v4229
        %v4294 = vadd.f32 %v3568, %v4234
        %v4295 = vadd.f32 %v3569, %v4237
        %v4296 = vadd.f32 %v3570, %v4242
        %v4297 = vadd.f32 %v3571, %v4245
        %v4298 = vadd.f32 %v3572, %v4250
        %v4299 = vadd.f32 %v3573, %v4253
        %v4300 = vadd.f32 %v3574, %v4258
        %v4301 = vadd.f32 %v3575, %v4261
        %v4302 = vadd.f32 %v3576, %v4266
        %v4303 = vadd.f32 %v3577, %v4269
        %v4304 = vld [vmem:[%s3219] sm:$0xe]
        %v4305 = vld [vmem:[%s3219 + $0xc] sm:$0xe]
        %v4306 = vld [vmem:[%s3219 + $0x18] sm:$0xe]
        %v4307 = vld [vmem:[%s3219 + $0x24] sm:$0xe]
        %v4308 = vld [vmem:[%s3219 + $0x30] sm:$0xe]
        %v4309 = vld [vmem:[%s3219 + $0x3c] sm:$0xe]
        %v4310 = vld [vmem:[%s3219 + $0x48] sm:$0xe]
        %v4311 = vld [vmem:[%s3219 + $0x54] sm:$0xe]
        %v4312 = vld [vmem:[%s3219 + $0x60] sm:$0xe]
        %v4313 = vld [vmem:[%s3219 + $0x6c] sm:$0xe]
        %v4314 = vld [vmem:[%s3219 + $0x78] sm:$0xe]
        %v4315 = vld [vmem:[%s3219 + $0x84] sm:$0xe]
        %v4316 = vld [vmem:[%s3219 + $0x90] sm:$0xe]
        %v4317 = vld [vmem:[%s3219 + $0x9c] sm:$0xe]
        %v4318 = vld [vmem:[%s3219 + $0xa8] sm:$0xe]
        %v4319 = vld [vmem:[%s3219 + $0xb4] sm:$0xe]
        %v4368 = vrot.slane %v4304, 5
        %v4369 = vrot.slane %v4368, 4
        %v4370 = vrot.slane %v3579, 5
        %v4371 = vsel %vm1257, %v4369, %v4370
        %v4372 = vrot.slane %v4370, 4
        %v4373 = vrot.slane %v3580, 5
        %v4374 = vsel %vm1257, %v4372, %v4373
        %v4375 = vrot.slane %v4305, 5
        %v4376 = vrot.slane %v4375, 4
        %v4377 = vrot.slane %v3582, 5
        %v4378 = vsel %vm1257, %v4376, %v4377
        %v4379 = vrot.slane %v4377, 4
        %v4380 = vrot.slane %v3583, 5
        %v4381 = vsel %vm1257, %v4379, %v4380
        %v4382 = vrot.slane %v4306, 5
        %v4383 = vrot.slane %v4382, 4
        %v4384 = vrot.slane %v3585, 5
        %v4385 = vsel %vm1257, %v4383, %v4384
        %v4386 = vrot.slane %v4384, 4
        %v4387 = vrot.slane %v3586, 5
        %v4388 = vsel %vm1257, %v4386, %v4387
        %v4389 = vrot.slane %v4307, 5
        %v4390 = vrot.slane %v4389, 4
        %v4391 = vrot.slane %v3588, 5
        %v4392 = vsel %vm1257, %v4390, %v4391
        %v4393 = vrot.slane %v4391, 4
        %v4394 = vrot.slane %v3589, 5
        %v4395 = vsel %vm1257, %v4393, %v4394
        %v4396 = vrot.slane %v4308, 5
        %v4397 = vrot.slane %v4396, 4
        %v4398 = vrot.slane %v3591, 5
        %v4399 = vsel %vm1257, %v4397, %v4398
        %v4400 = vrot.slane %v4398, 4
        %v4401 = vrot.slane %v3592, 5
        %v4402 = vsel %vm1257, %v4400, %v4401
        %v4403 = vrot.slane %v4309, 5
        %v4404 = vrot.slane %v4403, 4
        %v4405 = vrot.slane %v3594, 5
        %v4406 = vsel %vm1257, %v4404, %v4405
        %v4407 = vrot.slane %v4405, 4
        %v4408 = vrot.slane %v3595, 5
        %v4409 = vsel %vm1257, %v4407, %v4408
        %v4410 = vrot.slane %v4310, 5
        %v4411 = vrot.slane %v4410, 4
        %v4412 = vrot.slane %v3597, 5
        %v4413 = vsel %vm1257, %v4411, %v4412
        %v4414 = vrot.slane %v4412, 4
        %v4415 = vrot.slane %v3598, 5
        %v4416 = vsel %vm1257, %v4414, %v4415
        %v4417 = vrot.slane %v4311, 5
        %v4418 = vrot.slane %v4417, 4
        %v4419 = vrot.slane %v3600, 5
        %v4420 = vsel %vm1257, %v4418, %v4419
        %v4421 = vrot.slane %v4419, 4
        %v4422 = vrot.slane %v3601, 5
        %v4423 = vsel %vm1257, %v4421, %v4422
        %v4424 = vrot.slane %v4312, 5
        %v4425 = vrot.slane %v4424, 4
        %v4426 = vrot.slane %v3603, 5
        %v4427 = vsel %vm1257, %v4425, %v4426
        %v4428 = vrot.slane %v4426, 4
        %v4429 = vrot.slane %v3604, 5
        %v4430 = vsel %vm1257, %v4428, %v4429
        %v4431 = vrot.slane %v4313, 5
        %v4432 = vrot.slane %v4431, 4
        %v4433 = vrot.slane %v3606, 5
        %v4434 = vsel %vm1257, %v4432, %v4433
        %v4435 = vrot.slane %v4433, 4
        %v4436 = vrot.slane %v3607, 5
        %v4437 = vsel %vm1257, %v4435, %v4436
        %v4438 = vrot.slane %v4314, 5
        %v4439 = vrot.slane %v4438, 4
        %v4440 = vrot.slane %v3609, 5
        %v4441 = vsel %vm1257, %v4439, %v4440
        %v4442 = vrot.slane %v4440, 4
        %v4443 = vrot.slane %v3610, 5
        %v4444 = vsel %vm1257, %v4442, %v4443
        %v4445 = vrot.slane %v4315, 5
        %v4446 = vrot.slane %v4445, 4
        %v4447 = vrot.slane %v3612, 5
        %v4448 = vsel %vm1257, %v4446, %v4447
        %v4449 = vrot.slane %v4447, 4
        %v4450 = vrot.slane %v3613, 5
        %v4451 = vsel %vm1257, %v4449, %v4450
        %v4452 = vrot.slane %v4316, 5
        %v4453 = vrot.slane %v4452, 4
        %v4454 = vrot.slane %v3615, 5
        %v4455 = vsel %vm1257, %v4453, %v4454
        %v4456 = vrot.slane %v4454, 4
        %v4457 = vrot.slane %v3616, 5
        %v4458 = vsel %vm1257, %v4456, %v4457
        %v4459 = vrot.slane %v4317, 5
        %v4460 = vrot.slane %v4459, 4
        %v4461 = vrot.slane %v3618, 5
        %v4462 = vsel %vm1257, %v4460, %v4461
        %v4463 = vrot.slane %v4461, 4
        %v4464 = vrot.slane %v3619, 5
        %v4465 = vsel %vm1257, %v4463, %v4464
        %v4466 = vrot.slane %v4318, 5
        %v4467 = vrot.slane %v4466, 4
        %v4468 = vrot.slane %v3621, 5
        %v4469 = vsel %vm1257, %v4467, %v4468
        %v4470 = vrot.slane %v4468, 4
        %v4471 = vrot.slane %v3622, 5
        %v4472 = vsel %vm1257, %v4470, %v4471
        %v4473 = vrot.slane %v4319, 5
        %v4474 = vrot.slane %v4473, 4
        %v4475 = vrot.slane %v3624, 5
        %v4476 = vsel %vm1257, %v4474, %v4475
        %v4477 = vrot.slane %v4475, 4
        %v4478 = vrot.slane %v3625, 5
        %v4479 = vsel %vm1257, %v4477, %v4478
        %s4480 = scalar_lea.vmem %s210, 16
        %v4481 = vld [vmem:[%s4480] sm:$0x3]
        %v4482 = vunpack.c.l.b16 %v4371
        %v4483 = vunpack.c.l.b16 %v4374
        %v4484 = vunpack.c.l.b16 %v4378
        %v4485 = vunpack.c.l.b16 %v4381
        %v4486 = vunpack.c.l.b16 %v4385
        %v4487 = vunpack.c.l.b16 %v4388
        %v4488 = vunpack.c.l.b16 %v4392
        %v4489 = vunpack.c.l.b16 %v4395
        %v4490 = vunpack.c.l.b16 %v4399
        %v4491 = vunpack.c.l.b16 %v4402
        %v4492 = vunpack.c.l.b16 %v4406
        %v4493 = vunpack.c.l.b16 %v4409
        %v4494 = vunpack.c.l.b16 %v4413
        %v4495 = vunpack.c.l.b16 %v4416
        %v4496 = vunpack.c.l.b16 %v4420
        %v4497 = vunpack.c.l.b16 %v4423
        %v4498 = vunpack.c.l.b16 %v4427
        %v4499 = vunpack.c.l.b16 %v4430
        %v4500 = vunpack.c.l.b16 %v4434
        %v4501 = vunpack.c.l.b16 %v4437
        %v4502 = vunpack.c.l.b16 %v4441
        %v4503 = vunpack.c.l.b16 %v4444
        %v4504 = vunpack.c.l.b16 %v4448
        %v4505 = vunpack.c.l.b16 %v4451
        %v4506 = vunpack.c.l.b16 %v4455
        %v4507 = vunpack.c.l.b16 %v4458
        %v4508 = vunpack.c.l.b16 %v4462
        %v4509 = vunpack.c.l.b16 %v4465
        %v4510 = vunpack.c.l.b16 %v4469
        %v4511 = vunpack.c.l.b16 %v4472
        %v4512 = vunpack.c.l.b16 %v4476
        %v4513 = vunpack.c.l.b16 %v4479
        %v4514 = vpack.c.b16 %v4483, %v4482
        %v4515 = vpack.c.b16 %v4485, %v4484
        %v4516 = vpack.c.b16 %v4487, %v4486
        %v4517 = vpack.c.b16 %v4489, %v4488
        %v4518 = vpack.c.b16 %v4491, %v4490
        %v4519 = vpack.c.b16 %v4493, %v4492
        %v4520 = vpack.c.b16 %v4495, %v4494
        %v4521 = vpack.c.b16 %v4497, %v4496
        %v4522 = vpack.c.b16 %v4499, %v4498
        %v4523 = vpack.c.b16 %v4501, %v4500
        %v4524 = vpack.c.b16 %v4503, %v4502
        %v4525 = vpack.c.b16 %v4505, %v4504
        %v4526 = vpack.c.b16 %v4507, %v4506
        %v4527 = vpack.c.b16 %v4509, %v4508
        %v4528 = vpack.c.b16 %v4511, %v4510
        %v4529 = vpack.c.b16 %v4513, %v4512
        %v4531 = vsel %vm701, %v4514, 0
        %v4534 = vsel %vm701, %v4515, 0
        %v4537 = vsel %vm701, %v4516, 0
        %v4540 = vsel %vm701, %v4517, 0
        %v4543 = vsel %vm701, %v4518, 0
        %v4546 = vsel %vm701, %v4519, 0
        %v4549 = vsel %vm701, %v4520, 0
        %v4552 = vsel %vm701, %v4521, 0
        %v4555 = vsel %vm701, %v4522, 0
        %v4558 = vsel %vm701, %v4523, 0
        %v4561 = vsel %vm701, %v4524, 0
        %v4564 = vsel %vm701, %v4525, 0
        %v4567 = vsel %vm701, %v4526, 0
        %v4570 = vsel %vm701, %v4527, 0
        %v4573 = vsel %vm701, %v4528, 0
        %v4576 = vsel %vm701, %v4529, 0
        %v4579 = vsel %vm750, %v4481, 0
        %4581 = vmatprep.subr.bf16.mxu0 0
        %4582 = vmatpush1.bf16.msra.mxu0 0
        %4583 = vmatprep.subr.bf16.mxu0 0
        %4584 = vmatpush1.bf16.msra.mxu0 0
        %4585 = vmatprep.subr.bf16.mxu0 0
        %4586 = vmatpush1.bf16.msra.mxu0 0
        %4587 = vmatprep.subr.bf16.mxu0 0
        %4588 = vmatpush1.bf16.msra.mxu0 0
        %4589 = vmatprep.subr.bf16.mxu0 0
        %4590 = vmatpush1.bf16.msra.mxu0 0
        %4591 = vmatprep.subr.bf16.mxu0 0
        %4592 = vmatpush1.bf16.msra.mxu0 0
        %4593 = vmatprep.subr.bf16.mxu0 0
        %4594 = vmatpush1.bf16.msra.mxu0 0
        %4595 = vmatprep.subr.bf16.mxu0 0
        %4596 = vmatpush1.bf16.msra.mxu0 %v4579
        %4597 = vmatprep.subr.bf16.mxu0 0
        %4598 = vmatpush2.bf16.msra.mxu0 0
        %4599 = vmatprep.subr.bf16.mxu0 0
        %4600 = vmatpush2.bf16.msra.mxu0 0
        %4601 = vmatprep.subr.bf16.mxu0 0
        %4602 = vmatpush2.bf16.msra.mxu0 0
        %4603 = vmatprep.subr.bf16.mxu0 0
        %4604 = vmatpush2.bf16.msra.mxu0 0
        %4605 = vmatprep.subr.bf16.mxu0 0
        %4606 = vmatpush2.bf16.msra.mxu0 0
        %4607 = vmatprep.subr.bf16.mxu0 0
        %4608 = vmatpush2.bf16.msra.mxu0 0
        %4609 = vmatprep.subr.bf16.mxu0 0
        %4610 = vmatpush2.bf16.msra.mxu0 0
        %4611 = vmatprep.subr.bf16.mxu0 0
        %4612 = vmatpush2.bf16.msra.mxu0 0
        %4613 = vmatprep.mubr.bf16.mxu0 0
        %4614 = vmatmul.mubr.bf16.gmra.mxu0 %v4531
        %v4615 = vpop.f32.mrf.mxu0
        %v4616 = vadd.f32 0.0, %v4615
        %v4617 = vpop.f32.mrf.mxu0
        %v4618 = vpop.f32.mrf.mxu0
        %v4619 = vadd.f32 0.0, %v4618
        %v4620 = vpop.f32.mrf.mxu0
        %4621 = vmatprep.mubr.bf16.mxu0 0
        %4622 = vmatmul.mubr.bf16.gmra.mxu0 %v4534
        %v4623 = vpop.f32.mrf.mxu0
        %v4624 = vadd.f32 0.0, %v4623
        %v4625 = vpop.f32.mrf.mxu0
        %v4626 = vpop.f32.mrf.mxu0
        %v4627 = vadd.f32 0.0, %v4626
        %v4628 = vpop.f32.mrf.mxu0
        %4629 = vmatprep.mubr.bf16.mxu0 0
        %4630 = vmatmul.mubr.bf16.gmra.mxu0 %v4537
        %v4631 = vpop.f32.mrf.mxu0
        %v4632 = vadd.f32 0.0, %v4631
        %v4633 = vpop.f32.mrf.mxu0
        %v4634 = vpop.f32.mrf.mxu0
        %v4635 = vadd.f32 0.0, %v4634
        %v4636 = vpop.f32.mrf.mxu0
        %4637 = vmatprep.mubr.bf16.mxu0 0
        %4638 = vmatmul.mubr.bf16.gmra.mxu0 %v4540
        %v4639 = vpop.f32.mrf.mxu0
        %v4640 = vadd.f32 0.0, %v4639
        %v4641 = vpop.f32.mrf.mxu0
        %v4642 = vpop.f32.mrf.mxu0
        %v4643 = vadd.f32 0.0, %v4642
        %v4644 = vpop.f32.mrf.mxu0
        %4645 = vmatprep.mubr.bf16.mxu0 0
        %4646 = vmatmul.mubr.bf16.gmra.mxu0 %v4543
        %v4647 = vpop.f32.mrf.mxu0
        %v4648 = vadd.f32 0.0, %v4647
        %v4649 = vpop.f32.mrf.mxu0
        %v4650 = vpop.f32.mrf.mxu0
        %v4651 = vadd.f32 0.0, %v4650
        %v4652 = vpop.f32.mrf.mxu0
        %4653 = vmatprep.mubr.bf16.mxu0 0
        %4654 = vmatmul.mubr.bf16.gmra.mxu0 %v4546
        %v4655 = vpop.f32.mrf.mxu0
        %v4656 = vadd.f32 0.0, %v4655
        %v4657 = vpop.f32.mrf.mxu0
        %v4658 = vpop.f32.mrf.mxu0
        %v4659 = vadd.f32 0.0, %v4658
        %v4660 = vpop.f32.mrf.mxu0
        %4661 = vmatprep.mubr.bf16.mxu0 0
        %4662 = vmatmul.mubr.bf16.gmra.mxu0 %v4549
        %v4663 = vpop.f32.mrf.mxu0
        %v4664 = vadd.f32 0.0, %v4663
        %v4665 = vpop.f32.mrf.mxu0
        %v4666 = vpop.f32.mrf.mxu0
        %v4667 = vadd.f32 0.0, %v4666
        %v4668 = vpop.f32.mrf.mxu0
        %4669 = vmatprep.mubr.bf16.mxu0 0
        %4670 = vmatmul.mubr.bf16.gmra.mxu0 %v4552
        %v4671 = vpop.f32.mrf.mxu0
        %v4672 = vadd.f32 0.0, %v4671
        %v4673 = vpop.f32.mrf.mxu0
        %v4674 = vpop.f32.mrf.mxu0
        %v4675 = vadd.f32 0.0, %v4674
        %v4676 = vpop.f32.mrf.mxu0
        %4677 = vmatprep.mubr.bf16.mxu0 0
        %4678 = vmatmul.mubr.bf16.gmra.mxu0 %v4555
        %v4679 = vpop.f32.mrf.mxu0
        %v4680 = vadd.f32 0.0, %v4679
        %v4681 = vpop.f32.mrf.mxu0
        %v4682 = vpop.f32.mrf.mxu0
        %v4683 = vadd.f32 0.0, %v4682
        %v4684 = vpop.f32.mrf.mxu0
        %4685 = vmatprep.mubr.bf16.mxu0 0
        %4686 = vmatmul.mubr.bf16.gmra.mxu0 %v4558
        %v4687 = vpop.f32.mrf.mxu0
        %v4688 = vadd.f32 0.0, %v4687
        %v4689 = vpop.f32.mrf.mxu0
        %v4690 = vpop.f32.mrf.mxu0
        %v4691 = vadd.f32 0.0, %v4690
        %v4692 = vpop.f32.mrf.mxu0
        %4693 = vmatprep.mubr.bf16.mxu0 0
        %4694 = vmatmul.mubr.bf16.gmra.mxu0 %v4561
        %v4695 = vpop.f32.mrf.mxu0
        %v4696 = vadd.f32 0.0, %v4695
        %v4697 = vpop.f32.mrf.mxu0
        %v4698 = vpop.f32.mrf.mxu0
        %v4699 = vadd.f32 0.0, %v4698
        %v4700 = vpop.f32.mrf.mxu0
        %4701 = vmatprep.mubr.bf16.mxu0 0
        %4702 = vmatmul.mubr.bf16.gmra.mxu0 %v4564
        %v4703 = vpop.f32.mrf.mxu0
        %v4704 = vadd.f32 0.0, %v4703
        %v4705 = vpop.f32.mrf.mxu0
        %v4706 = vpop.f32.mrf.mxu0
        %v4707 = vadd.f32 0.0, %v4706
        %v4708 = vpop.f32.mrf.mxu0
        %4709 = vmatprep.mubr.bf16.mxu0 0
        %4710 = vmatmul.mubr.bf16.gmra.mxu0 %v4567
        %v4711 = vpop.f32.mrf.mxu0
        %v4712 = vadd.f32 0.0, %v4711
        %v4713 = vpop.f32.mrf.mxu0
        %v4714 = vpop.f32.mrf.mxu0
        %v4715 = vadd.f32 0.0, %v4714
        %v4716 = vpop.f32.mrf.mxu0
        %4717 = vmatprep.mubr.bf16.mxu0 0
        %4718 = vmatmul.mubr.bf16.gmra.mxu0 %v4570
        %v4719 = vpop.f32.mrf.mxu0
        %v4720 = vadd.f32 0.0, %v4719
        %v4721 = vpop.f32.mrf.mxu0
        %v4722 = vpop.f32.mrf.mxu0
        %v4723 = vadd.f32 0.0, %v4722
        %v4724 = vpop.f32.mrf.mxu0
        %4725 = vmatprep.mubr.bf16.mxu0 0
        %4726 = vmatmul.mubr.bf16.gmra.mxu0 %v4573
        %v4727 = vpop.f32.mrf.mxu0
        %v4728 = vadd.f32 0.0, %v4727
        %v4729 = vpop.f32.mrf.mxu0
        %v4730 = vpop.f32.mrf.mxu0
        %v4731 = vadd.f32 0.0, %v4730
        %v4732 = vpop.f32.mrf.mxu0
        %4733 = vmatprep.mubr.bf16.mxu0 0
        %4734 = vmatmul.mubr.bf16.gmra.mxu0 %v4576
        %v4735 = vpop.f32.mrf.mxu0
        %v4736 = vadd.f32 0.0, %v4735
        %v4737 = vpop.f32.mrf.mxu0
        %v4738 = vpop.f32.mrf.mxu0
        %v4739 = vadd.f32 0.0, %v4738
        %v4740 = vpop.f32.mrf.mxu0
        %4741 = vdwg.mxu0
        %v4742 = vadd.f32 %v4272, %v4616
        %v4743 = vadd.f32 %v4273, %v4619
        %v4744 = vadd.f32 %v4274, %v4624
        %v4745 = vadd.f32 %v4275, %v4627
        %v4746 = vadd.f32 %v4276, %v4632
        %v4747 = vadd.f32 %v4277, %v4635
        %v4748 = vadd.f32 %v4278, %v4640
        %v4749 = vadd.f32 %v4279, %v4643
        %v4750 = vadd.f32 %v4280, %v4648
        %v4751 = vadd.f32 %v4281, %v4651
        %v4752 = vadd.f32 %v4282, %v4656
        %v4753 = vadd.f32 %v4283, %v4659
        %v4754 = vadd.f32 %v4284, %v4664
        %v4755 = vadd.f32 %v4285, %v4667
        %v4756 = vadd.f32 %v4286, %v4672
        %v4757 = vadd.f32 %v4287, %v4675
        %v4758 = vadd.f32 %v4288, %v4680
        %v4759 = vadd.f32 %v4289, %v4683
        %v4760 = vadd.f32 %v4290, %v4688
        %v4761 = vadd.f32 %v4291, %v4691
        %v4762 = vadd.f32 %v4292, %v4696
        %v4763 = vadd.f32 %v4293, %v4699
        %v4764 = vadd.f32 %v4294, %v4704
        %v4765 = vadd.f32 %v4295, %v4707
        %v4766 = vadd.f32 %v4296, %v4712
        %v4767 = vadd.f32 %v4297, %v4715
        %v4768 = vadd.f32 %v4298, %v4720
        %v4769 = vadd.f32 %v4299, %v4723
        %v4770 = vadd.f32 %v4300, %v4728
        %v4771 = vadd.f32 %v4301, %v4731
        %v4772 = vadd.f32 %v4302, %v4736
        %v4773 = vadd.f32 %v4303, %v4739
        %v4774 = vld [vmem:[%s213] sm:$0x1]
        %v4776 = vlaneseq
        %v4777 = vshrl.u32 %v4776, 7
        %v4778 = vsub.s32 0, %v4777
        %v4779 = vrot.slane %v4774, %v4778
        %v4781 = vadd.f32 %v4742, %v4779
        %v4782 = vadd.f32 %v4743, %v4779
        %v4783 = vadd.f32 %v4744, %v4779
        %v4784 = vadd.f32 %v4745, %v4779
        %v4785 = vadd.f32 %v4746, %v4779
        %v4786 = vadd.f32 %v4747, %v4779
        %v4787 = vadd.f32 %v4748, %v4779
        %v4788 = vadd.f32 %v4749, %v4779
        %v4789 = vadd.f32 %v4750, %v4779
        %v4790 = vadd.f32 %v4751, %v4779
        %v4791 = vadd.f32 %v4752, %v4779
        %v4792 = vadd.f32 %v4753, %v4779
        %v4793 = vadd.f32 %v4754, %v4779
        %v4794 = vadd.f32 %v4755, %v4779
        %v4795 = vadd.f32 %v4756, %v4779
        %v4796 = vadd.f32 %v4757, %v4779
        %v4797 = vadd.f32 %v4758, %v4779
        %v4798 = vadd.f32 %v4759, %v4779
        %v4799 = vadd.f32 %v4760, %v4779
        %v4800 = vadd.f32 %v4761, %v4779
        %v4801 = vadd.f32 %v4762, %v4779
        %v4802 = vadd.f32 %v4763, %v4779
        %v4803 = vadd.f32 %v4764, %v4779
        %v4804 = vadd.f32 %v4765, %v4779
        %v4805 = vadd.f32 %v4766, %v4779
        %v4806 = vadd.f32 %v4767, %v4779
        %v4807 = vadd.f32 %v4768, %v4779
        %v4808 = vadd.f32 %v4769, %v4779
        %v4809 = vadd.f32 %v4770, %v4779
        %v4810 = vadd.f32 %v4771, %v4779
        %v4811 = vadd.f32 %v4772, %v4779
        %v4812 = vadd.f32 %v4773, %v4779
        %v4813 = vmax.f32 %v4781, 0.0
        %v4814 = vmax.f32 %v4782, 0.0
        %v4815 = vmax.f32 %v4783, 0.0
        %v4816 = vmax.f32 %v4784, 0.0
        %v4817 = vmax.f32 %v4785, 0.0
        %v4818 = vmax.f32 %v4786, 0.0
        %v4819 = vmax.f32 %v4787, 0.0
        %v4820 = vmax.f32 %v4788, 0.0
        %v4821 = vmax.f32 %v4789, 0.0
        %v4822 = vmax.f32 %v4790, 0.0
        %v4823 = vmax.f32 %v4791, 0.0
        %v4824 = vmax.f32 %v4792, 0.0
        %v4825 = vmax.f32 %v4793, 0.0
        %v4826 = vmax.f32 %v4794, 0.0
        %v4827 = vmax.f32 %v4795, 0.0
        %v4828 = vmax.f32 %v4796, 0.0
        %v4829 = vmax.f32 %v4797, 0.0
        %v4830 = vmax.f32 %v4798, 0.0
        %v4831 = vmax.f32 %v4799, 0.0
        %v4832 = vmax.f32 %v4800, 0.0
        %v4833 = vmax.f32 %v4801, 0.0
        %v4834 = vmax.f32 %v4802, 0.0
        %v4835 = vmax.f32 %v4803, 0.0
        %v4836 = vmax.f32 %v4804, 0.0
        %v4837 = vmax.f32 %v4805, 0.0
        %v4838 = vmax.f32 %v4806, 0.0
        %v4839 = vmax.f32 %v4807, 0.0
        %v4840 = vmax.f32 %v4808, 0.0
        %v4841 = vmax.f32 %v4809, 0.0
        %v4842 = vmax.f32 %v4810, 0.0
        %v4843 = vmax.f32 %v4811, 0.0
        %v4844 = vmax.f32 %v4812, 0.0
        %4845 = vst [vmem:[%s201] sm:$0xff] %v4813
        %4846 = vst [vmem:[%s201 + $0x8] sm:$0xff] %v4814
        %4847 = vst [vmem:[%s201 + $0x10] sm:$0xff] %v4815
        %4848 = vst [vmem:[%s201 + $0x18] sm:$0xff] %v4816
        %4849 = vst [vmem:[%s201 + $0x20] sm:$0xff] %v4817
        %4850 = vst [vmem:[%s201 + $0x28] sm:$0xff] %v4818
        %4851 = vst [vmem:[%s201 + $0x30] sm:$0xff] %v4819
        %4852 = vst [vmem:[%s201 + $0x38] sm:$0xff] %v4820
        %4853 = vst [vmem:[%s201 + $0x40] sm:$0xff] %v4821
        %4854 = vst [vmem:[%s201 + $0x48] sm:$0xff] %v4822
        %4855 = vst [vmem:[%s201 + $0x50] sm:$0xff] %v4823
        %4856 = vst [vmem:[%s201 + $0x58] sm:$0xff] %v4824
        %4857 = vst [vmem:[%s201 + $0x60] sm:$0xff] %v4825
        %4858 = vst [vmem:[%s201 + $0x68] sm:$0xff] %v4826
        %4859 = vst [vmem:[%s201 + $0x70] sm:$0xff] %v4827
        %4860 = vst [vmem:[%s201 + $0x78] sm:$0xff] %v4828
        %4861 = vst [vmem:[%s201 + $0x80] sm:$0xff] %v4829
        %4862 = vst [vmem:[%s201 + $0x88] sm:$0xff] %v4830
        %4863 = vst [vmem:[%s201 + $0x90] sm:$0xff] %v4831
        %4864 = vst [vmem:[%s201 + $0x98] sm:$0xff] %v4832
        %4865 = vst [vmem:[%s201 + $0xa0] sm:$0xff] %v4833
        %4866 = vst [vmem:[%s201 + $0xa8] sm:$0xff] %v4834
        %4867 = vst [vmem:[%s201 + $0xb0] sm:$0xff] %v4835
        %4868 = vst [vmem:[%s201 + $0xb8] sm:$0xff] %v4836
        %4869 = vst [vmem:[%s201 + $0xc0] sm:$0xff] %v4837
        %4870 = vst [vmem:[%s201 + $0xc8] sm:$0xff] %v4838
        %4871 = vst [vmem:[%s201 + $0xd0] sm:$0xff] %v4839
        %4872 = vst [vmem:[%s201 + $0xd8] sm:$0xff] %v4840
        %4873 = vst [vmem:[%s201 + $0xe0] sm:$0xff] %v4841
        %4874 = vst [vmem:[%s201 + $0xe8] sm:$0xff] %v4842
        %4875 = vst [vmem:[%s201 + $0xf0] sm:$0xff] %v4843
        %4876 = vst [vmem:[%s201 + $0xf8] sm:$0xff] %v4844
        %s4877 = sand.u32 %s117, 1
        %s4878 = scalar_lea.sflag [#allocation3], %s4877
        %s4879 = sand.u32 %s117, 1
        %s4880 = smul.addr %s4879, 256
        %s4881 = scalar_lea.vmem [#allocation2], %s4880
        // Predicated region
        $region33: #{tpu_custom_call.1} parent=31 // pred_check
          %p4882 = pneg %p127
        $region34: #{tpu_custom_call.1} parent=31 // pred_check_branch
          %4884 = sbr.rel (%p4882) target = $region36
        $region35: #{tpu_custom_call.1} parent=31 // pred_region
          %s4886 = ssub.s32 4096, 4096
          %4887 = vsyncadd %s4878, %s4886
          %s4888 = smul.addr %s21, 32
          %s4889 = sadd.s32 %s22, %s4888
          %s4890 = smul.addr %s4889, 128
          %s4891 = scalar_lea.hbm %s3, %s4890
          %s4892 = sshll.u32 %s4881, 4
          %s4893 = int_to_ptr.vmem [resolvable:$true] %s4892
          %4898 = dma.vmem_to_hbm [thread:$0]  %s4893, 4096, %s4891, %s4878, 128, 128, 8
        $region36: #{tpu_custom_call.1} parent=31 // pred_fallthru
          _
      $region32: #{tpu_custom_call.1} parent=5 // pred_fallthru
        _
      %p4899 = scmp.le.s32.totalorder 2, %s12
      // Predicated region
      $region37: #{tpu_custom_call.1} parent=5 // pred_check
        %p4900 = pneg %p4899
      $region38: #{tpu_custom_call.1} parent=5 // pred_check_branch
        %4902 = sbr.rel (%p4900) target = $region40
      $region39: #{tpu_custom_call.1} parent=5 // pred_region
        %s4903 = ssub.s32 %s12, 2
        // Predicated region
        $region41: #{tpu_custom_call.1} parent=39 // pred_check
          %p4904 = pneg %p133
        $region42: #{tpu_custom_call.1} parent=39 // pred_check_branch
          %4906 = sbr.rel (%p4904) target = $region44
        $region43: #{tpu_custom_call.1} parent=39 // pred_region
          %s4907 = sand.u32 %s118, 1
          %s4908 = scalar_lea.sflag [#allocation3], %s4907
          %s4909 = sand.u32 %s118, 1
          %s4910 = smul.addr %s4909, 256
          %s4911 = scalar_lea.vmem [#allocation2], %s4910
          %4912 = dma.done %s4908, 4096
        $region44: #{tpu_custom_call.1} parent=39 // pred_fallthru
          _
      $region40: #{tpu_custom_call.1} parent=5 // pred_fallthru
        _
    $region6: #{tpu_custom_call.1} parent=1 // loop_footer
      %s16 = sadd.s32 1, %s12
    $region7: #{tpu_custom_call.1} parent=1 // loop_footer_branch
      %11 = sbr.rel target = $region3
    $region8: #{tpu_custom_call.1} parent=1 // loop_exit
      _
    %4913 = vsyncpa [#allocation3], 1
    %s4914 = scalar_lea.sflag [#allocation3], 1
    %4915 = vsyncpa %s4914, 1

</llo_original>
